<compile_context>
chip_gen: v7x
topology: tpu7x:2x2x1
jax: 0.10.0
libtpu: 0.0.40
codegen_flags: <defaults>
</compile_context>

<pallas_src>
import jax
import jax.numpy as jnp
from jax.experimental import pallas as pl
from jax.experimental.pallas import tpu as pltpu


def disc_kernel(x_ref, adj_ref, wgcat_ref, bg_ref, wlstm_ref, bl_ref,
                wfc_ref, bfc_ref, out_ref):
    BB, W, N, F = x_ref.shape
    H = bg_ref.shape[1]
    G = BB * W                            # graphs handled in this grid step

    # ---- fused GAT projection for all G graphs: columns = [h | a_dst.h | a_src.h] ----
    x_flat = x_ref[...].reshape(G * N, F)
    proj = jnp.dot(x_flat, wgcat_ref[...], preferred_element_type=jnp.float32)   # (G*N, H+2)
    h3 = proj[:, :H].reshape(G, N, H)                 # (G, N, H)
    s_dst = proj[:, H:H + 1].reshape(G, N, 1)         # score of target node i
    s_src = proj[:, H + 1:H + 2].reshape(G, 1, N)     # score of source node j (one relayout/step)

    # ---- masked attention softmax over source nodes j ----
    e = s_dst + s_src                                 # e[g,i,j] = a_dst.h_i + a_src.h_j
    e = jnp.where(e > 0, e, 0.2 * e)                  # LeakyReLU(0.2)
    adj3 = adj_ref[...].reshape(G, N, N)
    e = jnp.where(adj3 > 0, e, -1e30)                 # mask non-edges (self loops keep rows alive)
    e = e - jnp.max(e, axis=-1, keepdims=True)
    p = jnp.exp(e)
    attn = p * pl.reciprocal(jnp.sum(p, axis=-1, keepdims=True), approx=True)

    # ---- GAT output + global mean pool (bias commutes with the node mean) ----
    gat = jnp.einsum('gij,gjh->gih', attn, h3, preferred_element_type=jnp.float32)
    pooled = (jnp.mean(gat, axis=1) + bg_ref[...]).reshape(BB, W, H)

    # ---- LSTM over the window (PyTorch gate order i, f, g, o), batched over BB sequences ----
    wl = wlstm_ref[...]                               # (2H, 4H), hoisted out of the loop
    bl = bl_ref[...]                                  # (1, 4H)
    h_t = jnp.zeros((BB, H), jnp.float32)
    c_t = jnp.zeros((BB, H), jnp.float32)
    for t in range(W):                                # W is small; static unroll
        gates = jnp.dot(jnp.concatenate([pooled[:, t, :], h_t], axis=1), wl,
                        preferred_element_type=jnp.float32) + bl                 # (BB, 4H)
        i_g = jax.nn.sigmoid(gates[:, 0:H])
        f_g = jax.nn.sigmoid(gates[:, H:2 * H])
        g_g = jnp.tanh(gates[:, 2 * H:3 * H])
        o_g = jax.nn.sigmoid(gates[:, 3 * H:4 * H])
        c_t = f_g * c_t + i_g * g_g
        h_t = o_g * jnp.tanh(c_t)

    # ---- dropout (identity at inference) + fc + sigmoid ----
    logit = jnp.dot(h_t, wfc_ref[...], preferred_element_type=jnp.float32) + bfc_ref[...]
    out_ref[...] = jax.nn.sigmoid(logit).reshape(1, BB, 1)


def discriminator_forward(x, adj, params, block_b=None):
    B, W, N, F = x.shape
    H = params["wg"].shape[1]

    if block_b is None:
        # keep >=2 grid steps when B>=2 (both TensorCores of a v7x chip get work), <=8 seq/step
        block_b = max(1, min(8, B // 2)) if B > 1 else 1
        while B % block_b:
            block_b -= 1
    assert B % block_b == 0
    BB = block_b
    n_steps = B // BB

    # fold the three GAT projections into one matmul operand: [Wg | Wg@a_dst | Wg@a_src]
    wg_cat = jnp.concatenate(
        [params["wg"], params["wg"] @ params["a_dst"], params["wg"] @ params["a_src"]], axis=1)
    # fold the two LSTM gate matmuls into one
    w_lstm = jnp.concatenate([params["wih"], params["whh"]], axis=0)
    adj_c = adj.astype(jnp.bfloat16)      # mask only needs "> 0"; halves the biggest DMA

    full = lambda shape: pl.BlockSpec(shape, lambda b: (0,) * len(shape))

    out = pl.pallas_call(
        disc_kernel,
        out_shape=jax.ShapeDtypeStruct((n_steps, BB, 1), jnp.float32),
        grid_spec=pltpu.PrefetchScalarGridSpec(
            num_scalar_prefetch=0,
            grid=(n_steps,),
            in_specs=[
                pl.BlockSpec((BB, W, N, F), lambda b: (b, 0, 0, 0)),
                pl.BlockSpec((BB, W, N, N), lambda b: (b, 0, 0, 0)),
                full((F, H + 2)),         # fused GAT weight  [Wg | Wg a_dst | Wg a_src]
                full((1, H)),             # GAT bias
                full((2 * H, 4 * H)),     # fused LSTM weight [W_ih ; W_hh]
                full((1, 4 * H)),         # b_ih + b_hh
                full((H, 1)),             # fc weight (transposed)
                full((1, 1)),             # fc bias
            ],
            out_specs=pl.BlockSpec((1, BB, 1), lambda b: (b, 0, 0)),
        ),
        compiler_params=pltpu.CompilerParams(dimension_semantics=("parallel",)),
    )(x, adj_c, wg_cat, params["bg"], w_lstm, params["bl"], params["wfc"], params["bfc"])
    return out.reshape(B, 1)


def reference_forward(x, adj, params):
    """Pure-JAX reference with identical math, for a sanity check."""
    B, W, N, F = x.shape
    H = params["wg"].shape[1]
    out = []
    for b in range(B):
        h_t = jnp.zeros((1, H), jnp.float32)
        c_t = jnp.zeros((1, H), jnp.float32)
        for t in range(W):
            h = x[b, t] @ params["wg"]
            e = (h @ params["a_dst"]) + (h @ params["a_src"]).T
            e = jnp.where(e > 0, e, 0.2 * e)
            e = jnp.where(adj[b, t] > 0, e, -1e30)
            attn = jax.nn.softmax(e, axis=-1)
            pooled = jnp.mean(attn @ h + params["bg"], axis=0, keepdims=True)
            gates = pooled @ params["wih"] + h_t @ params["whh"] + params["bl"]
            i_g = jax.nn.sigmoid(gates[:, 0:H])
            f_g = jax.nn.sigmoid(gates[:, H:2 * H])
            g_g = jnp.tanh(gates[:, 2 * H:3 * H])
            o_g = jax.nn.sigmoid(gates[:, 3 * H:4 * H])
            c_t = f_g * c_t + i_g * g_g
            h_t = o_g * jnp.tanh(c_t)
        out.append(jax.nn.sigmoid(h_t @ params["wfc"] + params["bfc"]))
    return jnp.concatenate(out, axis=0)


if __name__ == "__main__":
    # small shapes consistent with the module
    B, W, N, F, H = 2, 8, 16, 8, 32   # batch, window_size, nodes, node_feature_dim, hidden_dim

    key = jax.random.PRNGKey(0)
    ks = jax.random.split(key, 12)

    # inputs
    x = jax.random.normal(ks[0], (B, W, N, F), jnp.float32)
    # random sparse adjacency + self loops (edge j -> i), mimicking GATConv add_self_loops
    adj = (jax.random.uniform(ks[1], (B, W, N, N)) < 0.2).astype(jnp.float32)
    adj = jnp.maximum(adj, jnp.eye(N, dtype=jnp.float32)[None, None])

    # deterministic parameters (synthetic, not a checkpoint load)
    params = {
        "wg":    0.2 * jax.random.normal(ks[2], (F, H), jnp.float32),
        "a_src": 0.2 * jax.random.normal(ks[3], (H, 1), jnp.float32),
        "a_dst": 0.2 * jax.random.normal(ks[4], (H, 1), jnp.float32),
        "bg":    0.1 * jax.random.normal(ks[5], (1, H), jnp.float32),
        "wih":   0.2 * jax.random.normal(ks[6], (H, 4 * H), jnp.float32),
        "whh":   0.2 * jax.random.normal(ks[7], (H, 4 * H), jnp.float32),
        "bl":    0.1 * jax.random.normal(ks[8], (1, 4 * H), jnp.float32),
        "wfc":   0.2 * jax.random.normal(ks[9], (H, 1), jnp.float32),
        "bfc":   0.1 * jax.random.normal(ks[10], (1, 1), jnp.float32),
    }

    validity = jax.block_until_ready(discriminator_forward(x, adj, params))
    ref = jax.block_until_ready(reference_forward(x, adj, params))

    assert validity.shape == (B, 1)
    assert jnp.all(jnp.isfinite(validity))
    assert jnp.max(jnp.abs(validity - ref)) < 5e-2, (validity, ref)

    print("KERNEL_OK")
</pallas_src>

<mosaic_0001>
module attributes {stable_mosaic.version = 11 : i64} {
  func.func @disc_kernel(%arg0: i32, %arg1: memref<1x8x16x8xf32, #tpu.memory_space<vmem>>, %arg2: memref<1x8x16x16xbf16, #tpu.memory_space<vmem>>, %arg3: memref<8x34xf32, #tpu.memory_space<vmem>>, %arg4: memref<1x32xf32, #tpu.memory_space<vmem>>, %arg5: memref<64x128xf32, #tpu.memory_space<vmem>>, %arg6: memref<1x128xf32, #tpu.memory_space<vmem>>, %arg7: memref<32x1xf32, #tpu.memory_space<vmem>>, %arg8: memref<1x1xf32, #tpu.memory_space<vmem>>, %arg9: memref<1x1x1xf32, #tpu.memory_space<vmem>>) attributes {dimension_semantics = [#tpu.dimension_semantics<parallel>], iteration_bounds = array<i64: 2>, scalar_prefetch = 0 : i64, scratch_operands = 0 : i64, tpu.core_type = #tpu.core_type<tc>, window_params = [{transform_indices = @transform_0, window_bounds = array<i64: 1, 8, 16, 8>}, {transform_indices = @transform_1, window_bounds = array<i64: 1, 8, 16, 16>}, {pipeline_mode = #tpu.pipeline_mode<synchronous>, transform_indices = @transform_2, window_bounds = array<i64: 8, 34>}, {pipeline_mode = #tpu.pipeline_mode<synchronous>, transform_indices = @transform_3, window_bounds = array<i64: 1, 32>}, {pipeline_mode = #tpu.pipeline_mode<synchronous>, transform_indices = @transform_4, window_bounds = array<i64: 64, 128>}, {pipeline_mode = #tpu.pipeline_mode<synchronous>, transform_indices = @transform_5, window_bounds = array<i64: 1, 128>}, {pipeline_mode = #tpu.pipeline_mode<synchronous>, transform_indices = @transform_6, window_bounds = array<i64: 32, 1>}, {pipeline_mode = #tpu.pipeline_mode<synchronous>, transform_indices = @transform_7, window_bounds = array<i64: 1, 1>}, {transform_indices = @transform_8, window_bounds = array<i64: 1, 1, 1>}]} {
    %c0 = arith.constant 0 : index
    %c0_0 = arith.constant 0 : index
    %c0_1 = arith.constant 0 : index
    %c0_2 = arith.constant 0 : index
    %0 = vector.load %arg1[%c0, %c0_0, %c0_1, %c0_2] : memref<1x8x16x8xf32, #tpu.memory_space<vmem>>, vector<1x8x16x8xf32>
    %1 = vector.shape_cast %0 : vector<1x8x16x8xf32> to vector<128x8xf32>
    %c0_3 = arith.constant 0 : index
    %c0_4 = arith.constant 0 : index
    %2 = vector.load %arg3[%c0_3, %c0_4] : memref<8x34xf32, #tpu.memory_space<vmem>>, vector<8x34xf32>
    %cst = arith.constant dense<0.000000e+00> : vector<128x34xf32>
    %3 = tpu.matmul %1, %2, %cst {dimension_numbers = #tpu.dot_dimension_numbers<[1], [0], [0], [1], [0, 0, 1, 1], [], []>} : vector<128x8xf32>, vector<8x34xf32>, vector<128x34xf32> -> vector<128x34xf32>
    %4 = vector.extract_strided_slice %3 {offsets = [0, 0], sizes = [128, 32], strides = [1, 1]} : vector<128x34xf32> to vector<128x32xf32>
    %5 = vector.shape_cast %4 : vector<128x32xf32> to vector<8x16x32xf32>
    %6 = vector.extract_strided_slice %3 {offsets = [0, 32], sizes = [128, 1], strides = [1, 1]} : vector<128x34xf32> to vector<128x1xf32>
    %7 = vector.shape_cast %6 : vector<128x1xf32> to vector<8x16x1xf32>
    %8 = vector.extract_strided_slice %3 {offsets = [0, 33], sizes = [128, 1], strides = [1, 1]} : vector<128x34xf32> to vector<128x1xf32>
    %9 = vector.shape_cast %8 : vector<128x1xf32> to vector<8x1x16xf32>
    %10 = vector.broadcast %7 : vector<8x16x1xf32> to vector<8x16x16xf32>
    %11 = vector.broadcast %9 : vector<8x1x16xf32> to vector<8x16x16xf32>
    %12 = arith.addf %10, %11 : vector<8x16x16xf32>
    %cst_5 = arith.constant 0.000000e+00 : f32
    %13 = vector.broadcast %cst_5 : f32 to vector<8x16x16xf32>
    %14 = arith.cmpf ogt, %12, %13 : vector<8x16x16xf32>
    %cst_6 = arith.constant 2.000000e-01 : f32
    %15 = vector.broadcast %cst_6 : f32 to vector<8x16x16xf32>
    %16 = arith.mulf %15, %12 : vector<8x16x16xf32>
    %17 = arith.select %14, %12, %16 : vector<8x16x16xi1>, vector<8x16x16xf32>
    %c0_7 = arith.constant 0 : index
    %c0_8 = arith.constant 0 : index
    %c0_9 = arith.constant 0 : index
    %c0_10 = arith.constant 0 : index
    %18 = vector.load %arg2[%c0_7, %c0_8, %c0_9, %c0_10] : memref<1x8x16x16xbf16, #tpu.memory_space<vmem>>, vector<1x8x16x16xbf16>
    %19 = vector.shape_cast %18 : vector<1x8x16x16xbf16> to vector<8x16x16xbf16>
    %cst_11 = arith.constant 0.000000e+00 : bf16
    %20 = vector.broadcast %cst_11 : bf16 to vector<8x16x16xbf16>
    %21 = arith.cmpf ogt, %19, %20 : vector<8x16x16xbf16>
    %cst_12 = arith.constant -1.000000e+30 : f32
    %22 = vector.broadcast %cst_12 : f32 to vector<8x16x16xf32>
    %23 = arith.select %21, %17, %22 : vector<8x16x16xi1>, vector<8x16x16xf32>
    %cst_13 = arith.constant dense<0xFF800000> : vector<8x16xf32>
    %24 = vector.multi_reduction <maximumf>, %23, %cst_13 [2] : vector<8x16x16xf32> to vector<8x16xf32>
    %25 = vector.shape_cast %24 : vector<8x16xf32> to vector<8x16x1xf32>
    %26 = vector.broadcast %25 : vector<8x16x1xf32> to vector<8x16x16xf32>
    %27 = arith.subf %23, %26 : vector<8x16x16xf32>
    %28 = math.exp %27 : vector<8x16x16xf32>
    %cst_14 = arith.constant dense<0.000000e+00> : vector<8x16xf32>
    %29 = vector.multi_reduction <add>, %28, %cst_14 [2] : vector<8x16x16xf32> to vector<8x16xf32>
    %30 = vector.shape_cast %29 : vector<8x16xf32> to vector<8x16x1xf32>
    %31 = tpu.reciprocal %30 {approx = true} : vector<8x16x1xf32> -> vector<8x16x1xf32>
    %32 = vector.broadcast %31 : vector<8x16x1xf32> to vector<8x16x16xf32>
    %33 = arith.mulf %28, %32 : vector<8x16x16xf32>
    "tpu.trace_start"() <{level = 10 : i32, message = "gij,gjh->gih"}> : () -> ()
    %cst_15 = arith.constant dense<0.000000e+00> : vector<8x16x32xf32>
    %34 = tpu.matmul %33, %5, %cst_15 {dimension_numbers = #tpu.dot_dimension_numbers<[2], [1], [1], [2], [0, 0, 0, 1, 1, 2], [0], [0]>} : vector<8x16x16xf32>, vector<8x16x32xf32>, vector<8x16x32xf32> -> vector<8x16x32xf32>
    "tpu.trace_stop"() : () -> ()
    %cst_16 = arith.constant dense<0.000000e+00> : vector<8x32xf32>
    %35 = vector.multi_reduction <add>, %34, %cst_16 [1] : vector<8x16x32xf32> to vector<8x32xf32>
    %cst_17 = arith.constant 1.600000e+01 : f32
    %36 = vector.broadcast %cst_17 : f32 to vector<8x32xf32>
    %37 = arith.divf %35, %36 : vector<8x32xf32>
    %c0_18 = arith.constant 0 : index
    %c0_19 = arith.constant 0 : index
    %38 = vector.load %arg4[%c0_18, %c0_19] : memref<1x32xf32, #tpu.memory_space<vmem>>, vector<1x32xf32>
    %39 = vector.broadcast %38 : vector<1x32xf32> to vector<8x32xf32>
    %40 = arith.addf %37, %39 : vector<8x32xf32>
    %41 = vector.shape_cast %40 : vector<8x32xf32> to vector<1x8x32xf32>
    %c0_20 = arith.constant 0 : index
    %c0_21 = arith.constant 0 : index
    %42 = vector.load %arg5[%c0_20, %c0_21] : memref<64x128xf32, #tpu.memory_space<vmem>>, vector<64x128xf32>
    %c0_22 = arith.constant 0 : index
    %c0_23 = arith.constant 0 : index
    %43 = vector.load %arg6[%c0_22, %c0_23] : memref<1x128xf32, #tpu.memory_space<vmem>>, vector<1x128xf32>
    %cst_24 = arith.constant 0.000000e+00 : f32
    %44 = vector.broadcast %cst_24 : f32 to vector<1x32xf32>
    %cst_25 = arith.constant 0.000000e+00 : f32
    %45 = vector.broadcast %cst_25 : f32 to vector<1x32xf32>
    %46 = vector.extract_strided_slice %41 {offsets = [0, 0, 0], sizes = [1, 1, 32], strides = [1, 1, 1]} : vector<1x8x32xf32> to vector<1x1x32xf32>
    %47 = vector.shape_cast %46 : vector<1x1x32xf32> to vector<1x32xf32>
    %48 = tpu.concatenate %47, %44 in 1 : vector<1x32xf32>, vector<1x32xf32> -> vector<1x64xf32>
    %cst_26 = arith.constant dense<0.000000e+00> : vector<1x128xf32>
    %49 = tpu.matmul %48, %42, %cst_26 {dimension_numbers = #tpu.dot_dimension_numbers<[1], [0], [0], [1], [0, 0, 1, 1], [], []>} : vector<1x64xf32>, vector<64x128xf32>, vector<1x128xf32> -> vector<1x128xf32>
    %50 = arith.addf %49, %43 : vector<1x128xf32>
    %51 = vector.extract_strided_slice %50 {offsets = [0, 0], sizes = [1, 32], strides = [1, 1]} : vector<1x128xf32> to vector<1x32xf32>
    %52 = arith.negf %51 : vector<1x32xf32>
    %53 = math.exp %52 : vector<1x32xf32>
    %cst_27 = arith.constant 1.000000e+00 : f32
    %54 = vector.broadcast %cst_27 : f32 to vector<1x32xf32>
    %55 = arith.addf %54, %53 : vector<1x32xf32>
    %56 = arith.divf %54, %55 : vector<1x32xf32>
    %57 = vector.extract_strided_slice %50 {offsets = [0, 32], sizes = [1, 32], strides = [1, 1]} : vector<1x128xf32> to vector<1x32xf32>
    %58 = arith.negf %57 : vector<1x32xf32>
    %59 = math.exp %58 : vector<1x32xf32>
    %cst_28 = arith.constant 1.000000e+00 : f32
    %60 = vector.broadcast %cst_28 : f32 to vector<1x32xf32>
    %61 = arith.addf %60, %59 : vector<1x32xf32>
    %62 = arith.divf %60, %61 : vector<1x32xf32>
    %63 = vector.extract_strided_slice %50 {offsets = [0, 64], sizes = [1, 32], strides = [1, 1]} : vector<1x128xf32> to vector<1x32xf32>
    %64 = math.tanh %63 : vector<1x32xf32>
    %65 = vector.extract_strided_slice %50 {offsets = [0, 96], sizes = [1, 32], strides = [1, 1]} : vector<1x128xf32> to vector<1x32xf32>
    %66 = arith.negf %65 : vector<1x32xf32>
    %67 = math.exp %66 : vector<1x32xf32>
    %cst_29 = arith.constant 1.000000e+00 : f32
    %68 = vector.broadcast %cst_29 : f32 to vector<1x32xf32>
    %69 = arith.addf %68, %67 : vector<1x32xf32>
    %70 = arith.divf %68, %69 : vector<1x32xf32>
    %71 = arith.mulf %62, %45 : vector<1x32xf32>
    %72 = arith.mulf %56, %64 : vector<1x32xf32>
    %73 = arith.addf %71, %72 : vector<1x32xf32>
    %74 = math.tanh %73 : vector<1x32xf32>
    %75 = arith.mulf %70, %74 : vector<1x32xf32>
    %76 = vector.extract_strided_slice %41 {offsets = [0, 1, 0], sizes = [1, 1, 32], strides = [1, 1, 1]} : vector<1x8x32xf32> to vector<1x1x32xf32>
    %77 = vector.shape_cast %76 : vector<1x1x32xf32> to vector<1x32xf32>
    %78 = tpu.concatenate %77, %75 in 1 : vector<1x32xf32>, vector<1x32xf32> -> vector<1x64xf32>
    %cst_30 = arith.constant dense<0.000000e+00> : vector<1x128xf32>
    %79 = tpu.matmul %78, %42, %cst_30 {dimension_numbers = #tpu.dot_dimension_numbers<[1], [0], [0], [1], [0, 0, 1, 1], [], []>} : vector<1x64xf32>, vector<64x128xf32>, vector<1x128xf32> -> vector<1x128xf32>
    %80 = arith.addf %79, %43 : vector<1x128xf32>
    %81 = vector.extract_strided_slice %80 {offsets = [0, 0], sizes = [1, 32], strides = [1, 1]} : vector<1x128xf32> to vector<1x32xf32>
    %82 = arith.negf %81 : vector<1x32xf32>
    %83 = math.exp %82 : vector<1x32xf32>
    %cst_31 = arith.constant 1.000000e+00 : f32
    %84 = vector.broadcast %cst_31 : f32 to vector<1x32xf32>
    %85 = arith.addf %84, %83 : vector<1x32xf32>
    %86 = arith.divf %84, %85 : vector<1x32xf32>
    %87 = vector.extract_strided_slice %80 {offsets = [0, 32], sizes = [1, 32], strides = [1, 1]} : vector<1x128xf32> to vector<1x32xf32>
    %88 = arith.negf %87 : vector<1x32xf32>
    %89 = math.exp %88 : vector<1x32xf32>
    %cst_32 = arith.constant 1.000000e+00 : f32
    %90 = vector.broadcast %cst_32 : f32 to vector<1x32xf32>
    %91 = arith.addf %90, %89 : vector<1x32xf32>
    %92 = arith.divf %90, %91 : vector<1x32xf32>
    %93 = vector.extract_strided_slice %80 {offsets = [0, 64], sizes = [1, 32], strides = [1, 1]} : vector<1x128xf32> to vector<1x32xf32>
    %94 = math.tanh %93 : vector<1x32xf32>
    %95 = vector.extract_strided_slice %80 {offsets = [0, 96], sizes = [1, 32], strides = [1, 1]} : vector<1x128xf32> to vector<1x32xf32>
    %96 = arith.negf %95 : vector<1x32xf32>
    %97 = math.exp %96 : vector<1x32xf32>
    %cst_33 = arith.constant 1.000000e+00 : f32
    %98 = vector.broadcast %cst_33 : f32 to vector<1x32xf32>
    %99 = arith.addf %98, %97 : vector<1x32xf32>
    %100 = arith.divf %98, %99 : vector<1x32xf32>
    %101 = arith.mulf %92, %73 : vector<1x32xf32>
    %102 = arith.mulf %86, %94 : vector<1x32xf32>
    %103 = arith.addf %101, %102 : vector<1x32xf32>
    %104 = math.tanh %103 : vector<1x32xf32>
    %105 = arith.mulf %100, %104 : vector<1x32xf32>
    %106 = vector.extract_strided_slice %41 {offsets = [0, 2, 0], sizes = [1, 1, 32], strides = [1, 1, 1]} : vector<1x8x32xf32> to vector<1x1x32xf32>
    %107 = vector.shape_cast %106 : vector<1x1x32xf32> to vector<1x32xf32>
    %108 = tpu.concatenate %107, %105 in 1 : vector<1x32xf32>, vector<1x32xf32> -> vector<1x64xf32>
    %cst_34 = arith.constant dense<0.000000e+00> : vector<1x128xf32>
    %109 = tpu.matmul %108, %42, %cst_34 {dimension_numbers = #tpu.dot_dimension_numbers<[1], [0], [0], [1], [0, 0, 1, 1], [], []>} : vector<1x64xf32>, vector<64x128xf32>, vector<1x128xf32> -> vector<1x128xf32>
    %110 = arith.addf %109, %43 : vector<1x128xf32>
    %111 = vector.extract_strided_slice %110 {offsets = [0, 0], sizes = [1, 32], strides = [1, 1]} : vector<1x128xf32> to vector<1x32xf32>
    %112 = arith.negf %111 : vector<1x32xf32>
    %113 = math.exp %112 : vector<1x32xf32>
    %cst_35 = arith.constant 1.000000e+00 : f32
    %114 = vector.broadcast %cst_35 : f32 to vector<1x32xf32>
    %115 = arith.addf %114, %113 : vector<1x32xf32>
    %116 = arith.divf %114, %115 : vector<1x32xf32>
    %117 = vector.extract_strided_slice %110 {offsets = [0, 32], sizes = [1, 32], strides = [1, 1]} : vector<1x128xf32> to vector<1x32xf32>
    %118 = arith.negf %117 : vector<1x32xf32>
    %119 = math.exp %118 : vector<1x32xf32>
    %cst_36 = arith.constant 1.000000e+00 : f32
    %120 = vector.broadcast %cst_36 : f32 to vector<1x32xf32>
    %121 = arith.addf %120, %119 : vector<1x32xf32>
    %122 = arith.divf %120, %121 : vector<1x32xf32>
    %123 = vector.extract_strided_slice %110 {offsets = [0, 64], sizes = [1, 32], strides = [1, 1]} : vector<1x128xf32> to vector<1x32xf32>
    %124 = math.tanh %123 : vector<1x32xf32>
    %125 = vector.extract_strided_slice %110 {offsets = [0, 96], sizes = [1, 32], strides = [1, 1]} : vector<1x128xf32> to vector<1x32xf32>
    %126 = arith.negf %125 : vector<1x32xf32>
    %127 = math.exp %126 : vector<1x32xf32>
    %cst_37 = arith.constant 1.000000e+00 : f32
    %128 = vector.broadcast %cst_37 : f32 to vector<1x32xf32>
    %129 = arith.addf %128, %127 : vector<1x32xf32>
    %130 = arith.divf %128, %129 : vector<1x32xf32>
    %131 = arith.mulf %122, %103 : vector<1x32xf32>
    %132 = arith.mulf %116, %124 : vector<1x32xf32>
    %133 = arith.addf %131, %132 : vector<1x32xf32>
    %134 = math.tanh %133 : vector<1x32xf32>
    %135 = arith.mulf %130, %134 : vector<1x32xf32>
    %136 = vector.extract_strided_slice %41 {offsets = [0, 3, 0], sizes = [1, 1, 32], strides = [1, 1, 1]} : vector<1x8x32xf32> to vector<1x1x32xf32>
    %137 = vector.shape_cast %136 : vector<1x1x32xf32> to vector<1x32xf32>
    %138 = tpu.concatenate %137, %135 in 1 : vector<1x32xf32>, vector<1x32xf32> -> vector<1x64xf32>
    %cst_38 = arith.constant dense<0.000000e+00> : vector<1x128xf32>
    %139 = tpu.matmul %138, %42, %cst_38 {dimension_numbers = #tpu.dot_dimension_numbers<[1], [0], [0], [1], [0, 0, 1, 1], [], []>} : vector<1x64xf32>, vector<64x128xf32>, vector<1x128xf32> -> vector<1x128xf32>
    %140 = arith.addf %139, %43 : vector<1x128xf32>
    %141 = vector.extract_strided_slice %140 {offsets = [0, 0], sizes = [1, 32], strides = [1, 1]} : vector<1x128xf32> to vector<1x32xf32>
    %142 = arith.negf %141 : vector<1x32xf32>
    %143 = math.exp %142 : vector<1x32xf32>
    %cst_39 = arith.constant 1.000000e+00 : f32
    %144 = vector.broadcast %cst_39 : f32 to vector<1x32xf32>
    %145 = arith.addf %144, %143 : vector<1x32xf32>
    %146 = arith.divf %144, %145 : vector<1x32xf32>
    %147 = vector.extract_strided_slice %140 {offsets = [0, 32], sizes = [1, 32], strides = [1, 1]} : vector<1x128xf32> to vector<1x32xf32>
    %148 = arith.negf %147 : vector<1x32xf32>
    %149 = math.exp %148 : vector<1x32xf32>
    %cst_40 = arith.constant 1.000000e+00 : f32
    %150 = vector.broadcast %cst_40 : f32 to vector<1x32xf32>
    %151 = arith.addf %150, %149 : vector<1x32xf32>
    %152 = arith.divf %150, %151 : vector<1x32xf32>
    %153 = vector.extract_strided_slice %140 {offsets = [0, 64], sizes = [1, 32], strides = [1, 1]} : vector<1x128xf32> to vector<1x32xf32>
    %154 = math.tanh %153 : vector<1x32xf32>
    %155 = vector.extract_strided_slice %140 {offsets = [0, 96], sizes = [1, 32], strides = [1, 1]} : vector<1x128xf32> to vector<1x32xf32>
    %156 = arith.negf %155 : vector<1x32xf32>
    %157 = math.exp %156 : vector<1x32xf32>
    %cst_41 = arith.constant 1.000000e+00 : f32
    %158 = vector.broadcast %cst_41 : f32 to vector<1x32xf32>
    %159 = arith.addf %158, %157 : vector<1x32xf32>
    %160 = arith.divf %158, %159 : vector<1x32xf32>
    %161 = arith.mulf %152, %133 : vector<1x32xf32>
    %162 = arith.mulf %146, %154 : vector<1x32xf32>
    %163 = arith.addf %161, %162 : vector<1x32xf32>
    %164 = math.tanh %163 : vector<1x32xf32>
    %165 = arith.mulf %160, %164 : vector<1x32xf32>
    %166 = vector.extract_strided_slice %41 {offsets = [0, 4, 0], sizes = [1, 1, 32], strides = [1, 1, 1]} : vector<1x8x32xf32> to vector<1x1x32xf32>
    %167 = vector.shape_cast %166 : vector<1x1x32xf32> to vector<1x32xf32>
    %168 = tpu.concatenate %167, %165 in 1 : vector<1x32xf32>, vector<1x32xf32> -> vector<1x64xf32>
    %cst_42 = arith.constant dense<0.000000e+00> : vector<1x128xf32>
    %169 = tpu.matmul %168, %42, %cst_42 {dimension_numbers = #tpu.dot_dimension_numbers<[1], [0], [0], [1], [0, 0, 1, 1], [], []>} : vector<1x64xf32>, vector<64x128xf32>, vector<1x128xf32> -> vector<1x128xf32>
    %170 = arith.addf %169, %43 : vector<1x128xf32>
    %171 = vector.extract_strided_slice %170 {offsets = [0, 0], sizes = [1, 32], strides = [1, 1]} : vector<1x128xf32> to vector<1x32xf32>
    %172 = arith.negf %171 : vector<1x32xf32>
    %173 = math.exp %172 : vector<1x32xf32>
    %cst_43 = arith.constant 1.000000e+00 : f32
    %174 = vector.broadcast %cst_43 : f32 to vector<1x32xf32>
    %175 = arith.addf %174, %173 : vector<1x32xf32>
    %176 = arith.divf %174, %175 : vector<1x32xf32>
    %177 = vector.extract_strided_slice %170 {offsets = [0, 32], sizes = [1, 32], strides = [1, 1]} : vector<1x128xf32> to vector<1x32xf32>
    %178 = arith.negf %177 : vector<1x32xf32>
    %179 = math.exp %178 : vector<1x32xf32>
    %cst_44 = arith.constant 1.000000e+00 : f32
    %180 = vector.broadcast %cst_44 : f32 to vector<1x32xf32>
    %181 = arith.addf %180, %179 : vector<1x32xf32>
    %182 = arith.divf %180, %181 : vector<1x32xf32>
    %183 = vector.extract_strided_slice %170 {offsets = [0, 64], sizes = [1, 32], strides = [1, 1]} : vector<1x128xf32> to vector<1x32xf32>
    %184 = math.tanh %183 : vector<1x32xf32>
    %185 = vector.extract_strided_slice %170 {offsets = [0, 96], sizes = [1, 32], strides = [1, 1]} : vector<1x128xf32> to vector<1x32xf32>
    %186 = arith.negf %185 : vector<1x32xf32>
    %187 = math.exp %186 : vector<1x32xf32>
    %cst_45 = arith.constant 1.000000e+00 : f32
    %188 = vector.broadcast %cst_45 : f32 to vector<1x32xf32>
    %189 = arith.addf %188, %187 : vector<1x32xf32>
    %190 = arith.divf %188, %189 : vector<1x32xf32>
    %191 = arith.mulf %182, %163 : vector<1x32xf32>
    %192 = arith.mulf %176, %184 : vector<1x32xf32>
    %193 = arith.addf %191, %192 : vector<1x32xf32>
    %194 = math.tanh %193 : vector<1x32xf32>
    %195 = arith.mulf %190, %194 : vector<1x32xf32>
    %196 = vector.extract_strided_slice %41 {offsets = [0, 5, 0], sizes = [1, 1, 32], strides = [1, 1, 1]} : vector<1x8x32xf32> to vector<1x1x32xf32>
    %197 = vector.shape_cast %196 : vector<1x1x32xf32> to vector<1x32xf32>
    %198 = tpu.concatenate %197, %195 in 1 : vector<1x32xf32>, vector<1x32xf32> -> vector<1x64xf32>
    %cst_46 = arith.constant dense<0.000000e+00> : vector<1x128xf32>
    %199 = tpu.matmul %198, %42, %cst_46 {dimension_numbers = #tpu.dot_dimension_numbers<[1], [0], [0], [1], [0, 0, 1, 1], [], []>} : vector<1x64xf32>, vector<64x128xf32>, vector<1x128xf32> -> vector<1x128xf32>
    %200 = arith.addf %199, %43 : vector<1x128xf32>
    %201 = vector.extract_strided_slice %200 {offsets = [0, 0], sizes = [1, 32], strides = [1, 1]} : vector<1x128xf32> to vector<1x32xf32>
    %202 = arith.negf %201 : vector<1x32xf32>
    %203 = math.exp %202 : vector<1x32xf32>
    %cst_47 = arith.constant 1.000000e+00 : f32
    %204 = vector.broadcast %cst_47 : f32 to vector<1x32xf32>
    %205 = arith.addf %204, %203 : vector<1x32xf32>
    %206 = arith.divf %204, %205 : vector<1x32xf32>
    %207 = vector.extract_strided_slice %200 {offsets = [0, 32], sizes = [1, 32], strides = [1, 1]} : vector<1x128xf32> to vector<1x32xf32>
    %208 = arith.negf %207 : vector<1x32xf32>
    %209 = math.exp %208 : vector<1x32xf32>
    %cst_48 = arith.constant 1.000000e+00 : f32
    %210 = vector.broadcast %cst_48 : f32 to vector<1x32xf32>
    %211 = arith.addf %210, %209 : vector<1x32xf32>
    %212 = arith.divf %210, %211 : vector<1x32xf32>
    %213 = vector.extract_strided_slice %200 {offsets = [0, 64], sizes = [1, 32], strides = [1, 1]} : vector<1x128xf32> to vector<1x32xf32>
    %214 = math.tanh %213 : vector<1x32xf32>
    %215 = vector.extract_strided_slice %200 {offsets = [0, 96], sizes = [1, 32], strides = [1, 1]} : vector<1x128xf32> to vector<1x32xf32>
    %216 = arith.negf %215 : vector<1x32xf32>
    %217 = math.exp %216 : vector<1x32xf32>
    %cst_49 = arith.constant 1.000000e+00 : f32
    %218 = vector.broadcast %cst_49 : f32 to vector<1x32xf32>
    %219 = arith.addf %218, %217 : vector<1x32xf32>
    %220 = arith.divf %218, %219 : vector<1x32xf32>
    %221 = arith.mulf %212, %193 : vector<1x32xf32>
    %222 = arith.mulf %206, %214 : vector<1x32xf32>
    %223 = arith.addf %221, %222 : vector<1x32xf32>
    %224 = math.tanh %223 : vector<1x32xf32>
    %225 = arith.mulf %220, %224 : vector<1x32xf32>
    %226 = vector.extract_strided_slice %41 {offsets = [0, 6, 0], sizes = [1, 1, 32], strides = [1, 1, 1]} : vector<1x8x32xf32> to vector<1x1x32xf32>
    %227 = vector.shape_cast %226 : vector<1x1x32xf32> to vector<1x32xf32>
    %228 = tpu.concatenate %227, %225 in 1 : vector<1x32xf32>, vector<1x32xf32> -> vector<1x64xf32>
    %cst_50 = arith.constant dense<0.000000e+00> : vector<1x128xf32>
    %229 = tpu.matmul %228, %42, %cst_50 {dimension_numbers = #tpu.dot_dimension_numbers<[1], [0], [0], [1], [0, 0, 1, 1], [], []>} : vector<1x64xf32>, vector<64x128xf32>, vector<1x128xf32> -> vector<1x128xf32>
    %230 = arith.addf %229, %43 : vector<1x128xf32>
    %231 = vector.extract_strided_slice %230 {offsets = [0, 0], sizes = [1, 32], strides = [1, 1]} : vector<1x128xf32> to vector<1x32xf32>
    %232 = arith.negf %231 : vector<1x32xf32>
    %233 = math.exp %232 : vector<1x32xf32>
    %cst_51 = arith.constant 1.000000e+00 : f32
    %234 = vector.broadcast %cst_51 : f32 to vector<1x32xf32>
    %235 = arith.addf %234, %233 : vector<1x32xf32>
    %236 = arith.divf %234, %235 : vector<1x32xf32>
    %237 = vector.extract_strided_slice %230 {offsets = [0, 32], sizes = [1, 32], strides = [1, 1]} : vector<1x128xf32> to vector<1x32xf32>
    %238 = arith.negf %237 : vector<1x32xf32>
    %239 = math.exp %238 : vector<1x32xf32>
    %cst_52 = arith.constant 1.000000e+00 : f32
    %240 = vector.broadcast %cst_52 : f32 to vector<1x32xf32>
    %241 = arith.addf %240, %239 : vector<1x32xf32>
    %242 = arith.divf %240, %241 : vector<1x32xf32>
    %243 = vector.extract_strided_slice %230 {offsets = [0, 64], sizes = [1, 32], strides = [1, 1]} : vector<1x128xf32> to vector<1x32xf32>
    %244 = math.tanh %243 : vector<1x32xf32>
    %245 = vector.extract_strided_slice %230 {offsets = [0, 96], sizes = [1, 32], strides = [1, 1]} : vector<1x128xf32> to vector<1x32xf32>
    %246 = arith.negf %245 : vector<1x32xf32>
    %247 = math.exp %246 : vector<1x32xf32>
    %cst_53 = arith.constant 1.000000e+00 : f32
    %248 = vector.broadcast %cst_53 : f32 to vector<1x32xf32>
    %249 = arith.addf %248, %247 : vector<1x32xf32>
    %250 = arith.divf %248, %249 : vector<1x32xf32>
    %251 = arith.mulf %242, %223 : vector<1x32xf32>
    %252 = arith.mulf %236, %244 : vector<1x32xf32>
    %253 = arith.addf %251, %252 : vector<1x32xf32>
    %254 = math.tanh %253 : vector<1x32xf32>
    %255 = arith.mulf %250, %254 : vector<1x32xf32>
    %256 = vector.extract_strided_slice %41 {offsets = [0, 7, 0], sizes = [1, 1, 32], strides = [1, 1, 1]} : vector<1x8x32xf32> to vector<1x1x32xf32>
    %257 = vector.shape_cast %256 : vector<1x1x32xf32> to vector<1x32xf32>
    %258 = tpu.concatenate %257, %255 in 1 : vector<1x32xf32>, vector<1x32xf32> -> vector<1x64xf32>
    %cst_54 = arith.constant dense<0.000000e+00> : vector<1x128xf32>
    %259 = tpu.matmul %258, %42, %cst_54 {dimension_numbers = #tpu.dot_dimension_numbers<[1], [0], [0], [1], [0, 0, 1, 1], [], []>} : vector<1x64xf32>, vector<64x128xf32>, vector<1x128xf32> -> vector<1x128xf32>
    %260 = arith.addf %259, %43 : vector<1x128xf32>
    %261 = vector.extract_strided_slice %260 {offsets = [0, 0], sizes = [1, 32], strides = [1, 1]} : vector<1x128xf32> to vector<1x32xf32>
    %262 = arith.negf %261 : vector<1x32xf32>
    %263 = math.exp %262 : vector<1x32xf32>
    %cst_55 = arith.constant 1.000000e+00 : f32
    %264 = vector.broadcast %cst_55 : f32 to vector<1x32xf32>
    %265 = arith.addf %264, %263 : vector<1x32xf32>
    %266 = arith.divf %264, %265 : vector<1x32xf32>
    %267 = vector.extract_strided_slice %260 {offsets = [0, 32], sizes = [1, 32], strides = [1, 1]} : vector<1x128xf32> to vector<1x32xf32>
    %268 = arith.negf %267 : vector<1x32xf32>
    %269 = math.exp %268 : vector<1x32xf32>
    %cst_56 = arith.constant 1.000000e+00 : f32
    %270 = vector.broadcast %cst_56 : f32 to vector<1x32xf32>
    %271 = arith.addf %270, %269 : vector<1x32xf32>
    %272 = arith.divf %270, %271 : vector<1x32xf32>
    %273 = vector.extract_strided_slice %260 {offsets = [0, 64], sizes = [1, 32], strides = [1, 1]} : vector<1x128xf32> to vector<1x32xf32>
    %274 = math.tanh %273 : vector<1x32xf32>
    %275 = vector.extract_strided_slice %260 {offsets = [0, 96], sizes = [1, 32], strides = [1, 1]} : vector<1x128xf32> to vector<1x32xf32>
    %276 = arith.negf %275 : vector<1x32xf32>
    %277 = math.exp %276 : vector<1x32xf32>
    %cst_57 = arith.constant 1.000000e+00 : f32
    %278 = vector.broadcast %cst_57 : f32 to vector<1x32xf32>
    %279 = arith.addf %278, %277 : vector<1x32xf32>
    %280 = arith.divf %278, %279 : vector<1x32xf32>
    %281 = arith.mulf %272, %253 : vector<1x32xf32>
    %282 = arith.mulf %266, %274 : vector<1x32xf32>
    %283 = arith.addf %281, %282 : vector<1x32xf32>
    %284 = math.tanh %283 : vector<1x32xf32>
    %285 = arith.mulf %280, %284 : vector<1x32xf32>
    %c0_58 = arith.constant 0 : index
    %c0_59 = arith.constant 0 : index
    %286 = vector.load %arg7[%c0_58, %c0_59] : memref<32x1xf32, #tpu.memory_space<vmem>>, vector<32x1xf32>
    %cst_60 = arith.constant dense<0.000000e+00> : vector<1x1xf32>
    %287 = tpu.matmul %285, %286, %cst_60 {dimension_numbers = #tpu.dot_dimension_numbers<[1], [0], [0], [1], [0, 0, 1, 1], [], []>} : vector<1x32xf32>, vector<32x1xf32>, vector<1x1xf32> -> vector<1x1xf32>
    %c0_61 = arith.constant 0 : index
    %c0_62 = arith.constant 0 : index
    %288 = vector.load %arg8[%c0_61, %c0_62] : memref<1x1xf32, #tpu.memory_space<vmem>>, vector<1x1xf32>
    %289 = arith.addf %287, %288 : vector<1x1xf32>
    %290 = arith.negf %289 : vector<1x1xf32>
    %291 = math.exp %290 : vector<1x1xf32>
    %cst_63 = arith.constant 1.000000e+00 : f32
    %292 = vector.broadcast %cst_63 : f32 to vector<1x1xf32>
    %293 = arith.addf %292, %291 : vector<1x1xf32>
    %294 = arith.divf %292, %293 : vector<1x1xf32>
    %295 = vector.shape_cast %294 : vector<1x1xf32> to vector<1x1x1xf32>
    %c0_64 = arith.constant 0 : index
    %c0_65 = arith.constant 0 : index
    %c0_66 = arith.constant 0 : index
    %296 = vector.load %arg9[%c0_64, %c0_65, %c0_66] : memref<1x1x1xf32, #tpu.memory_space<vmem>>, vector<1x1x1xf32>
    tpu.vector_store %arg9[%c0_64, %c0_65, %c0_66], %295 {strides = array<i32>} : memref<1x1x1xf32, #tpu.memory_space<vmem>>, vector<1x1x1xf32>,
    return
  }
  func.func @transform_0(%arg0: i32) -> (i32, i32, i32, i32) {
    %c0_i32 = arith.constant 0 : i32
    %c0_i32_0 = arith.constant 0 : i32
    %c0_i32_1 = arith.constant 0 : i32
    %c0_i32_2 = arith.constant 0 : i32
    return %arg0, %c0_i32, %c0_i32_0, %c0_i32_1 : i32, i32, i32, i32
  }
  func.func @transform_1(%arg0: i32) -> (i32, i32, i32, i32) {
    %c0_i32 = arith.constant 0 : i32
    %c0_i32_0 = arith.constant 0 : i32
    %c0_i32_1 = arith.constant 0 : i32
    %c0_i32_2 = arith.constant 0 : i32
    return %arg0, %c0_i32, %c0_i32_0, %c0_i32_1 : i32, i32, i32, i32
  }
  func.func @transform_2(%arg0: i32) -> (i32, i32) {
    %c0_i32 = arith.constant 0 : i32
    %c0_i32_0 = arith.constant 0 : i32
    %c0_i32_1 = arith.constant 0 : i32
    return %c0_i32, %c0_i32_0 : i32, i32
  }
  func.func @transform_3(%arg0: i32) -> (i32, i32) {
    %c0_i32 = arith.constant 0 : i32
    %c0_i32_0 = arith.constant 0 : i32
    %c0_i32_1 = arith.constant 0 : i32
    return %c0_i32, %c0_i32_0 : i32, i32
  }
  func.func @transform_4(%arg0: i32) -> (i32, i32) {
    %c0_i32 = arith.constant 0 : i32
    %c0_i32_0 = arith.constant 0 : i32
    %c0_i32_1 = arith.constant 0 : i32
    return %c0_i32, %c0_i32_0 : i32, i32
  }
  func.func @transform_5(%arg0: i32) -> (i32, i32) {
    %c0_i32 = arith.constant 0 : i32
    %c0_i32_0 = arith.constant 0 : i32
    %c0_i32_1 = arith.constant 0 : i32
    return %c0_i32, %c0_i32_0 : i32, i32
  }
  func.func @transform_6(%arg0: i32) -> (i32, i32) {
    %c0_i32 = arith.constant 0 : i32
    %c0_i32_0 = arith.constant 0 : i32
    %c0_i32_1 = arith.constant 0 : i32
    return %c0_i32, %c0_i32_0 : i32, i32
  }
  func.func @transform_7(%arg0: i32) -> (i32, i32) {
    %c0_i32 = arith.constant 0 : i32
    %c0_i32_0 = arith.constant 0 : i32
    %c0_i32_1 = arith.constant 0 : i32
    return %c0_i32, %c0_i32_0 : i32, i32
  }
  func.func @transform_8(%arg0: i32) -> (i32, i32, i32) {
    %c0_i32 = arith.constant 0 : i32
    %c0_i32_0 = arith.constant 0 : i32
    %c0_i32_1 = arith.constant 0 : i32
    return %arg0, %c0_i32, %c0_i32_0 : i32, i32, i32
  }
}

</mosaic_0001>

<llo_original>
// kernel: tpu_custom_call.1
$region0: #{tpu_custom_call.1}
  #allocation0 [shape = 'u32[]', space=smem, size = 0x4, offset = 0x4, fixed_abs, tag = 'smem constant byte address 0x4 - core index']
  #allocation1 [shape = 'u32[144,128]{1,0:T(1,128)}', space=vmem, size = 0x12000, scoped, tag = 'internal scratch']
  #allocation2 [shape = 'f32[1,1]{1,0:T(1,128)S(1)}', space=vmem, size = 0x200, scoped, tag = 'scoped memory for tpu_custom_call.1']
  %s0 = inlined_call_operand.vmem [shape: f32[2,8,16,8], index: 0, kind: input, shape index: {}]
  %s1 = inlined_call_operand.vmem [shape: bf16[2,8,16,16], index: 1, kind: input, shape index: {}]
  %s2 = inlined_call_operand.vmem [shape: f32[8,34], index: 2, kind: input, shape index: {}]
  %s3 = inlined_call_operand.vmem [shape: f32[1,32], index: 3, kind: input, shape index: {}]
  %s4 = inlined_call_operand.vmem [shape: f32[64,128], index: 4, kind: input, shape index: {}]
  %s5 = inlined_call_operand.vmem [shape: f32[1,128], index: 5, kind: input, shape index: {}]
  %s6 = inlined_call_operand.vmem [shape: f32[32,1], index: 6, kind: input, shape index: {}]
  %s7 = inlined_call_operand.<no memory space> [shape: f32[1,1], index: 7, kind: input, shape index: {}]
  %s8 = inlined_call_operand.vmem [shape: f32[2,1,1], index: 8, kind: output, shape index: {}]
  %s9 = sld [smem:[#allocation0]]
  $region65: #{tpu_custom_call.1} parent=0
    _
  %s11 = ssub.s32 1, %s9
  %s12 = scalar_select 0, %s11, %s9
  %v13 = vstv %s7
  %14 = vst [vmem:[#allocation2] sm:$0x1] %v13
  loop: start=0, step=1, limit=4
  $region2: #{tpu_custom_call.1} parent=0 // loop_pre_header
    _
  $region3: #{tpu_custom_call.1} parent=0 // loop_header
    %s16 = sphi 0, %s20
    %p17 = scmp.ge.s32.totalorder %s16, 4
    %s26 = sphi 0, %s28
    %s29 = sphi 0, %s26
    %s30 = sphi 0, %s29
    %s46 = sphi 0, %s30
    %s52 = sphi 0, %s54
    %s55 = sphi 0, %s52
    %s56 = sphi 0, %s55
    %s72 = sphi 0, %s56
    %s76 = sphi 0, %s76
    %s78 = sphi 0, %s76
    %s79 = sphi 0, %s78
    %s93 = sphi 0, %s79
    %s97 = sphi 0, %s97
    %s99 = sphi 0, %s97
    %s100 = sphi 0, %s99
    %s114 = sphi 0, %s100
    %s118 = sphi 0, %s118
    %s120 = sphi 0, %s118
    %s121 = sphi 0, %s120
    %s135 = sphi 0, %s121
    %s139 = sphi 0, %s139
    %s141 = sphi 0, %s139
    %s142 = sphi 0, %s141
    %s156 = sphi 0, %s142
    %s160 = sphi 0, %s160
    %s162 = sphi 0, %s160
    %s163 = sphi 0, %s162
    %s177 = sphi 0, %s163
    %s181 = sphi 0, %s181
    %s183 = sphi 0, %s181
    %s184 = sphi 0, %s183
    %s198 = sphi 0, %s184
    %s204 = sphi 0, %s206
    %s207 = sphi 0, %s204
    %s208 = sphi 0, %s207
    %s224 = sphi 0, %s208
  $region4: #{tpu_custom_call.1} parent=0 // loop_header_branch
    %19 = sbr.rel (%p17) target = $region8
  $region5: #{tpu_custom_call.1} parent=0 // loop_body
    %s21 = ssub.s32 %s16, 1
    %s22 = ssub.s32 %s16, 2
    %s23 = sadd.s32 %s16, 1
    %s24 = ssub.s32 %s16, %s23
    %p25 = scmp.eq.s32.totalorder %s24, 0
    %s27 = sadd.s32 %s26, 1
    %s28 = scalar_select %p25, %s26, %s27
    %p31 = pneg %p25
    %p32 = scmp.eq.s32.totalorder %s16, 1
    %p33 = por %p31, %p32
    %p34 = scmp.ne.s32.totalorder %s26, %s29
    %p35 = scmp.eq.s32.totalorder %s16, 0
    %p36 = por %p34, %p35
    %p37 = scmp.ne.s32.totalorder %s26, %s29
    %p38 = scmp.eq.s32.totalorder %s21, 1
    %p39 = por %p37, %p38
    %p40 = scmp.ne.s32.totalorder %s29, %s30
    %p41 = scmp.eq.s32.totalorder %s21, 0
    %p42 = por %p40, %p41
    %p43 = scmp.ne.s32.totalorder %s29, %s30
    %p44 = scmp.eq.s32.totalorder %s22, 1
    %p45 = por %p43, %p44
    %p47 = scmp.ne.s32.totalorder %s30, %s46
    %p48 = scmp.eq.s32.totalorder %s22, 0
    %p49 = por %p47, %p48
    %s50 = ssub.s32 %s16, %s23
    %p51 = scmp.eq.s32.totalorder %s50, 0
    %s53 = sadd.s32 %s52, 1
    %s54 = scalar_select %p51, %s52, %s53
    %p57 = pneg %p51
    %p58 = scmp.eq.s32.totalorder %s16, 1
    %p59 = por %p57, %p58
    %p60 = scmp.ne.s32.totalorder %s52, %s55
    %p61 = scmp.eq.s32.totalorder %s16, 0
    %p62 = por %p60, %p61
    %p63 = scmp.ne.s32.totalorder %s52, %s55
    %p64 = scmp.eq.s32.totalorder %s21, 1
    %p65 = por %p63, %p64
    %p66 = scmp.ne.s32.totalorder %s55, %s56
    %p67 = scmp.eq.s32.totalorder %s21, 0
    %p68 = por %p66, %p67
    %p69 = scmp.ne.s32.totalorder %s55, %s56
    %p70 = scmp.eq.s32.totalorder %s22, 1
    %p71 = por %p69, %p70
    %p73 = scmp.ne.s32.totalorder %s56, %s72
    %p74 = scmp.eq.s32.totalorder %s22, 0
    %p75 = por %p73, %p74
    %s77 = sadd.s32 %s76, 1
    %p80 = scmp.eq.s32.totalorder %s16, 1
    %p81 = scmp.ne.s32.totalorder %s76, %s78
    %p82 = scmp.eq.s32.totalorder %s16, 0
    %p83 = por %p81, %p82
    %p84 = scmp.ne.s32.totalorder %s76, %s78
    %p85 = scmp.eq.s32.totalorder %s21, 1
    %p86 = por %p84, %p85
    %p87 = scmp.ne.s32.totalorder %s78, %s79
    %p88 = scmp.eq.s32.totalorder %s21, 0
    %p89 = por %p87, %p88
    %p90 = scmp.ne.s32.totalorder %s78, %s79
    %p91 = scmp.eq.s32.totalorder %s22, 1
    %p92 = por %p90, %p91
    %p94 = scmp.ne.s32.totalorder %s79, %s93
    %p95 = scmp.eq.s32.totalorder %s22, 0
    %p96 = por %p94, %p95
    %s98 = sadd.s32 %s97, 1
    %p101 = scmp.eq.s32.totalorder %s16, 1
    %p102 = scmp.ne.s32.totalorder %s97, %s99
    %p103 = scmp.eq.s32.totalorder %s16, 0
    %p104 = por %p102, %p103
    %p105 = scmp.ne.s32.totalorder %s97, %s99
    %p106 = scmp.eq.s32.totalorder %s21, 1
    %p107 = por %p105, %p106
    %p108 = scmp.ne.s32.totalorder %s99, %s100
    %p109 = scmp.eq.s32.totalorder %s21, 0
    %p110 = por %p108, %p109
    %p111 = scmp.ne.s32.totalorder %s99, %s100
    %p112 = scmp.eq.s32.totalorder %s22, 1
    %p113 = por %p111, %p112
    %p115 = scmp.ne.s32.totalorder %s100, %s114
    %p116 = scmp.eq.s32.totalorder %s22, 0
    %p117 = por %p115, %p116
    %s119 = sadd.s32 %s118, 1
    %p122 = scmp.eq.s32.totalorder %s16, 1
    %p123 = scmp.ne.s32.totalorder %s118, %s120
    %p124 = scmp.eq.s32.totalorder %s16, 0
    %p125 = por %p123, %p124
    %p126 = scmp.ne.s32.totalorder %s118, %s120
    %p127 = scmp.eq.s32.totalorder %s21, 1
    %p128 = por %p126, %p127
    %p129 = scmp.ne.s32.totalorder %s120, %s121
    %p130 = scmp.eq.s32.totalorder %s21, 0
    %p131 = por %p129, %p130
    %p132 = scmp.ne.s32.totalorder %s120, %s121
    %p133 = scmp.eq.s32.totalorder %s22, 1
    %p134 = por %p132, %p133
    %p136 = scmp.ne.s32.totalorder %s121, %s135
    %p137 = scmp.eq.s32.totalorder %s22, 0
    %p138 = por %p136, %p137
    %s140 = sadd.s32 %s139, 1
    %p143 = scmp.eq.s32.totalorder %s16, 1
    %p144 = scmp.ne.s32.totalorder %s139, %s141
    %p145 = scmp.eq.s32.totalorder %s16, 0
    %p146 = por %p144, %p145
    %p147 = scmp.ne.s32.totalorder %s139, %s141
    %p148 = scmp.eq.s32.totalorder %s21, 1
    %p149 = por %p147, %p148
    %p150 = scmp.ne.s32.totalorder %s141, %s142
    %p151 = scmp.eq.s32.totalorder %s21, 0
    %p152 = por %p150, %p151
    %p153 = scmp.ne.s32.totalorder %s141, %s142
    %p154 = scmp.eq.s32.totalorder %s22, 1
    %p155 = por %p153, %p154
    %p157 = scmp.ne.s32.totalorder %s142, %s156
    %p158 = scmp.eq.s32.totalorder %s22, 0
    %p159 = por %p157, %p158
    %s161 = sadd.s32 %s160, 1
    %p164 = scmp.eq.s32.totalorder %s16, 1
    %p165 = scmp.ne.s32.totalorder %s160, %s162
    %p166 = scmp.eq.s32.totalorder %s16, 0
    %p167 = por %p165, %p166
    %p168 = scmp.ne.s32.totalorder %s160, %s162
    %p169 = scmp.eq.s32.totalorder %s21, 1
    %p170 = por %p168, %p169
    %p171 = scmp.ne.s32.totalorder %s162, %s163
    %p172 = scmp.eq.s32.totalorder %s21, 0
    %p173 = por %p171, %p172
    %p174 = scmp.ne.s32.totalorder %s162, %s163
    %p175 = scmp.eq.s32.totalorder %s22, 1
    %p176 = por %p174, %p175
    %p178 = scmp.ne.s32.totalorder %s163, %s177
    %p179 = scmp.eq.s32.totalorder %s22, 0
    %p180 = por %p178, %p179
    %s182 = sadd.s32 %s181, 1
    %p185 = scmp.eq.s32.totalorder %s16, 1
    %p186 = scmp.ne.s32.totalorder %s181, %s183
    %p187 = scmp.eq.s32.totalorder %s16, 0
    %p188 = por %p186, %p187
    %p189 = scmp.ne.s32.totalorder %s181, %s183
    %p190 = scmp.eq.s32.totalorder %s21, 1
    %p191 = por %p189, %p190
    %p192 = scmp.ne.s32.totalorder %s183, %s184
    %p193 = scmp.eq.s32.totalorder %s21, 0
    %p194 = por %p192, %p193
    %p195 = scmp.ne.s32.totalorder %s183, %s184
    %p196 = scmp.eq.s32.totalorder %s22, 1
    %p197 = por %p195, %p196
    %p199 = scmp.ne.s32.totalorder %s184, %s198
    %p200 = scmp.eq.s32.totalorder %s22, 0
    %p201 = por %p199, %p200
    %s202 = ssub.s32 %s16, %s23
    %p203 = scmp.eq.s32.totalorder %s202, 0
    %s205 = sadd.s32 %s204, 1
    %s206 = scalar_select %p203, %s204, %s205
    %p209 = pneg %p203
    %p210 = scmp.eq.s32.totalorder %s16, 1
    %p211 = por %p209, %p210
    %p212 = scmp.ne.s32.totalorder %s204, %s207
    %p213 = scmp.eq.s32.totalorder %s16, 0
    %p214 = por %p212, %p213
    %p215 = scmp.ne.s32.totalorder %s204, %s207
    %p216 = scmp.eq.s32.totalorder %s21, 1
    %p217 = por %p215, %p216
    %p218 = scmp.ne.s32.totalorder %s207, %s208
    %p219 = scmp.eq.s32.totalorder %s21, 0
    %p220 = por %p218, %p219
    %p221 = scmp.ne.s32.totalorder %s207, %s208
    %p222 = scmp.eq.s32.totalorder %s22, 1
    %p223 = por %p221, %p222
    %p225 = scmp.ne.s32.totalorder %s208, %s224
    %p226 = scmp.eq.s32.totalorder %s22, 0
    %p227 = por %p225, %p226
    %p228 = scmp.le.s32.totalorder 1, %s16
    %p229 = scmp.lt.s32.totalorder %s16, 3
    %p230 = pnand %p228, %p229
    %p231 = pneg %p230
    // Predicated region
    $region9: #{tpu_custom_call.1} parent=5 // pred_check
      _
    $region10: #{tpu_custom_call.1} parent=5 // pred_check_branch
      %233 = sbr.rel (%p230) target = $region12
    $region11: #{tpu_custom_call.1} parent=5 // pred_region
      %s234 = ssub.s32 %s16, 1
      // Predicated region
      $region13: #{tpu_custom_call.1} parent=11 // pred_check
        %p235 = pneg %p89
      $region14: #{tpu_custom_call.1} parent=11 // pred_check_branch
        %237 = sbr.rel (%p235) target = $region16
      $region15: #{tpu_custom_call.1} parent=11 // pred_region
        _
      $region16: #{tpu_custom_call.1} parent=11 // pred_fallthru
        _
      // Predicated region
      $region17: #{tpu_custom_call.1} parent=11 // pred_check
        %p238 = pneg %p110
      $region18: #{tpu_custom_call.1} parent=11 // pred_check_branch
        %240 = sbr.rel (%p238) target = $region20
      $region19: #{tpu_custom_call.1} parent=11 // pred_region
        _
      $region20: #{tpu_custom_call.1} parent=11 // pred_fallthru
        _
      // Predicated region
      $region21: #{tpu_custom_call.1} parent=11 // pred_check
        %p241 = pneg %p131
      $region22: #{tpu_custom_call.1} parent=11 // pred_check_branch
        %243 = sbr.rel (%p241) target = $region24
      $region23: #{tpu_custom_call.1} parent=11 // pred_region
        _
      $region24: #{tpu_custom_call.1} parent=11 // pred_fallthru
        _
      // Predicated region
      $region25: #{tpu_custom_call.1} parent=11 // pred_check
        %p244 = pneg %p152
      $region26: #{tpu_custom_call.1} parent=11 // pred_check_branch
        %246 = sbr.rel (%p244) target = $region28
      $region27: #{tpu_custom_call.1} parent=11 // pred_region
        _
      $region28: #{tpu_custom_call.1} parent=11 // pred_fallthru
        _
      // Predicated region
      $region29: #{tpu_custom_call.1} parent=11 // pred_check
        %p247 = pneg %p173
      $region30: #{tpu_custom_call.1} parent=11 // pred_check_branch
        %249 = sbr.rel (%p247) target = $region32
      $region31: #{tpu_custom_call.1} parent=11 // pred_region
        _
      $region32: #{tpu_custom_call.1} parent=11 // pred_fallthru
        _
      // Predicated region
      $region33: #{tpu_custom_call.1} parent=11 // pred_check
        %p250 = pneg %p194
      $region34: #{tpu_custom_call.1} parent=11 // pred_check_branch
        %252 = sbr.rel (%p250) target = $region36
      $region35: #{tpu_custom_call.1} parent=11 // pred_region
        _
      $region36: #{tpu_custom_call.1} parent=11 // pred_fallthru
        _
    $region12: #{tpu_custom_call.1} parent=5 // pred_fallthru
      _
    %p253 = scmp.lt.s32.totalorder %s16, 2
    // Predicated region
    $region37: #{tpu_custom_call.1} parent=5 // pred_check
      %p254 = pneg %p253
    $region38: #{tpu_custom_call.1} parent=5 // pred_check_branch
      %256 = sbr.rel (%p254) target = $region40
    $region39: #{tpu_custom_call.1} parent=5 // pred_region
      // Predicated region
      $region41: #{tpu_custom_call.1} parent=39 // pred_check
        %p257 = pneg %p36
      $region42: #{tpu_custom_call.1} parent=39 // pred_check_branch
        %259 = sbr.rel (%p257) target = $region44
      $region43: #{tpu_custom_call.1} parent=39 // pred_region
        %p260 = scmp.lt.s32.totalorder %s16, 1
        %s261 = scalar_select %p260, %s16, 1
        %s262 = smul.addr %s261, 16
        %s263 = smul.addr %s262, 8
        %s264 = scalar_lea.vmem %s0, %s263
      $region44: #{tpu_custom_call.1} parent=39 // pred_fallthru
        _
      // Predicated region
      $region45: #{tpu_custom_call.1} parent=39 // pred_check
        %p265 = pneg %p62
      $region46: #{tpu_custom_call.1} parent=39 // pred_check_branch
        %267 = sbr.rel (%p265) target = $region48
      $region47: #{tpu_custom_call.1} parent=39 // pred_region
        %p268 = scmp.lt.s32.totalorder %s16, 1
        %s269 = scalar_select %p268, %s16, 1
        %s270 = smul.addr %s269, 16
        %s271 = smul.addr %s270, 4
        %s272 = scalar_lea.vmem %s1, %s271
      $region48: #{tpu_custom_call.1} parent=39 // pred_fallthru
        _
    $region40: #{tpu_custom_call.1} parent=5 // pred_fallthru
      _
    %p273 = scmp.le.s32.totalorder 1, %s16
    %p274 = scmp.lt.s32.totalorder %s16, 3
    %p275 = pnand %p273, %p274
    %p276 = pneg %p275
    // Predicated region
    $region49: #{tpu_custom_call.1} parent=5 // pred_check
      _
    $region50: #{tpu_custom_call.1} parent=5 // pred_check_branch
      %278 = sbr.rel (%p275) target = $region52
    $region51: #{tpu_custom_call.1} parent=5 // pred_region
      %s279 = ssub.s32 %s16, 1
      %p280 = scmp.lt.s32.totalorder %s21, 1
      %s281 = scalar_select %p280, %s21, 1
      %s282 = smul.addr %s281, 16
      %s283 = smul.addr %s282, 8
      %s284 = scalar_lea.vmem %s0, %s283
      %p285 = pneg %p42
      %p286 = pneg %p39
      %p287 = scmp.lt.s32.totalorder %s21, 1
      %s288 = scalar_select %p287, %s21, 1
      %s289 = smul.addr %s288, 16
      %s290 = smul.addr %s289, 4
      %s291 = scalar_lea.vmem %s1, %s290
      %p292 = pneg %p68
      %p293 = pneg %p65
      %p294 = pneg %p89
      %p295 = pneg %p86
      %p296 = pneg %p110
      %p297 = pneg %p107
      %p298 = pneg %p131
      %p299 = pneg %p128
      %p300 = pneg %p152
      %p301 = pneg %p149
      %p302 = pneg %p173
      %p303 = pneg %p170
      %p304 = pneg %p194
      %p305 = pneg %p191
      %p306 = pneg %p220
      %p307 = pneg %p217
      %p308 = scmp.lt.s32.totalorder %s21, 1
      %s309 = scalar_select %p308, %s21, 1
      %s310 = scalar_lea.vmem %s8, %s309
      %p311 = scmp.lt.s32.totalorder %s21, 1
      %s312 = scalar_select %p311, %s21, 1
      %s313 = smul.addr %s312, 16
      %s314 = smul.addr %s313, 8
      %s315 = scalar_lea.vmem %s0, %s314
      %p316 = scmp.lt.s32.totalorder %s21, 1
      %s317 = scalar_select %p316, %s21, 1
      %s318 = smul.addr %s317, 16
      %s319 = smul.addr %s318, 4
      %s320 = scalar_lea.vmem %s1, %s319
      %p321 = scmp.lt.s32.totalorder %s21, 1
      %s322 = scalar_select %p321, %s21, 1
      %s323 = scalar_lea.vmem %s8, %s322
      %v327 = vld [vmem:[%s315] sm:$0xff]
      %v328 = vld [vmem:[%s315 + $0x8] sm:$0xff]
      %v329 = vld [vmem:[%s315 + $0x10] sm:$0xff]
      %v330 = vld [vmem:[%s315 + $0x18] sm:$0xff]
      %v331 = vld [vmem:[%s315 + $0x20] sm:$0xff]
      %v332 = vld [vmem:[%s315 + $0x28] sm:$0xff]
      %v333 = vld [vmem:[%s315 + $0x30] sm:$0xff]
      %v334 = vld [vmem:[%s315 + $0x38] sm:$0xff]
      %v335 = vld [vmem:[%s315 + $0x40] sm:$0xff]
      %v336 = vld [vmem:[%s315 + $0x48] sm:$0xff]
      %v337 = vld [vmem:[%s315 + $0x50] sm:$0xff]
      %v338 = vld [vmem:[%s315 + $0x58] sm:$0xff]
      %v339 = vld [vmem:[%s315 + $0x60] sm:$0xff]
      %v340 = vld [vmem:[%s315 + $0x68] sm:$0xff]
      %v341 = vld [vmem:[%s315 + $0x70] sm:$0xff]
      %v342 = vld [vmem:[%s315 + $0x78] sm:$0xff]
      %v343 = vld [vmem:[%s2] sm:$0xff]
      %vm344 = vcmask 64512
      %v346 = vsel %vm344, %v327, 0
      %v349 = vsel %vm344, %v328, 0
      %v352 = vsel %vm344, %v329, 0
      %v355 = vsel %vm344, %v330, 0
      %v358 = vsel %vm344, %v331, 0
      %v361 = vsel %vm344, %v332, 0
      %v364 = vsel %vm344, %v333, 0
      %v367 = vsel %vm344, %v334, 0
      %v370 = vsel %vm344, %v335, 0
      %v373 = vsel %vm344, %v336, 0
      %v376 = vsel %vm344, %v337, 0
      %v379 = vsel %vm344, %v338, 0
      %v382 = vsel %vm344, %v339, 0
      %v385 = vsel %vm344, %v340, 0
      %v388 = vsel %vm344, %v341, 0
      %v391 = vsel %vm344, %v342, 0
      %393 = vmatprep.subr.mxu0 0.0
      %394 = vmatpush1.msra.mxu0 %v343
      %395 = vmatprep.subr.mxu0 0.0
      %396 = vmatpush1.msra.mxu0 0.0
      %397 = vmatprep.subr.mxu0 0.0
      %398 = vmatpush1.msra.mxu0 0.0
      %399 = vmatprep.subr.mxu0 0.0
      %400 = vmatpush1.msra.mxu0 0.0
      %401 = vmatprep.subr.mxu0 0.0
      %402 = vmatpush1.msra.mxu0 0.0
      %403 = vmatprep.subr.mxu0 0.0
      %404 = vmatpush1.msra.mxu0 0.0
      %405 = vmatprep.subr.mxu0 0.0
      %406 = vmatpush1.msra.mxu0 0.0
      %407 = vmatprep.subr.mxu0 0.0
      %408 = vmatpush1.msra.mxu0 0.0
      %409 = vmatprep.subr.mxu0 0.0
      %410 = vmatpush1.msra.mxu0 0.0
      %411 = vmatprep.subr.mxu0 0.0
      %412 = vmatpush1.msra.mxu0 0.0
      %413 = vmatprep.subr.mxu0 0.0
      %414 = vmatpush1.msra.mxu0 0.0
      %415 = vmatprep.subr.mxu0 0.0
      %416 = vmatpush1.msra.mxu0 0.0
      %417 = vmatprep.subr.mxu0 0.0
      %418 = vmatpush1.msra.mxu0 0.0
      %419 = vmatprep.subr.mxu0 0.0
      %420 = vmatpush1.msra.mxu0 0.0
      %421 = vmatprep.subr.mxu0 0.0
      %422 = vmatpush1.msra.mxu0 0.0
      %423 = vmatprep.subr.mxu0 0.0
      %424 = vmatpush1.msra.mxu0 0.0
      %425 = vmatprep.subr.mxu0 0.0
      %426 = vmatpush1.msra.mxu0 0.0
      %427 = vmatprep.subr.mxu0 0.0
      %428 = vmatpush1.msra.mxu0 0.0
      %429 = vmatprep.subr.mxu0 0.0
      %430 = vmatpush1.msra.mxu0 0.0
      %431 = vmatprep.subr.mxu0 0.0
      %432 = vmatpush1.msra.mxu0 0.0
      %433 = vmatprep.subr.mxu0 0.0
      %434 = vmatpush1.msra.mxu0 0.0
      %435 = vmatprep.subr.mxu0 0.0
      %436 = vmatpush1.msra.mxu0 0.0
      %437 = vmatprep.subr.mxu0 0.0
      %438 = vmatpush1.msra.mxu0 0.0
      %439 = vmatprep.subr.mxu0 0.0
      %440 = vmatpush1.msra.mxu0 0.0
      %441 = vmatprep.subr.mxu0 0.0
      %442 = vmatpush1.msra.mxu0 0.0
      %443 = vmatprep.subr.mxu0 0.0
      %444 = vmatpush1.msra.mxu0 0.0
      %445 = vmatprep.subr.mxu0 0.0
      %446 = vmatpush1.msra.mxu0 0.0
      %447 = vmatprep.subr.mxu0 0.0
      %448 = vmatpush1.msra.mxu0 0.0
      %449 = vmatprep.subr.mxu0 0.0
      %450 = vmatpush1.msra.mxu0 0.0
      %451 = vmatprep.subr.mxu0 0.0
      %452 = vmatpush1.msra.mxu0 0.0
      %453 = vmatprep.subr.mxu0 0.0
      %454 = vmatpush1.msra.mxu0 0.0
      %455 = vmatprep.subr.mxu0 0.0
      %456 = vmatpush1.msra.mxu0 0.0
      %457 = vmatprep.mubr.f32.mxu0 0.0
      %458 = vmatmul.mubr.f32.gmra.mrb[0].mxu0 %v346
      %v459 = vpop.f32.mrb[0].mxu0
      %v460 = vadd.f32 0.0, %v459
      %v461 = vpop.f32.mrb[0].mxu0
      %462 = vmatprep.mubr.f32.mxu0 0.0
      %463 = vmatmul.mubr.f32.gmra.mrb[0].mxu0 %v349
      %v464 = vpop.f32.mrb[0].mxu0
      %v465 = vadd.f32 0.0, %v464
      %v466 = vpop.f32.mrb[0].mxu0
      %467 = vmatprep.mubr.f32.mxu0 0.0
      %468 = vmatmul.mubr.f32.gmra.mrb[0].mxu0 %v352
      %v469 = vpop.f32.mrb[0].mxu0
      %v470 = vadd.f32 0.0, %v469
      %v471 = vpop.f32.mrb[0].mxu0
      %472 = vmatprep.mubr.f32.mxu0 0.0
      %473 = vmatmul.mubr.f32.gmra.mrb[0].mxu0 %v355
      %v474 = vpop.f32.mrb[0].mxu0
      %v475 = vadd.f32 0.0, %v474
      %v476 = vpop.f32.mrb[0].mxu0
      %477 = vmatprep.mubr.f32.mxu0 0.0
      %478 = vmatmul.mubr.f32.gmra.mrb[0].mxu0 %v358
      %v479 = vpop.f32.mrb[0].mxu0
      %v480 = vadd.f32 0.0, %v479
      %v481 = vpop.f32.mrb[0].mxu0
      %482 = vmatprep.mubr.f32.mxu0 0.0
      %483 = vmatmul.mubr.f32.gmra.mrb[0].mxu0 %v361
      %v484 = vpop.f32.mrb[0].mxu0
      %v485 = vadd.f32 0.0, %v484
      %v486 = vpop.f32.mrb[0].mxu0
      %487 = vmatprep.mubr.f32.mxu0 0.0
      %488 = vmatmul.mubr.f32.gmra.mrb[0].mxu0 %v364
      %v489 = vpop.f32.mrb[0].mxu0
      %v490 = vadd.f32 0.0, %v489
      %v491 = vpop.f32.mrb[0].mxu0
      %492 = vmatprep.mubr.f32.mxu0 0.0
      %493 = vmatmul.mubr.f32.gmra.mrb[0].mxu0 %v367
      %v494 = vpop.f32.mrb[0].mxu0
      %v495 = vadd.f32 0.0, %v494
      %v496 = vpop.f32.mrb[0].mxu0
      %497 = vmatprep.mubr.f32.mxu0 0.0
      %498 = vmatmul.mubr.f32.gmra.mrb[0].mxu0 %v370
      %v499 = vpop.f32.mrb[0].mxu0
      %v500 = vadd.f32 0.0, %v499
      %v501 = vpop.f32.mrb[0].mxu0
      %502 = vmatprep.mubr.f32.mxu0 0.0
      %503 = vmatmul.mubr.f32.gmra.mrb[0].mxu0 %v373
      %v504 = vpop.f32.mrb[0].mxu0
      %v505 = vadd.f32 0.0, %v504
      %v506 = vpop.f32.mrb[0].mxu0
      %507 = vmatprep.mubr.f32.mxu0 0.0
      %508 = vmatmul.mubr.f32.gmra.mrb[0].mxu0 %v376
      %v509 = vpop.f32.mrb[0].mxu0
      %v510 = vadd.f32 0.0, %v509
      %v511 = vpop.f32.mrb[0].mxu0
      %512 = vmatprep.mubr.f32.mxu0 0.0
      %513 = vmatmul.mubr.f32.gmra.mrb[0].mxu0 %v379
      %v514 = vpop.f32.mrb[0].mxu0
      %v515 = vadd.f32 0.0, %v514
      %v516 = vpop.f32.mrb[0].mxu0
      %517 = vmatprep.mubr.f32.mxu0 0.0
      %518 = vmatmul.mubr.f32.gmra.mrb[0].mxu0 %v382
      %v519 = vpop.f32.mrb[0].mxu0
      %v520 = vadd.f32 0.0, %v519
      %v521 = vpop.f32.mrb[0].mxu0
      %522 = vmatprep.mubr.f32.mxu0 0.0
      %523 = vmatmul.mubr.f32.gmra.mrb[0].mxu0 %v385
      %v524 = vpop.f32.mrb[0].mxu0
      %v525 = vadd.f32 0.0, %v524
      %v526 = vpop.f32.mrb[0].mxu0
      %527 = vmatprep.mubr.f32.mxu0 0.0
      %528 = vmatmul.mubr.f32.gmra.mrb[0].mxu0 %v388
      %v529 = vpop.f32.mrb[0].mxu0
      %v530 = vadd.f32 0.0, %v529
      %v531 = vpop.f32.mrb[0].mxu0
      %532 = vmatprep.mubr.f32.mxu0 0.0
      %533 = vmatmul.mubr.f32.gmra.mrb[0].mxu0 %v391
      %v534 = vpop.f32.mrb[0].mxu0
      %v535 = vadd.f32 0.0, %v534
      %v536 = vpop.f32.mrb[0].mxu0
      %537 = vdwg.mxu0
      %539 = vset.pattern.permute.xlu0 32
      %540 = vperm.xlu0 %539, %v460
      %v541 = vpop.permute.xlu0 %540
      %544 = vset.pattern.permute.xlu0 32
      %545 = vperm.xlu0 %544, %v465
      %v546 = vpop.permute.xlu0 %545
      %549 = vset.pattern.permute.xlu0 32
      %550 = vperm.xlu0 %549, %v470
      %v551 = vpop.permute.xlu0 %550
      %554 = vset.pattern.permute.xlu0 32
      %555 = vperm.xlu0 %554, %v475
      %v556 = vpop.permute.xlu0 %555
      %559 = vset.pattern.permute.xlu0 32
      %560 = vperm.xlu0 %559, %v480
      %v561 = vpop.permute.xlu0 %560
      %564 = vset.pattern.permute.xlu0 32
      %565 = vperm.xlu0 %564, %v485
      %v566 = vpop.permute.xlu0 %565
      %569 = vset.pattern.permute.xlu0 32
      %570 = vperm.xlu0 %569, %v490
      %v571 = vpop.permute.xlu0 %570
      %574 = vset.pattern.permute.xlu0 32
      %575 = vperm.xlu0 %574, %v495
      %v576 = vpop.permute.xlu0 %575
      %579 = vset.pattern.permute.xlu0 32
      %580 = vperm.xlu0 %579, %v500
      %v581 = vpop.permute.xlu0 %580
      %584 = vset.pattern.permute.xlu0 32
      %585 = vperm.xlu0 %584, %v505
      %v586 = vpop.permute.xlu0 %585
      %589 = vset.pattern.permute.xlu0 32
      %590 = vperm.xlu0 %589, %v510
      %v591 = vpop.permute.xlu0 %590
      %594 = vset.pattern.permute.xlu0 32
      %595 = vperm.xlu0 %594, %v515
      %v596 = vpop.permute.xlu0 %595
      %599 = vset.pattern.permute.xlu0 32
      %600 = vperm.xlu0 %599, %v520
      %v601 = vpop.permute.xlu0 %600
      %604 = vset.pattern.permute.xlu0 32
      %605 = vperm.xlu0 %604, %v525
      %v606 = vpop.permute.xlu0 %605
      %609 = vset.pattern.permute.xlu0 32
      %610 = vperm.xlu0 %609, %v530
      %v611 = vpop.permute.xlu0 %610
      %614 = vset.pattern.permute.xlu0 32
      %615 = vperm.xlu0 %614, %v535
      %v616 = vpop.permute.xlu0 %615
      %618 = vset.pattern.permute.xlu0 33
      %619 = vperm.xlu0 %618, %v460
      %v620 = vpop.permute.xlu0 %619
      %621 = vset.pattern.permute.xlu0 33
      %622 = vperm.xlu0 %621, %v465
      %v623 = vpop.permute.xlu0 %622
      %624 = vset.pattern.permute.xlu0 33
      %625 = vperm.xlu0 %624, %v470
      %v626 = vpop.permute.xlu0 %625
      %627 = vset.pattern.permute.xlu0 33
      %628 = vperm.xlu0 %627, %v475
      %v629 = vpop.permute.xlu0 %628
      %630 = vset.pattern.permute.xlu0 33
      %631 = vperm.xlu0 %630, %v480
      %v632 = vpop.permute.xlu0 %631
      %633 = vset.pattern.permute.xlu0 33
      %634 = vperm.xlu0 %633, %v485
      %v635 = vpop.permute.xlu0 %634
      %636 = vset.pattern.permute.xlu0 33
      %637 = vperm.xlu0 %636, %v490
      %v638 = vpop.permute.xlu0 %637
      %639 = vset.pattern.permute.xlu0 33
      %640 = vperm.xlu0 %639, %v495
      %v641 = vpop.permute.xlu0 %640
      %642 = vset.pattern.permute.xlu0 33
      %643 = vperm.xlu0 %642, %v500
      %v644 = vpop.permute.xlu0 %643
      %645 = vset.pattern.permute.xlu0 33
      %646 = vperm.xlu0 %645, %v505
      %v647 = vpop.permute.xlu0 %646
      %648 = vset.pattern.permute.xlu0 33
      %649 = vperm.xlu0 %648, %v510
      %v650 = vpop.permute.xlu0 %649
      %651 = vset.pattern.permute.xlu0 33
      %652 = vperm.xlu0 %651, %v515
      %v653 = vpop.permute.xlu0 %652
      %654 = vset.pattern.permute.xlu0 33
      %655 = vperm.xlu0 %654, %v520
      %v656 = vpop.permute.xlu0 %655
      %657 = vset.pattern.permute.xlu0 33
      %658 = vperm.xlu0 %657, %v525
      %v659 = vpop.permute.xlu0 %658
      %660 = vset.pattern.permute.xlu0 33
      %661 = vperm.xlu0 %660, %v530
      %v662 = vpop.permute.xlu0 %661
      %663 = vset.pattern.permute.xlu0 33
      %664 = vperm.xlu0 %663, %v535
      %v665 = vpop.permute.xlu0 %664
      %v666 = vlaneseq
      %v667 = vand.u32 %v666, 127
      %v668 = vlaneseq
      %v669 = vshrl.u32 %v668, 7
      %v670 = vsub.s32 %v667, %v669
      %v671 = vrot.slane %v620, %v670
      %v672 = vadd.s32 %v667, 4294967288
      %v673 = vlaneseq
      %v674 = vshrl.u32 %v673, 7
      %v675 = vsub.s32 %v672, %v674
      %v676 = vrot.slane %v623, %v675
      %vm677 = vcmask 130112
      %v678 = vsel %vm677, %v676, %v671
      %v679 = vlaneseq
      %v680 = vshrl.u32 %v679, 7
      %v681 = vsub.s32 %v667, %v680
      %v682 = vrot.slane %v626, %v681
      %v683 = vlaneseq
      %v684 = vshrl.u32 %v683, 7
      %v685 = vsub.s32 %v672, %v684
      %v686 = vrot.slane %v629, %v685
      %v687 = vsel %vm677, %v686, %v682
      %v688 = vlaneseq
      %v689 = vshrl.u32 %v688, 7
      %v690 = vsub.s32 %v667, %v689
      %v691 = vrot.slane %v632, %v690
      %v692 = vlaneseq
      %v693 = vshrl.u32 %v692, 7
      %v694 = vsub.s32 %v672, %v693
      %v695 = vrot.slane %v635, %v694
      %v696 = vsel %vm677, %v695, %v691
      %v697 = vlaneseq
      %v698 = vshrl.u32 %v697, 7
      %v699 = vsub.s32 %v667, %v698
      %v700 = vrot.slane %v638, %v699
      %v701 = vlaneseq
      %v702 = vshrl.u32 %v701, 7
      %v703 = vsub.s32 %v672, %v702
      %v704 = vrot.slane %v641, %v703
      %v705 = vsel %vm677, %v704, %v700
      %v706 = vlaneseq
      %v707 = vshrl.u32 %v706, 7
      %v708 = vsub.s32 %v667, %v707
      %v709 = vrot.slane %v644, %v708
      %v710 = vlaneseq
      %v711 = vshrl.u32 %v710, 7
      %v712 = vsub.s32 %v672, %v711
      %v713 = vrot.slane %v647, %v712
      %v714 = vsel %vm677, %v713, %v709
      %v715 = vlaneseq
      %v716 = vshrl.u32 %v715, 7
      %v717 = vsub.s32 %v667, %v716
      %v718 = vrot.slane %v650, %v717
      %v719 = vlaneseq
      %v720 = vshrl.u32 %v719, 7
      %v721 = vsub.s32 %v672, %v720
      %v722 = vrot.slane %v653, %v721
      %v723 = vsel %vm677, %v722, %v718
      %v724 = vlaneseq
      %v725 = vshrl.u32 %v724, 7
      %v726 = vsub.s32 %v667, %v725
      %v727 = vrot.slane %v656, %v726
      %v728 = vlaneseq
      %v729 = vshrl.u32 %v728, 7
      %v730 = vsub.s32 %v672, %v729
      %v731 = vrot.slane %v659, %v730
      %v732 = vsel %vm677, %v731, %v727
      %v733 = vlaneseq
      %v734 = vshrl.u32 %v733, 7
      %v735 = vsub.s32 %v667, %v734
      %v736 = vrot.slane %v662, %v735
      %v737 = vlaneseq
      %v738 = vshrl.u32 %v737, 7
      %v739 = vsub.s32 %v672, %v738
      %v740 = vrot.slane %v665, %v739
      %v741 = vsel %vm677, %v740, %v736
      %vm742 = vcmask 1042434
      %v743 = vsel %vm742, %v678, %v678
      %vm744 = vcmask 1043459
      %v745 = vsel %vm744, %v678, %v743
      %vm746 = vcmask 1044484
      %v747 = vsel %vm746, %v678, %v745
      %vm748 = vcmask 1045509
      %v749 = vsel %vm748, %v678, %v747
      %vm750 = vcmask 1046534
      %v751 = vsel %vm750, %v678, %v749
      %vm752 = vcmask 1047559
      %v753 = vsel %vm752, %v678, %v751
      %v754 = vsel %vm742, %v687, %v687
      %v755 = vsel %vm744, %v687, %v754
      %v756 = vsel %vm746, %v687, %v755
      %v757 = vsel %vm748, %v687, %v756
      %v758 = vsel %vm750, %v687, %v757
      %v759 = vsel %vm752, %v687, %v758
      %v760 = vsel %vm742, %v696, %v696
      %v761 = vsel %vm744, %v696, %v760
      %v762 = vsel %vm746, %v696, %v761
      %v763 = vsel %vm748, %v696, %v762
      %v764 = vsel %vm750, %v696, %v763
      %v765 = vsel %vm752, %v696, %v764
      %v766 = vsel %vm742, %v705, %v705
      %v767 = vsel %vm744, %v705, %v766
      %v768 = vsel %vm746, %v705, %v767
      %v769 = vsel %vm748, %v705, %v768
      %v770 = vsel %vm750, %v705, %v769
      %v771 = vsel %vm752, %v705, %v770
      %v772 = vsel %vm742, %v714, %v714
      %v773 = vsel %vm744, %v714, %v772
      %v774 = vsel %vm746, %v714, %v773
      %v775 = vsel %vm748, %v714, %v774
      %v776 = vsel %vm750, %v714, %v775
      %v777 = vsel %vm752, %v714, %v776
      %v778 = vsel %vm742, %v723, %v723
      %v779 = vsel %vm744, %v723, %v778
      %v780 = vsel %vm746, %v723, %v779
      %v781 = vsel %vm748, %v723, %v780
      %v782 = vsel %vm750, %v723, %v781
      %v783 = vsel %vm752, %v723, %v782
      %v784 = vsel %vm742, %v732, %v732
      %v785 = vsel %vm744, %v732, %v784
      %v786 = vsel %vm746, %v732, %v785
      %v787 = vsel %vm748, %v732, %v786
      %v788 = vsel %vm750, %v732, %v787
      %v789 = vsel %vm752, %v732, %v788
      %v790 = vsel %vm742, %v741, %v741
      %v791 = vsel %vm744, %v741, %v790
      %v792 = vsel %vm746, %v741, %v791
      %v793 = vsel %vm748, %v741, %v792
      %v794 = vsel %vm750, %v741, %v793
      %v795 = vsel %vm752, %v741, %v794
      %v804 = vadd.f32 %v541, %v753
      %v805 = vadd.f32 %v546, %v753
      %v806 = vadd.f32 %v551, %v759
      %v807 = vadd.f32 %v556, %v759
      %v808 = vadd.f32 %v561, %v765
      %v809 = vadd.f32 %v566, %v765
      %v810 = vadd.f32 %v571, %v771
      %v811 = vadd.f32 %v576, %v771
      %v812 = vadd.f32 %v581, %v777
      %v813 = vadd.f32 %v586, %v777
      %v814 = vadd.f32 %v591, %v783
      %v815 = vadd.f32 %v596, %v783
      %v816 = vadd.f32 %v601, %v789
      %v817 = vadd.f32 %v606, %v789
      %v818 = vadd.f32 %v611, %v795
      %v819 = vadd.f32 %v616, %v795
      %vm820 = vcmp.gt.f32.partialorder %v804, 0.0
      %vm821 = vcmp.gt.f32.partialorder %v805, 0.0
      %vm822 = vcmp.gt.f32.partialorder %v806, 0.0
      %vm823 = vcmp.gt.f32.partialorder %v807, 0.0
      %vm824 = vcmp.gt.f32.partialorder %v808, 0.0
      %vm825 = vcmp.gt.f32.partialorder %v809, 0.0
      %vm826 = vcmp.gt.f32.partialorder %v810, 0.0
      %vm827 = vcmp.gt.f32.partialorder %v811, 0.0
      %vm828 = vcmp.gt.f32.partialorder %v812, 0.0
      %vm829 = vcmp.gt.f32.partialorder %v813, 0.0
      %vm830 = vcmp.gt.f32.partialorder %v814, 0.0
      %vm831 = vcmp.gt.f32.partialorder %v815, 0.0
      %vm832 = vcmp.gt.f32.partialorder %v816, 0.0
      %vm833 = vcmp.gt.f32.partialorder %v817, 0.0
      %vm834 = vcmp.gt.f32.partialorder %v818, 0.0
      %vm835 = vcmp.gt.f32.partialorder %v819, 0.0
      %v836 = vmul.f32 %v804, 0.2
      %v837 = vmul.f32 %v805, 0.2
      %v838 = vmul.f32 %v806, 0.2
      %v839 = vmul.f32 %v807, 0.2
      %v840 = vmul.f32 %v808, 0.2
      %v841 = vmul.f32 %v809, 0.2
      %v842 = vmul.f32 %v810, 0.2
      %v843 = vmul.f32 %v811, 0.2
      %v844 = vmul.f32 %v812, 0.2
      %v845 = vmul.f32 %v813, 0.2
      %v846 = vmul.f32 %v814, 0.2
      %v847 = vmul.f32 %v815, 0.2
      %v848 = vmul.f32 %v816, 0.2
      %v849 = vmul.f32 %v817, 0.2
      %v850 = vmul.f32 %v818, 0.2
      %v851 = vmul.f32 %v819, 0.2
      %v852 = vsel %vm820, %v804, %v836
      %v853 = vsel %vm821, %v805, %v837
      %v854 = vsel %vm822, %v806, %v838
      %v855 = vsel %vm823, %v807, %v839
      %v856 = vsel %vm824, %v808, %v840
      %v857 = vsel %vm825, %v809, %v841
      %v858 = vsel %vm826, %v810, %v842
      %v859 = vsel %vm827, %v811, %v843
      %v860 = vsel %vm828, %v812, %v844
      %v861 = vsel %vm829, %v813, %v845
      %v862 = vsel %vm830, %v814, %v846
      %v863 = vsel %vm831, %v815, %v847
      %v864 = vsel %vm832, %v816, %v848
      %v865 = vsel %vm833, %v817, %v849
      %v866 = vsel %vm834, %v818, %v850
      %v867 = vsel %vm835, %v819, %v851
      %v868 = vld [vmem:[%s320] sm:$0xf]
      %v869 = vld [vmem:[%s320 + $0x4] sm:$0xf]
      %v870 = vld [vmem:[%s320 + $0x8] sm:$0xf]
      %v871 = vld [vmem:[%s320 + $0xc] sm:$0xf]
      %v872 = vld [vmem:[%s320 + $0x10] sm:$0xf]
      %v873 = vld [vmem:[%s320 + $0x14] sm:$0xf]
      %v874 = vld [vmem:[%s320 + $0x18] sm:$0xf]
      %v875 = vld [vmem:[%s320 + $0x1c] sm:$0xf]
      %v876 = vld [vmem:[%s320 + $0x20] sm:$0xf]
      %v877 = vld [vmem:[%s320 + $0x24] sm:$0xf]
      %v878 = vld [vmem:[%s320 + $0x28] sm:$0xf]
      %v879 = vld [vmem:[%s320 + $0x2c] sm:$0xf]
      %v880 = vld [vmem:[%s320 + $0x30] sm:$0xf]
      %v881 = vld [vmem:[%s320 + $0x34] sm:$0xf]
      %v882 = vld [vmem:[%s320 + $0x38] sm:$0xf]
      %v883 = vld [vmem:[%s320 + $0x3c] sm:$0xf]
      %vm884 = vcmp.gt.bf16.partialorder %v868, 0
      %vm885 = vcmp.gt.bf16.partialorder %v869, 0
      %vm886 = vcmp.gt.bf16.partialorder %v870, 0
      %vm887 = vcmp.gt.bf16.partialorder %v871, 0
      %vm888 = vcmp.gt.bf16.partialorder %v872, 0
      %vm889 = vcmp.gt.bf16.partialorder %v873, 0
      %vm890 = vcmp.gt.bf16.partialorder %v874, 0
      %vm891 = vcmp.gt.bf16.partialorder %v875, 0
      %vm892 = vcmp.gt.bf16.partialorder %v876, 0
      %vm893 = vcmp.gt.bf16.partialorder %v877, 0
      %vm894 = vcmp.gt.bf16.partialorder %v878, 0
      %vm895 = vcmp.gt.bf16.partialorder %v879, 0
      %vm896 = vcmp.gt.bf16.partialorder %v880, 0
      %vm897 = vcmp.gt.bf16.partialorder %v881, 0
      %vm898 = vcmp.gt.bf16.partialorder %v882, 0
      %vm899 = vcmp.gt.bf16.partialorder %v883, 0
      %v900 = vsel %vm884, 65537, 0
      %v901 = vsel %vm885, 65537, 0
      %v902 = vsel %vm886, 65537, 0
      %v903 = vsel %vm887, 65537, 0
      %v904 = vsel %vm888, 65537, 0
      %v905 = vsel %vm889, 65537, 0
      %v906 = vsel %vm890, 65537, 0
      %v907 = vsel %vm891, 65537, 0
      %v908 = vsel %vm892, 65537, 0
      %v909 = vsel %vm893, 65537, 0
      %v910 = vsel %vm894, 65537, 0
      %v911 = vsel %vm895, 65537, 0
      %v912 = vsel %vm896, 65537, 0
      %v913 = vsel %vm897, 65537, 0
      %v914 = vsel %vm898, 65537, 0
      %v915 = vsel %vm899, 65537, 0
      %v916 = vunpack.c.l.b16 %v900
      %v917 = vunpack.c.l.b16 %v901
      %v918 = vunpack.c.l.b16 %v902
      %v919 = vunpack.c.l.b16 %v903
      %v920 = vunpack.c.l.b16 %v904
      %v921 = vunpack.c.l.b16 %v905
      %v922 = vunpack.c.l.b16 %v906
      %v923 = vunpack.c.l.b16 %v907
      %v924 = vunpack.c.l.b16 %v908
      %v925 = vunpack.c.l.b16 %v909
      %v926 = vunpack.c.l.b16 %v910
      %v927 = vunpack.c.l.b16 %v911
      %v928 = vunpack.c.l.b16 %v912
      %v929 = vunpack.c.l.b16 %v913
      %v930 = vunpack.c.l.b16 %v914
      %v931 = vunpack.c.l.b16 %v915
      %vm932 = vcmp.ne.s32.totalorder %v916, 0
      %vm933 = vcmp.ne.s32.totalorder %v917, 0
      %vm934 = vcmp.ne.s32.totalorder %v918, 0
      %vm935 = vcmp.ne.s32.totalorder %v919, 0
      %vm936 = vcmp.ne.s32.totalorder %v920, 0
      %vm937 = vcmp.ne.s32.totalorder %v921, 0
      %vm938 = vcmp.ne.s32.totalorder %v922, 0
      %vm939 = vcmp.ne.s32.totalorder %v923, 0
      %vm940 = vcmp.ne.s32.totalorder %v924, 0
      %vm941 = vcmp.ne.s32.totalorder %v925, 0
      %vm942 = vcmp.ne.s32.totalorder %v926, 0
      %vm943 = vcmp.ne.s32.totalorder %v927, 0
      %vm944 = vcmp.ne.s32.totalorder %v928, 0
      %vm945 = vcmp.ne.s32.totalorder %v929, 0
      %vm946 = vcmp.ne.s32.totalorder %v930, 0
      %vm947 = vcmp.ne.s32.totalorder %v931, 0
      %v948 = vsel %vm932, %v852, -1e+30
      %v949 = vsel %vm933, %v853, -1e+30
      %v950 = vsel %vm934, %v854, -1e+30
      %v951 = vsel %vm935, %v855, -1e+30
      %v952 = vsel %vm936, %v856, -1e+30
      %v953 = vsel %vm937, %v857, -1e+30
      %v954 = vsel %vm938, %v858, -1e+30
      %v955 = vsel %vm939, %v859, -1e+30
      %v956 = vsel %vm940, %v860, -1e+30
      %v957 = vsel %vm941, %v861, -1e+30
      %v958 = vsel %vm942, %v862, -1e+30
      %v959 = vsel %vm943, %v863, -1e+30
      %v960 = vsel %vm944, %v864, -1e+30
      %v961 = vsel %vm945, %v865, -1e+30
      %v962 = vsel %vm946, %v866, -1e+30
      %v963 = vsel %vm947, %v867, -1e+30
      %vm964 = vcmask 130048
      %v965 = vsel %vm964, %v948, -inf
      %966 = vmax.xlane.f32.xlu0 %v965
      %v967 = vpop.xlane.xlu0 %966
      %v968 = vsel %vm964, %v949, -inf
      %969 = vmax.xlane.f32.xlu0 %v968
      %v970 = vpop.xlane.xlu0 %969
      %v971 = vsel %vm964, %v950, -inf
      %972 = vmax.xlane.f32.xlu0 %v971
      %v973 = vpop.xlane.xlu0 %972
      %v974 = vsel %vm964, %v951, -inf
      %975 = vmax.xlane.f32.xlu0 %v974
      %v976 = vpop.xlane.xlu0 %975
      %v977 = vsel %vm964, %v952, -inf
      %978 = vmax.xlane.f32.xlu0 %v977
      %v979 = vpop.xlane.xlu0 %978
      %v980 = vsel %vm964, %v953, -inf
      %981 = vmax.xlane.f32.xlu0 %v980
      %v982 = vpop.xlane.xlu0 %981
      %v983 = vsel %vm964, %v954, -inf
      %984 = vmax.xlane.f32.xlu0 %v983
      %v985 = vpop.xlane.xlu0 %984
      %v986 = vsel %vm964, %v955, -inf
      %987 = vmax.xlane.f32.xlu0 %v986
      %v988 = vpop.xlane.xlu0 %987
      %v989 = vsel %vm964, %v956, -inf
      %990 = vmax.xlane.f32.xlu0 %v989
      %v991 = vpop.xlane.xlu0 %990
      %v992 = vsel %vm964, %v957, -inf
      %993 = vmax.xlane.f32.xlu0 %v992
      %v994 = vpop.xlane.xlu0 %993
      %v995 = vsel %vm964, %v958, -inf
      %996 = vmax.xlane.f32.xlu0 %v995
      %v997 = vpop.xlane.xlu0 %996
      %v998 = vsel %vm964, %v959, -inf
      %999 = vmax.xlane.f32.xlu0 %v998
      %v1000 = vpop.xlane.xlu0 %999
      %v1001 = vsel %vm964, %v960, -inf
      %1002 = vmax.xlane.f32.xlu0 %v1001
      %v1003 = vpop.xlane.xlu0 %1002
      %v1004 = vsel %vm964, %v961, -inf
      %1005 = vmax.xlane.f32.xlu0 %v1004
      %v1006 = vpop.xlane.xlu0 %1005
      %v1007 = vsel %vm964, %v962, -inf
      %1008 = vmax.xlane.f32.xlu0 %v1007
      %v1009 = vpop.xlane.xlu0 %1008
      %v1010 = vsel %vm964, %v963, -inf
      %1011 = vmax.xlane.f32.xlu0 %v1010
      %v1012 = vpop.xlane.xlu0 %1011
      %v1013 = vsub.f32 %v948, %v967
      %v1014 = vsub.f32 %v949, %v970
      %v1015 = vsub.f32 %v950, %v973
      %v1016 = vsub.f32 %v951, %v976
      %v1017 = vsub.f32 %v952, %v979
      %v1018 = vsub.f32 %v953, %v982
      %v1019 = vsub.f32 %v954, %v985
      %v1020 = vsub.f32 %v955, %v988
      %v1021 = vsub.f32 %v956, %v991
      %v1022 = vsub.f32 %v957, %v994
      %v1023 = vsub.f32 %v958, %v997
      %v1024 = vsub.f32 %v959, %v1000
      %v1025 = vsub.f32 %v960, %v1003
      %v1026 = vsub.f32 %v961, %v1006
      %v1027 = vsub.f32 %v962, %v1009
      %v1028 = vsub.f32 %v963, %v1012
      %v1029 = vmul.f32 %v1013, 1.442695
      %v1030 = vpow.pop %v1029
      %v1031 = vmul.f32 %v1014, 1.442695
      %v1032 = vpow.pop %v1031
      %v1033 = vmul.f32 %v1015, 1.442695
      %v1034 = vpow.pop %v1033
      %v1035 = vmul.f32 %v1016, 1.442695
      %v1036 = vpow.pop %v1035
      %v1037 = vmul.f32 %v1017, 1.442695
      %v1038 = vpow.pop %v1037
      %v1039 = vmul.f32 %v1018, 1.442695
      %v1040 = vpow.pop %v1039
      %v1041 = vmul.f32 %v1019, 1.442695
      %v1042 = vpow.pop %v1041
      %v1043 = vmul.f32 %v1020, 1.442695
      %v1044 = vpow.pop %v1043
      %v1045 = vmul.f32 %v1021, 1.442695
      %v1046 = vpow.pop %v1045
      %v1047 = vmul.f32 %v1022, 1.442695
      %v1048 = vpow.pop %v1047
      %v1049 = vmul.f32 %v1023, 1.442695
      %v1050 = vpow.pop %v1049
      %v1051 = vmul.f32 %v1024, 1.442695
      %v1052 = vpow.pop %v1051
      %v1053 = vmul.f32 %v1025, 1.442695
      %v1054 = vpow.pop %v1053
      %v1055 = vmul.f32 %v1026, 1.442695
      %v1056 = vpow.pop %v1055
      %v1057 = vmul.f32 %v1027, 1.442695
      %v1058 = vpow.pop %v1057
      %v1059 = vmul.f32 %v1028, 1.442695
      %v1060 = vpow.pop %v1059
      %v1061 = vsel %vm964, %v1030, 0.0
      %1062 = vadd.xlane.f32.xlu0 %v1061
      %v1063 = vpop.xlane.xlu0 %1062
      %v1064 = vsel %vm964, %v1032, 0.0
      %1065 = vadd.xlane.f32.xlu0 %v1064
      %v1066 = vpop.xlane.xlu0 %1065
      %v1067 = vsel %vm964, %v1034, 0.0
      %1068 = vadd.xlane.f32.xlu0 %v1067
      %v1069 = vpop.xlane.xlu0 %1068
      %v1070 = vsel %vm964, %v1036, 0.0
      %1071 = vadd.xlane.f32.xlu0 %v1070
      %v1072 = vpop.xlane.xlu0 %1071
      %v1073 = vsel %vm964, %v1038, 0.0
      %1074 = vadd.xlane.f32.xlu0 %v1073
      %v1075 = vpop.xlane.xlu0 %1074
      %v1076 = vsel %vm964, %v1040, 0.0
      %1077 = vadd.xlane.f32.xlu0 %v1076
      %v1078 = vpop.xlane.xlu0 %1077
      %v1079 = vsel %vm964, %v1042, 0.0
      %1080 = vadd.xlane.f32.xlu0 %v1079
      %v1081 = vpop.xlane.xlu0 %1080
      %v1082 = vsel %vm964, %v1044, 0.0
      %1083 = vadd.xlane.f32.xlu0 %v1082
      %v1084 = vpop.xlane.xlu0 %1083
      %v1085 = vsel %vm964, %v1046, 0.0
      %1086 = vadd.xlane.f32.xlu0 %v1085
      %v1087 = vpop.xlane.xlu0 %1086
      %v1088 = vsel %vm964, %v1048, 0.0
      %1089 = vadd.xlane.f32.xlu0 %v1088
      %v1090 = vpop.xlane.xlu0 %1089
      %v1091 = vsel %vm964, %v1050, 0.0
      %1092 = vadd.xlane.f32.xlu0 %v1091
      %v1093 = vpop.xlane.xlu0 %1092
      %v1094 = vsel %vm964, %v1052, 0.0
      %1095 = vadd.xlane.f32.xlu0 %v1094
      %v1096 = vpop.xlane.xlu0 %1095
      %v1097 = vsel %vm964, %v1054, 0.0
      %1098 = vadd.xlane.f32.xlu0 %v1097
      %v1099 = vpop.xlane.xlu0 %1098
      %v1100 = vsel %vm964, %v1056, 0.0
      %1101 = vadd.xlane.f32.xlu0 %v1100
      %v1102 = vpop.xlane.xlu0 %1101
      %v1103 = vsel %vm964, %v1058, 0.0
      %1104 = vadd.xlane.f32.xlu0 %v1103
      %v1105 = vpop.xlane.xlu0 %1104
      %v1106 = vsel %vm964, %v1060, 0.0
      %1107 = vadd.xlane.f32.xlu0 %v1106
      %v1108 = vpop.xlane.xlu0 %1107
      %v1109 = vrcp.pop %v1063
      %v1110 = vrcp.pop %v1066
      %v1111 = vrcp.pop %v1069
      %v1112 = vrcp.pop %v1072
      %v1113 = vrcp.pop %v1075
      %v1114 = vrcp.pop %v1078
      %v1115 = vrcp.pop %v1081
      %v1116 = vrcp.pop %v1084
      %v1117 = vrcp.pop %v1087
      %v1118 = vrcp.pop %v1090
      %v1119 = vrcp.pop %v1093
      %v1120 = vrcp.pop %v1096
      %v1121 = vrcp.pop %v1099
      %v1122 = vrcp.pop %v1102
      %v1123 = vrcp.pop %v1105
      %v1124 = vrcp.pop %v1108
      %v1125 = vmul.f32 %v1030, %v1109
      %v1126 = vmul.f32 %v1032, %v1110
      %v1127 = vmul.f32 %v1034, %v1111
      %v1128 = vmul.f32 %v1036, %v1112
      %v1129 = vmul.f32 %v1038, %v1113
      %v1130 = vmul.f32 %v1040, %v1114
      %v1131 = vmul.f32 %v1042, %v1115
      %v1132 = vmul.f32 %v1044, %v1116
      %v1133 = vmul.f32 %v1046, %v1117
      %v1134 = vmul.f32 %v1048, %v1118
      %v1135 = vmul.f32 %v1050, %v1119
      %v1136 = vmul.f32 %v1052, %v1120
      %v1137 = vmul.f32 %v1054, %v1121
      %v1138 = vmul.f32 %v1056, %v1122
      %v1139 = vmul.f32 %v1058, %v1123
      %v1140 = vmul.f32 %v1060, %v1124
      %v1142 = vsel %vm964, %v1125, 0
      %v1145 = vsel %vm964, %v1126, 0
      %1147 = vmatprep.subr.mxu0 0.0
      %1148 = vmatpush1.msra.mxu0 %v460
      %1149 = vmatprep.subr.mxu0 0.0
      %1150 = vmatpush1.msra.mxu0 %v465
      %1151 = vmatprep.subr.mxu0 0.0
      %1152 = vmatpush1.msra.mxu0 0.0
      %1153 = vmatprep.subr.mxu0 0.0
      %1154 = vmatpush1.msra.mxu0 0.0
      %1155 = vmatprep.subr.mxu0 0.0
      %1156 = vmatpush1.msra.mxu0 0.0
      %1157 = vmatprep.subr.mxu0 0.0
      %1158 = vmatpush1.msra.mxu0 0.0
      %1159 = vmatprep.subr.mxu0 0.0
      %1160 = vmatpush1.msra.mxu0 0.0
      %1161 = vmatprep.subr.mxu0 0.0
      %1162 = vmatpush1.msra.mxu0 0.0
      %1163 = vmatprep.subr.mxu0 0.0
      %1164 = vmatpush1.msra.mxu0 0.0
      %1165 = vmatprep.subr.mxu0 0.0
      %1166 = vmatpush1.msra.mxu0 0.0
      %1167 = vmatprep.subr.mxu0 0.0
      %1168 = vmatpush1.msra.mxu0 0.0
      %1169 = vmatprep.subr.mxu0 0.0
      %1170 = vmatpush1.msra.mxu0 0.0
      %1171 = vmatprep.subr.mxu0 0.0
      %1172 = vmatpush1.msra.mxu0 0.0
      %1173 = vmatprep.subr.mxu0 0.0
      %1174 = vmatpush1.msra.mxu0 0.0
      %1175 = vmatprep.subr.mxu0 0.0
      %1176 = vmatpush1.msra.mxu0 0.0
      %1177 = vmatprep.subr.mxu0 0.0
      %1178 = vmatpush1.msra.mxu0 0.0
      %1179 = vmatprep.subr.mxu0 0.0
      %1180 = vmatpush1.msra.mxu0 0.0
      %1181 = vmatprep.subr.mxu0 0.0
      %1182 = vmatpush1.msra.mxu0 0.0
      %1183 = vmatprep.subr.mxu0 0.0
      %1184 = vmatpush1.msra.mxu0 0.0
      %1185 = vmatprep.subr.mxu0 0.0
      %1186 = vmatpush1.msra.mxu0 0.0
      %1187 = vmatprep.subr.mxu0 0.0
      %1188 = vmatpush1.msra.mxu0 0.0
      %1189 = vmatprep.subr.mxu0 0.0
      %1190 = vmatpush1.msra.mxu0 0.0
      %1191 = vmatprep.subr.mxu0 0.0
      %1192 = vmatpush1.msra.mxu0 0.0
      %1193 = vmatprep.subr.mxu0 0.0
      %1194 = vmatpush1.msra.mxu0 0.0
      %1195 = vmatprep.subr.mxu0 0.0
      %1196 = vmatpush1.msra.mxu0 0.0
      %1197 = vmatprep.subr.mxu0 0.0
      %1198 = vmatpush1.msra.mxu0 0.0
      %1199 = vmatprep.subr.mxu0 0.0
      %1200 = vmatpush1.msra.mxu0 0.0
      %1201 = vmatprep.subr.mxu0 0.0
      %1202 = vmatpush1.msra.mxu0 0.0
      %1203 = vmatprep.subr.mxu0 0.0
      %1204 = vmatpush1.msra.mxu0 0.0
      %1205 = vmatprep.subr.mxu0 0.0
      %1206 = vmatpush1.msra.mxu0 0.0
      %1207 = vmatprep.subr.mxu0 0.0
      %1208 = vmatpush1.msra.mxu0 0.0
      %1209 = vmatprep.subr.mxu0 0.0
      %1210 = vmatpush1.msra.mxu0 0.0
      %1211 = vmatprep.mubr.f32.mxu0 0.0
      %1212 = vmatmul.mubr.f32.gmra.mrb[0].mxu0 %v1142
      %v1213 = vpop.f32.mrb[0].mxu0
      %v1214 = vadd.f32 0.0, %v1213
      %v1215 = vpop.f32.mrb[0].mxu0
      %1216 = vmatprep.mubr.f32.mxu0 0.0
      %1217 = vmatmul.mubr.f32.gmra.mrb[0].mxu0 %v1145
      %v1218 = vpop.f32.mrb[0].mxu0
      %v1219 = vadd.f32 0.0, %v1218
      %v1220 = vpop.f32.mrb[0].mxu0
      %1221 = vdwg.mxu0
      %v1223 = vsel %vm964, %v1127, 0
      %v1226 = vsel %vm964, %v1128, 0
      %1228 = vmatprep.subr.mxu0 0.0
      %1229 = vmatpush1.msra.mxu0 %v470
      %1230 = vmatprep.subr.mxu0 0.0
      %1231 = vmatpush1.msra.mxu0 %v475
      %1232 = vmatprep.subr.mxu0 0.0
      %1233 = vmatpush1.msra.mxu0 0.0
      %1234 = vmatprep.subr.mxu0 0.0
      %1235 = vmatpush1.msra.mxu0 0.0
      %1236 = vmatprep.subr.mxu0 0.0
      %1237 = vmatpush1.msra.mxu0 0.0
      %1238 = vmatprep.subr.mxu0 0.0
      %1239 = vmatpush1.msra.mxu0 0.0
      %1240 = vmatprep.subr.mxu0 0.0
      %1241 = vmatpush1.msra.mxu0 0.0
      %1242 = vmatprep.subr.mxu0 0.0
      %1243 = vmatpush1.msra.mxu0 0.0
      %1244 = vmatprep.subr.mxu0 0.0
      %1245 = vmatpush1.msra.mxu0 0.0
      %1246 = vmatprep.subr.mxu0 0.0
      %1247 = vmatpush1.msra.mxu0 0.0
      %1248 = vmatprep.subr.mxu0 0.0
      %1249 = vmatpush1.msra.mxu0 0.0
      %1250 = vmatprep.subr.mxu0 0.0
      %1251 = vmatpush1.msra.mxu0 0.0
      %1252 = vmatprep.subr.mxu0 0.0
      %1253 = vmatpush1.msra.mxu0 0.0
      %1254 = vmatprep.subr.mxu0 0.0
      %1255 = vmatpush1.msra.mxu0 0.0
      %1256 = vmatprep.subr.mxu0 0.0
      %1257 = vmatpush1.msra.mxu0 0.0
      %1258 = vmatprep.subr.mxu0 0.0
      %1259 = vmatpush1.msra.mxu0 0.0
      %1260 = vmatprep.subr.mxu0 0.0
      %1261 = vmatpush1.msra.mxu0 0.0
      %1262 = vmatprep.subr.mxu0 0.0
      %1263 = vmatpush1.msra.mxu0 0.0
      %1264 = vmatprep.subr.mxu0 0.0
      %1265 = vmatpush1.msra.mxu0 0.0
      %1266 = vmatprep.subr.mxu0 0.0
      %1267 = vmatpush1.msra.mxu0 0.0
      %1268 = vmatprep.subr.mxu0 0.0
      %1269 = vmatpush1.msra.mxu0 0.0
      %1270 = vmatprep.subr.mxu0 0.0
      %1271 = vmatpush1.msra.mxu0 0.0
      %1272 = vmatprep.subr.mxu0 0.0
      %1273 = vmatpush1.msra.mxu0 0.0
      %1274 = vmatprep.subr.mxu0 0.0
      %1275 = vmatpush1.msra.mxu0 0.0
      %1276 = vmatprep.subr.mxu0 0.0
      %1277 = vmatpush1.msra.mxu0 0.0
      %1278 = vmatprep.subr.mxu0 0.0
      %1279 = vmatpush1.msra.mxu0 0.0
      %1280 = vmatprep.subr.mxu0 0.0
      %1281 = vmatpush1.msra.mxu0 0.0
      %1282 = vmatprep.subr.mxu0 0.0
      %1283 = vmatpush1.msra.mxu0 0.0
      %1284 = vmatprep.subr.mxu0 0.0
      %1285 = vmatpush1.msra.mxu0 0.0
      %1286 = vmatprep.subr.mxu0 0.0
      %1287 = vmatpush1.msra.mxu0 0.0
      %1288 = vmatprep.subr.mxu0 0.0
      %1289 = vmatpush1.msra.mxu0 0.0
      %1290 = vmatprep.subr.mxu0 0.0
      %1291 = vmatpush1.msra.mxu0 0.0
      %1292 = vmatprep.mubr.f32.mxu0 0.0
      %1293 = vmatmul.mubr.f32.gmra.mrb[0].mxu0 %v1223
      %v1294 = vpop.f32.mrb[0].mxu0
      %v1295 = vadd.f32 0.0, %v1294
      %v1296 = vpop.f32.mrb[0].mxu0
      %1297 = vmatprep.mubr.f32.mxu0 0.0
      %1298 = vmatmul.mubr.f32.gmra.mrb[0].mxu0 %v1226
      %v1299 = vpop.f32.mrb[0].mxu0
      %v1300 = vadd.f32 0.0, %v1299
      %v1301 = vpop.f32.mrb[0].mxu0
      %1302 = vdwg.mxu0
      %v1304 = vsel %vm964, %v1129, 0
      %v1307 = vsel %vm964, %v1130, 0
      %1309 = vmatprep.subr.mxu0 0.0
      %1310 = vmatpush1.msra.mxu0 %v480
      %1311 = vmatprep.subr.mxu0 0.0
      %1312 = vmatpush1.msra.mxu0 %v485
      %1313 = vmatprep.subr.mxu0 0.0
      %1314 = vmatpush1.msra.mxu0 0.0
      %1315 = vmatprep.subr.mxu0 0.0
      %1316 = vmatpush1.msra.mxu0 0.0
      %1317 = vmatprep.subr.mxu0 0.0
      %1318 = vmatpush1.msra.mxu0 0.0
      %1319 = vmatprep.subr.mxu0 0.0
      %1320 = vmatpush1.msra.mxu0 0.0
      %1321 = vmatprep.subr.mxu0 0.0
      %1322 = vmatpush1.msra.mxu0 0.0
      %1323 = vmatprep.subr.mxu0 0.0
      %1324 = vmatpush1.msra.mxu0 0.0
      %1325 = vmatprep.subr.mxu0 0.0
      %1326 = vmatpush1.msra.mxu0 0.0
      %1327 = vmatprep.subr.mxu0 0.0
      %1328 = vmatpush1.msra.mxu0 0.0
      %1329 = vmatprep.subr.mxu0 0.0
      %1330 = vmatpush1.msra.mxu0 0.0
      %1331 = vmatprep.subr.mxu0 0.0
      %1332 = vmatpush1.msra.mxu0 0.0
      %1333 = vmatprep.subr.mxu0 0.0
      %1334 = vmatpush1.msra.mxu0 0.0
      %1335 = vmatprep.subr.mxu0 0.0
      %1336 = vmatpush1.msra.mxu0 0.0
      %1337 = vmatprep.subr.mxu0 0.0
      %1338 = vmatpush1.msra.mxu0 0.0
      %1339 = vmatprep.subr.mxu0 0.0
      %1340 = vmatpush1.msra.mxu0 0.0
      %1341 = vmatprep.subr.mxu0 0.0
      %1342 = vmatpush1.msra.mxu0 0.0
      %1343 = vmatprep.subr.mxu0 0.0
      %1344 = vmatpush1.msra.mxu0 0.0
      %1345 = vmatprep.subr.mxu0 0.0
      %1346 = vmatpush1.msra.mxu0 0.0
      %1347 = vmatprep.subr.mxu0 0.0
      %1348 = vmatpush1.msra.mxu0 0.0
      %1349 = vmatprep.subr.mxu0 0.0
      %1350 = vmatpush1.msra.mxu0 0.0
      %1351 = vmatprep.subr.mxu0 0.0
      %1352 = vmatpush1.msra.mxu0 0.0
      %1353 = vmatprep.subr.mxu0 0.0
      %1354 = vmatpush1.msra.mxu0 0.0
      %1355 = vmatprep.subr.mxu0 0.0
      %1356 = vmatpush1.msra.mxu0 0.0
      %1357 = vmatprep.subr.mxu0 0.0
      %1358 = vmatpush1.msra.mxu0 0.0
      %1359 = vmatprep.subr.mxu0 0.0
      %1360 = vmatpush1.msra.mxu0 0.0
      %1361 = vmatprep.subr.mxu0 0.0
      %1362 = vmatpush1.msra.mxu0 0.0
      %1363 = vmatprep.subr.mxu0 0.0
      %1364 = vmatpush1.msra.mxu0 0.0
      %1365 = vmatprep.subr.mxu0 0.0
      %1366 = vmatpush1.msra.mxu0 0.0
      %1367 = vmatprep.subr.mxu0 0.0
      %1368 = vmatpush1.msra.mxu0 0.0
      %1369 = vmatprep.subr.mxu0 0.0
      %1370 = vmatpush1.msra.mxu0 0.0
      %1371 = vmatprep.subr.mxu0 0.0
      %1372 = vmatpush1.msra.mxu0 0.0
      %1373 = vmatprep.mubr.f32.mxu0 0.0
      %1374 = vmatmul.mubr.f32.gmra.mrb[0].mxu0 %v1304
      %v1375 = vpop.f32.mrb[0].mxu0
      %v1376 = vadd.f32 0.0, %v1375
      %v1377 = vpop.f32.mrb[0].mxu0
      %1378 = vmatprep.mubr.f32.mxu0 0.0
      %1379 = vmatmul.mubr.f32.gmra.mrb[0].mxu0 %v1307
      %v1380 = vpop.f32.mrb[0].mxu0
      %v1381 = vadd.f32 0.0, %v1380
      %v1382 = vpop.f32.mrb[0].mxu0
      %1383 = vdwg.mxu0
      %v1385 = vsel %vm964, %v1131, 0
      %v1388 = vsel %vm964, %v1132, 0
      %1390 = vmatprep.subr.mxu0 0.0
      %1391 = vmatpush1.msra.mxu0 %v490
      %1392 = vmatprep.subr.mxu0 0.0
      %1393 = vmatpush1.msra.mxu0 %v495
      %1394 = vmatprep.subr.mxu0 0.0
      %1395 = vmatpush1.msra.mxu0 0.0
      %1396 = vmatprep.subr.mxu0 0.0
      %1397 = vmatpush1.msra.mxu0 0.0
      %1398 = vmatprep.subr.mxu0 0.0
      %1399 = vmatpush1.msra.mxu0 0.0
      %1400 = vmatprep.subr.mxu0 0.0
      %1401 = vmatpush1.msra.mxu0 0.0
      %1402 = vmatprep.subr.mxu0 0.0
      %1403 = vmatpush1.msra.mxu0 0.0
      %1404 = vmatprep.subr.mxu0 0.0
      %1405 = vmatpush1.msra.mxu0 0.0
      %1406 = vmatprep.subr.mxu0 0.0
      %1407 = vmatpush1.msra.mxu0 0.0
      %1408 = vmatprep.subr.mxu0 0.0
      %1409 = vmatpush1.msra.mxu0 0.0
      %1410 = vmatprep.subr.mxu0 0.0
      %1411 = vmatpush1.msra.mxu0 0.0
      %1412 = vmatprep.subr.mxu0 0.0
      %1413 = vmatpush1.msra.mxu0 0.0
      %1414 = vmatprep.subr.mxu0 0.0
      %1415 = vmatpush1.msra.mxu0 0.0
      %1416 = vmatprep.subr.mxu0 0.0
      %1417 = vmatpush1.msra.mxu0 0.0
      %1418 = vmatprep.subr.mxu0 0.0
      %1419 = vmatpush1.msra.mxu0 0.0
      %1420 = vmatprep.subr.mxu0 0.0
      %1421 = vmatpush1.msra.mxu0 0.0
      %1422 = vmatprep.subr.mxu0 0.0
      %1423 = vmatpush1.msra.mxu0 0.0
      %1424 = vmatprep.subr.mxu0 0.0
      %1425 = vmatpush1.msra.mxu0 0.0
      %1426 = vmatprep.subr.mxu0 0.0
      %1427 = vmatpush1.msra.mxu0 0.0
      %1428 = vmatprep.subr.mxu0 0.0
      %1429 = vmatpush1.msra.mxu0 0.0
      %1430 = vmatprep.subr.mxu0 0.0
      %1431 = vmatpush1.msra.mxu0 0.0
      %1432 = vmatprep.subr.mxu0 0.0
      %1433 = vmatpush1.msra.mxu0 0.0
      %1434 = vmatprep.subr.mxu0 0.0
      %1435 = vmatpush1.msra.mxu0 0.0
      %1436 = vmatprep.subr.mxu0 0.0
      %1437 = vmatpush1.msra.mxu0 0.0
      %1438 = vmatprep.subr.mxu0 0.0
      %1439 = vmatpush1.msra.mxu0 0.0
      %1440 = vmatprep.subr.mxu0 0.0
      %1441 = vmatpush1.msra.mxu0 0.0
      %1442 = vmatprep.subr.mxu0 0.0
      %1443 = vmatpush1.msra.mxu0 0.0
      %1444 = vmatprep.subr.mxu0 0.0
      %1445 = vmatpush1.msra.mxu0 0.0
      %1446 = vmatprep.subr.mxu0 0.0
      %1447 = vmatpush1.msra.mxu0 0.0
      %1448 = vmatprep.subr.mxu0 0.0
      %1449 = vmatpush1.msra.mxu0 0.0
      %1450 = vmatprep.subr.mxu0 0.0
      %1451 = vmatpush1.msra.mxu0 0.0
      %1452 = vmatprep.subr.mxu0 0.0
      %1453 = vmatpush1.msra.mxu0 0.0
      %1454 = vmatprep.mubr.f32.mxu0 0.0
      %1455 = vmatmul.mubr.f32.gmra.mrb[0].mxu0 %v1385
      %v1456 = vpop.f32.mrb[0].mxu0
      %v1457 = vadd.f32 0.0, %v1456
      %v1458 = vpop.f32.mrb[0].mxu0
      %1459 = vmatprep.mubr.f32.mxu0 0.0
      %1460 = vmatmul.mubr.f32.gmra.mrb[0].mxu0 %v1388
      %v1461 = vpop.f32.mrb[0].mxu0
      %v1462 = vadd.f32 0.0, %v1461
      %v1463 = vpop.f32.mrb[0].mxu0
      %1464 = vdwg.mxu0
      %v1466 = vsel %vm964, %v1133, 0
      %v1469 = vsel %vm964, %v1134, 0
      %1471 = vmatprep.subr.mxu0 0.0
      %1472 = vmatpush1.msra.mxu0 %v500
      %1473 = vmatprep.subr.mxu0 0.0
      %1474 = vmatpush1.msra.mxu0 %v505
      %1475 = vmatprep.subr.mxu0 0.0
      %1476 = vmatpush1.msra.mxu0 0.0
      %1477 = vmatprep.subr.mxu0 0.0
      %1478 = vmatpush1.msra.mxu0 0.0
      %1479 = vmatprep.subr.mxu0 0.0
      %1480 = vmatpush1.msra.mxu0 0.0
      %1481 = vmatprep.subr.mxu0 0.0
      %1482 = vmatpush1.msra.mxu0 0.0
      %1483 = vmatprep.subr.mxu0 0.0
      %1484 = vmatpush1.msra.mxu0 0.0
      %1485 = vmatprep.subr.mxu0 0.0
      %1486 = vmatpush1.msra.mxu0 0.0
      %1487 = vmatprep.subr.mxu0 0.0
      %1488 = vmatpush1.msra.mxu0 0.0
      %1489 = vmatprep.subr.mxu0 0.0
      %1490 = vmatpush1.msra.mxu0 0.0
      %1491 = vmatprep.subr.mxu0 0.0
      %1492 = vmatpush1.msra.mxu0 0.0
      %1493 = vmatprep.subr.mxu0 0.0
      %1494 = vmatpush1.msra.mxu0 0.0
      %1495 = vmatprep.subr.mxu0 0.0
      %1496 = vmatpush1.msra.mxu0 0.0
      %1497 = vmatprep.subr.mxu0 0.0
      %1498 = vmatpush1.msra.mxu0 0.0
      %1499 = vmatprep.subr.mxu0 0.0
      %1500 = vmatpush1.msra.mxu0 0.0
      %1501 = vmatprep.subr.mxu0 0.0
      %1502 = vmatpush1.msra.mxu0 0.0
      %1503 = vmatprep.subr.mxu0 0.0
      %1504 = vmatpush1.msra.mxu0 0.0
      %1505 = vmatprep.subr.mxu0 0.0
      %1506 = vmatpush1.msra.mxu0 0.0
      %1507 = vmatprep.subr.mxu0 0.0
      %1508 = vmatpush1.msra.mxu0 0.0
      %1509 = vmatprep.subr.mxu0 0.0
      %1510 = vmatpush1.msra.mxu0 0.0
      %1511 = vmatprep.subr.mxu0 0.0
      %1512 = vmatpush1.msra.mxu0 0.0
      %1513 = vmatprep.subr.mxu0 0.0
      %1514 = vmatpush1.msra.mxu0 0.0
      %1515 = vmatprep.subr.mxu0 0.0
      %1516 = vmatpush1.msra.mxu0 0.0
      %1517 = vmatprep.subr.mxu0 0.0
      %1518 = vmatpush1.msra.mxu0 0.0
      %1519 = vmatprep.subr.mxu0 0.0
      %1520 = vmatpush1.msra.mxu0 0.0
      %1521 = vmatprep.subr.mxu0 0.0
      %1522 = vmatpush1.msra.mxu0 0.0
      %1523 = vmatprep.subr.mxu0 0.0
      %1524 = vmatpush1.msra.mxu0 0.0
      %1525 = vmatprep.subr.mxu0 0.0
      %1526 = vmatpush1.msra.mxu0 0.0
      %1527 = vmatprep.subr.mxu0 0.0
      %1528 = vmatpush1.msra.mxu0 0.0
      %1529 = vmatprep.subr.mxu0 0.0
      %1530 = vmatpush1.msra.mxu0 0.0
      %1531 = vmatprep.subr.mxu0 0.0
      %1532 = vmatpush1.msra.mxu0 0.0
      %1533 = vmatprep.subr.mxu0 0.0
      %1534 = vmatpush1.msra.mxu0 0.0
      %1535 = vmatprep.mubr.f32.mxu0 0.0
      %1536 = vmatmul.mubr.f32.gmra.mrb[0].mxu0 %v1466
      %v1537 = vpop.f32.mrb[0].mxu0
      %v1538 = vadd.f32 0.0, %v1537
      %v1539 = vpop.f32.mrb[0].mxu0
      %1540 = vmatprep.mubr.f32.mxu0 0.0
      %1541 = vmatmul.mubr.f32.gmra.mrb[0].mxu0 %v1469
      %v1542 = vpop.f32.mrb[0].mxu0
      %v1543 = vadd.f32 0.0, %v1542
      %v1544 = vpop.f32.mrb[0].mxu0
      %1545 = vdwg.mxu0
      %v1547 = vsel %vm964, %v1135, 0
      %v1550 = vsel %vm964, %v1136, 0
      %1552 = vmatprep.subr.mxu0 0.0
      %1553 = vmatpush1.msra.mxu0 %v510
      %1554 = vmatprep.subr.mxu0 0.0
      %1555 = vmatpush1.msra.mxu0 %v515
      %1556 = vmatprep.subr.mxu0 0.0
      %1557 = vmatpush1.msra.mxu0 0.0
      %1558 = vmatprep.subr.mxu0 0.0
      %1559 = vmatpush1.msra.mxu0 0.0
      %1560 = vmatprep.subr.mxu0 0.0
      %1561 = vmatpush1.msra.mxu0 0.0
      %1562 = vmatprep.subr.mxu0 0.0
      %1563 = vmatpush1.msra.mxu0 0.0
      %1564 = vmatprep.subr.mxu0 0.0
      %1565 = vmatpush1.msra.mxu0 0.0
      %1566 = vmatprep.subr.mxu0 0.0
      %1567 = vmatpush1.msra.mxu0 0.0
      %1568 = vmatprep.subr.mxu0 0.0
      %1569 = vmatpush1.msra.mxu0 0.0
      %1570 = vmatprep.subr.mxu0 0.0
      %1571 = vmatpush1.msra.mxu0 0.0
      %1572 = vmatprep.subr.mxu0 0.0
      %1573 = vmatpush1.msra.mxu0 0.0
      %1574 = vmatprep.subr.mxu0 0.0
      %1575 = vmatpush1.msra.mxu0 0.0
      %1576 = vmatprep.subr.mxu0 0.0
      %1577 = vmatpush1.msra.mxu0 0.0
      %1578 = vmatprep.subr.mxu0 0.0
      %1579 = vmatpush1.msra.mxu0 0.0
      %1580 = vmatprep.subr.mxu0 0.0
      %1581 = vmatpush1.msra.mxu0 0.0
      %1582 = vmatprep.subr.mxu0 0.0
      %1583 = vmatpush1.msra.mxu0 0.0
      %1584 = vmatprep.subr.mxu0 0.0
      %1585 = vmatpush1.msra.mxu0 0.0
      %1586 = vmatprep.subr.mxu0 0.0
      %1587 = vmatpush1.msra.mxu0 0.0
      %1588 = vmatprep.subr.mxu0 0.0
      %1589 = vmatpush1.msra.mxu0 0.0
      %1590 = vmatprep.subr.mxu0 0.0
      %1591 = vmatpush1.msra.mxu0 0.0
      %1592 = vmatprep.subr.mxu0 0.0
      %1593 = vmatpush1.msra.mxu0 0.0
      %1594 = vmatprep.subr.mxu0 0.0
      %1595 = vmatpush1.msra.mxu0 0.0
      %1596 = vmatprep.subr.mxu0 0.0
      %1597 = vmatpush1.msra.mxu0 0.0
      %1598 = vmatprep.subr.mxu0 0.0
      %1599 = vmatpush1.msra.mxu0 0.0
      %1600 = vmatprep.subr.mxu0 0.0
      %1601 = vmatpush1.msra.mxu0 0.0
      %1602 = vmatprep.subr.mxu0 0.0
      %1603 = vmatpush1.msra.mxu0 0.0
      %1604 = vmatprep.subr.mxu0 0.0
      %1605 = vmatpush1.msra.mxu0 0.0
      %1606 = vmatprep.subr.mxu0 0.0
      %1607 = vmatpush1.msra.mxu0 0.0
      %1608 = vmatprep.subr.mxu0 0.0
      %1609 = vmatpush1.msra.mxu0 0.0
      %1610 = vmatprep.subr.mxu0 0.0
      %1611 = vmatpush1.msra.mxu0 0.0
      %1612 = vmatprep.subr.mxu0 0.0
      %1613 = vmatpush1.msra.mxu0 0.0
      %1614 = vmatprep.subr.mxu0 0.0
      %1615 = vmatpush1.msra.mxu0 0.0
      %1616 = vmatprep.mubr.f32.mxu0 0.0
      %1617 = vmatmul.mubr.f32.gmra.mrb[0].mxu0 %v1547
      %v1618 = vpop.f32.mrb[0].mxu0
      %v1619 = vadd.f32 0.0, %v1618
      %v1620 = vpop.f32.mrb[0].mxu0
      %1621 = vmatprep.mubr.f32.mxu0 0.0
      %1622 = vmatmul.mubr.f32.gmra.mrb[0].mxu0 %v1550
      %v1623 = vpop.f32.mrb[0].mxu0
      %v1624 = vadd.f32 0.0, %v1623
      %v1625 = vpop.f32.mrb[0].mxu0
      %1626 = vdwg.mxu0
      %v1628 = vsel %vm964, %v1137, 0
      %v1631 = vsel %vm964, %v1138, 0
      %1633 = vmatprep.subr.mxu0 0.0
      %1634 = vmatpush1.msra.mxu0 %v520
      %1635 = vmatprep.subr.mxu0 0.0
      %1636 = vmatpush1.msra.mxu0 %v525
      %1637 = vmatprep.subr.mxu0 0.0
      %1638 = vmatpush1.msra.mxu0 0.0
      %1639 = vmatprep.subr.mxu0 0.0
      %1640 = vmatpush1.msra.mxu0 0.0
      %1641 = vmatprep.subr.mxu0 0.0
      %1642 = vmatpush1.msra.mxu0 0.0
      %1643 = vmatprep.subr.mxu0 0.0
      %1644 = vmatpush1.msra.mxu0 0.0
      %1645 = vmatprep.subr.mxu0 0.0
      %1646 = vmatpush1.msra.mxu0 0.0
      %1647 = vmatprep.subr.mxu0 0.0
      %1648 = vmatpush1.msra.mxu0 0.0
      %1649 = vmatprep.subr.mxu0 0.0
      %1650 = vmatpush1.msra.mxu0 0.0
      %1651 = vmatprep.subr.mxu0 0.0
      %1652 = vmatpush1.msra.mxu0 0.0
      %1653 = vmatprep.subr.mxu0 0.0
      %1654 = vmatpush1.msra.mxu0 0.0
      %1655 = vmatprep.subr.mxu0 0.0
      %1656 = vmatpush1.msra.mxu0 0.0
      %1657 = vmatprep.subr.mxu0 0.0
      %1658 = vmatpush1.msra.mxu0 0.0
      %1659 = vmatprep.subr.mxu0 0.0
      %1660 = vmatpush1.msra.mxu0 0.0
      %1661 = vmatprep.subr.mxu0 0.0
      %1662 = vmatpush1.msra.mxu0 0.0
      %1663 = vmatprep.subr.mxu0 0.0
      %1664 = vmatpush1.msra.mxu0 0.0
      %1665 = vmatprep.subr.mxu0 0.0
      %1666 = vmatpush1.msra.mxu0 0.0
      %1667 = vmatprep.subr.mxu0 0.0
      %1668 = vmatpush1.msra.mxu0 0.0
      %1669 = vmatprep.subr.mxu0 0.0
      %1670 = vmatpush1.msra.mxu0 0.0
      %1671 = vmatprep.subr.mxu0 0.0
      %1672 = vmatpush1.msra.mxu0 0.0
      %1673 = vmatprep.subr.mxu0 0.0
      %1674 = vmatpush1.msra.mxu0 0.0
      %1675 = vmatprep.subr.mxu0 0.0
      %1676 = vmatpush1.msra.mxu0 0.0
      %1677 = vmatprep.subr.mxu0 0.0
      %1678 = vmatpush1.msra.mxu0 0.0
      %1679 = vmatprep.subr.mxu0 0.0
      %1680 = vmatpush1.msra.mxu0 0.0
      %1681 = vmatprep.subr.mxu0 0.0
      %1682 = vmatpush1.msra.mxu0 0.0
      %1683 = vmatprep.subr.mxu0 0.0
      %1684 = vmatpush1.msra.mxu0 0.0
      %1685 = vmatprep.subr.mxu0 0.0
      %1686 = vmatpush1.msra.mxu0 0.0
      %1687 = vmatprep.subr.mxu0 0.0
      %1688 = vmatpush1.msra.mxu0 0.0
      %1689 = vmatprep.subr.mxu0 0.0
      %1690 = vmatpush1.msra.mxu0 0.0
      %1691 = vmatprep.subr.mxu0 0.0
      %1692 = vmatpush1.msra.mxu0 0.0
      %1693 = vmatprep.subr.mxu0 0.0
      %1694 = vmatpush1.msra.mxu0 0.0
      %1695 = vmatprep.subr.mxu0 0.0
      %1696 = vmatpush1.msra.mxu0 0.0
      %1697 = vmatprep.mubr.f32.mxu0 0.0
      %1698 = vmatmul.mubr.f32.gmra.mrb[0].mxu0 %v1628
      %v1699 = vpop.f32.mrb[0].mxu0
      %v1700 = vadd.f32 0.0, %v1699
      %v1701 = vpop.f32.mrb[0].mxu0
      %1702 = vmatprep.mubr.f32.mxu0 0.0
      %1703 = vmatmul.mubr.f32.gmra.mrb[0].mxu0 %v1631
      %v1704 = vpop.f32.mrb[0].mxu0
      %v1705 = vadd.f32 0.0, %v1704
      %v1706 = vpop.f32.mrb[0].mxu0
      %1707 = vdwg.mxu0
      %v1709 = vsel %vm964, %v1139, 0
      %v1712 = vsel %vm964, %v1140, 0
      %1714 = vmatprep.subr.mxu0 0.0
      %1715 = vmatpush1.msra.mxu0 %v530
      %1716 = vmatprep.subr.mxu0 0.0
      %1717 = vmatpush1.msra.mxu0 %v535
      %1718 = vmatprep.subr.mxu0 0.0
      %1719 = vmatpush1.msra.mxu0 0.0
      %1720 = vmatprep.subr.mxu0 0.0
      %1721 = vmatpush1.msra.mxu0 0.0
      %1722 = vmatprep.subr.mxu0 0.0
      %1723 = vmatpush1.msra.mxu0 0.0
      %1724 = vmatprep.subr.mxu0 0.0
      %1725 = vmatpush1.msra.mxu0 0.0
      %1726 = vmatprep.subr.mxu0 0.0
      %1727 = vmatpush1.msra.mxu0 0.0
      %1728 = vmatprep.subr.mxu0 0.0
      %1729 = vmatpush1.msra.mxu0 0.0
      %1730 = vmatprep.subr.mxu0 0.0
      %1731 = vmatpush1.msra.mxu0 0.0
      %1732 = vmatprep.subr.mxu0 0.0
      %1733 = vmatpush1.msra.mxu0 0.0
      %1734 = vmatprep.subr.mxu0 0.0
      %1735 = vmatpush1.msra.mxu0 0.0
      %1736 = vmatprep.subr.mxu0 0.0
      %1737 = vmatpush1.msra.mxu0 0.0
      %1738 = vmatprep.subr.mxu0 0.0
      %1739 = vmatpush1.msra.mxu0 0.0
      %1740 = vmatprep.subr.mxu0 0.0
      %1741 = vmatpush1.msra.mxu0 0.0
      %1742 = vmatprep.subr.mxu0 0.0
      %1743 = vmatpush1.msra.mxu0 0.0
      %1744 = vmatprep.subr.mxu0 0.0
      %1745 = vmatpush1.msra.mxu0 0.0
      %1746 = vmatprep.subr.mxu0 0.0
      %1747 = vmatpush1.msra.mxu0 0.0
      %1748 = vmatprep.subr.mxu0 0.0
      %1749 = vmatpush1.msra.mxu0 0.0
      %1750 = vmatprep.subr.mxu0 0.0
      %1751 = vmatpush1.msra.mxu0 0.0
      %1752 = vmatprep.subr.mxu0 0.0
      %1753 = vmatpush1.msra.mxu0 0.0
      %1754 = vmatprep.subr.mxu0 0.0
      %1755 = vmatpush1.msra.mxu0 0.0
      %1756 = vmatprep.subr.mxu0 0.0
      %1757 = vmatpush1.msra.mxu0 0.0
      %1758 = vmatprep.subr.mxu0 0.0
      %1759 = vmatpush1.msra.mxu0 0.0
      %1760 = vmatprep.subr.mxu0 0.0
      %1761 = vmatpush1.msra.mxu0 0.0
      %1762 = vmatprep.subr.mxu0 0.0
      %1763 = vmatpush1.msra.mxu0 0.0
      %1764 = vmatprep.subr.mxu0 0.0
      %1765 = vmatpush1.msra.mxu0 0.0
      %1766 = vmatprep.subr.mxu0 0.0
      %1767 = vmatpush1.msra.mxu0 0.0
      %1768 = vmatprep.subr.mxu0 0.0
      %1769 = vmatpush1.msra.mxu0 0.0
      %1770 = vmatprep.subr.mxu0 0.0
      %1771 = vmatpush1.msra.mxu0 0.0
      %1772 = vmatprep.subr.mxu0 0.0
      %1773 = vmatpush1.msra.mxu0 0.0
      %1774 = vmatprep.subr.mxu0 0.0
      %1775 = vmatpush1.msra.mxu0 0.0
      %1776 = vmatprep.subr.mxu0 0.0
      %1777 = vmatpush1.msra.mxu0 0.0
      %1778 = vmatprep.mubr.f32.mxu0 0.0
      %1779 = vmatmul.mubr.f32.gmra.mrb[0].mxu0 %v1709
      %v1780 = vpop.f32.mrb[0].mxu0
      %v1781 = vadd.f32 0.0, %v1780
      %v1782 = vpop.f32.mrb[0].mxu0
      %1783 = vmatprep.mubr.f32.mxu0 0.0
      %1784 = vmatmul.mubr.f32.gmra.mrb[0].mxu0 %v1712
      %v1785 = vpop.f32.mrb[0].mxu0
      %v1786 = vadd.f32 0.0, %v1785
      %v1787 = vpop.f32.mrb[0].mxu0
      %1788 = vdwg.mxu0
      %vm1789 = vcmask 261120
      %v1790 = vsel %vm1789, %v1214, 0.0
      %v1791 = vsel %vm1789, %v1219, 0.0
      %v1792 = vadd.f32 %v1790, %v1791
      %v1793 = vrot.slane %v1792, 4
      %v1794 = vadd.f32 %v1792, %v1793
      %v1795 = vrot.slane %v1794, 2
      %v1796 = vadd.f32 %v1794, %v1795
      %v1797 = vrot.slane %v1796, 1
      %v1798 = vadd.f32 %v1796, %v1797
      %v1799 = vsel %vm1789, %v1295, 0.0
      %v1800 = vsel %vm1789, %v1300, 0.0
      %v1801 = vadd.f32 %v1799, %v1800
      %v1802 = vrot.slane %v1801, 4
      %v1803 = vadd.f32 %v1801, %v1802
      %v1804 = vrot.slane %v1803, 2
      %v1805 = vadd.f32 %v1803, %v1804
      %v1806 = vrot.slane %v1805, 1
      %v1807 = vadd.f32 %v1805, %v1806
      %v1808 = vsel %vm1789, %v1376, 0.0
      %v1809 = vsel %vm1789, %v1381, 0.0
      %v1810 = vadd.f32 %v1808, %v1809
      %v1811 = vrot.slane %v1810, 4
      %v1812 = vadd.f32 %v1810, %v1811
      %v1813 = vrot.slane %v1812, 2
      %v1814 = vadd.f32 %v1812, %v1813
      %v1815 = vrot.slane %v1814, 1
      %v1816 = vadd.f32 %v1814, %v1815
      %v1817 = vsel %vm1789, %v1457, 0.0
      %v1818 = vsel %vm1789, %v1462, 0.0
      %v1819 = vadd.f32 %v1817, %v1818
      %v1820 = vrot.slane %v1819, 4
      %v1821 = vadd.f32 %v1819, %v1820
      %v1822 = vrot.slane %v1821, 2
      %v1823 = vadd.f32 %v1821, %v1822
      %v1824 = vrot.slane %v1823, 1
      %v1825 = vadd.f32 %v1823, %v1824
      %v1826 = vsel %vm1789, %v1538, 0.0
      %v1827 = vsel %vm1789, %v1543, 0.0
      %v1828 = vadd.f32 %v1826, %v1827
      %v1829 = vrot.slane %v1828, 4
      %v1830 = vadd.f32 %v1828, %v1829
      %v1831 = vrot.slane %v1830, 2
      %v1832 = vadd.f32 %v1830, %v1831
      %v1833 = vrot.slane %v1832, 1
      %v1834 = vadd.f32 %v1832, %v1833
      %v1835 = vsel %vm1789, %v1619, 0.0
      %v1836 = vsel %vm1789, %v1624, 0.0
      %v1837 = vadd.f32 %v1835, %v1836
      %v1838 = vrot.slane %v1837, 4
      %v1839 = vadd.f32 %v1837, %v1838
      %v1840 = vrot.slane %v1839, 2
      %v1841 = vadd.f32 %v1839, %v1840
      %v1842 = vrot.slane %v1841, 1
      %v1843 = vadd.f32 %v1841, %v1842
      %v1844 = vsel %vm1789, %v1700, 0.0
      %v1845 = vsel %vm1789, %v1705, 0.0
      %v1846 = vadd.f32 %v1844, %v1845
      %v1847 = vrot.slane %v1846, 4
      %v1848 = vadd.f32 %v1846, %v1847
      %v1849 = vrot.slane %v1848, 2
      %v1850 = vadd.f32 %v1848, %v1849
      %v1851 = vrot.slane %v1850, 1
      %v1852 = vadd.f32 %v1850, %v1851
      %v1853 = vsel %vm1789, %v1781, 0.0
      %v1854 = vsel %vm1789, %v1786, 0.0
      %v1855 = vadd.f32 %v1853, %v1854
      %v1856 = vrot.slane %v1855, 4
      %v1857 = vadd.f32 %v1855, %v1856
      %v1858 = vrot.slane %v1857, 2
      %v1859 = vadd.f32 %v1857, %v1858
      %v1860 = vrot.slane %v1859, 1
      %v1861 = vadd.f32 %v1859, %v1860
      %v1862 = vrcp.pop 16.0
      %v1863 = vmul.f32 %v1798, %v1862
      %v1864 = vmul.f32 %v1807, %v1862
      %v1865 = vmul.f32 %v1816, %v1862
      %v1866 = vmul.f32 %v1825, %v1862
      %v1867 = vmul.f32 %v1834, %v1862
      %v1868 = vmul.f32 %v1843, %v1862
      %v1869 = vmul.f32 %v1852, %v1862
      %v1870 = vmul.f32 %v1861, %v1862
      %v1871 = vld [vmem:[%s3] sm:$0x1]
      %v1873 = vlaneseq
      %v1874 = vshrl.u32 %v1873, 7
      %v1875 = vsub.s32 0, %v1874
      %v1876 = vrot.slane %v1871, %v1875
      %v1878 = vadd.f32 %v1863, %v1876
      %v1879 = vadd.f32 %v1864, %v1876
      %v1880 = vadd.f32 %v1865, %v1876
      %v1881 = vadd.f32 %v1866, %v1876
      %v1882 = vadd.f32 %v1867, %v1876
      %v1883 = vadd.f32 %v1868, %v1876
      %v1884 = vadd.f32 %v1869, %v1876
      %v1885 = vadd.f32 %v1870, %v1876
      %v1886 = vld [vmem:[%s4] sm:$0xff]
      %v1887 = vld [vmem:[%s4 + $0x8] sm:$0xff]
      %v1888 = vld [vmem:[%s4 + $0x10] sm:$0xff]
      %v1889 = vld [vmem:[%s4 + $0x18] sm:$0xff]
      %v1890 = vld [vmem:[%s4 + $0x20] sm:$0xff]
      %v1891 = vld [vmem:[%s4 + $0x28] sm:$0xff]
      %v1892 = vld [vmem:[%s4 + $0x30] sm:$0xff]
      %v1893 = vld [vmem:[%s4 + $0x38] sm:$0xff]
      %v1894 = vld [vmem:[%s5] sm:$0x1]
      %v1895 = vsel %vm1789, %v1878, 0.0
      %vm1896 = vcmask 523264
      %v1898 = vsel %vm1896, %v1895, 0
      %1900 = vmatprep.subr.mxu0 0.0
      %1901 = vmatpush1.msra.mxu0 %v1886
      %1902 = vmatprep.subr.mxu0 0.0
      %1903 = vmatpush1.msra.mxu0 %v1887
      %1904 = vmatprep.subr.mxu0 0.0
      %1905 = vmatpush1.msra.mxu0 %v1888
      %1906 = vmatprep.subr.mxu0 0.0
      %1907 = vmatpush1.msra.mxu0 %v1889
      %1908 = vmatprep.subr.mxu0 0.0
      %1909 = vmatpush1.msra.mxu0 %v1890
      %1910 = vmatprep.subr.mxu0 0.0
      %1911 = vmatpush1.msra.mxu0 %v1891
      %1912 = vmatprep.subr.mxu0 0.0
      %1913 = vmatpush1.msra.mxu0 %v1892
      %1914 = vmatprep.subr.mxu0 0.0
      %1915 = vmatpush1.msra.mxu0 %v1893
      %1916 = vmatprep.subr.mxu0 0.0
      %1917 = vmatpush1.msra.mxu0 0.0
      %1918 = vmatprep.subr.mxu0 0.0
      %1919 = vmatpush1.msra.mxu0 0.0
      %1920 = vmatprep.subr.mxu0 0.0
      %1921 = vmatpush1.msra.mxu0 0.0
      %1922 = vmatprep.subr.mxu0 0.0
      %1923 = vmatpush1.msra.mxu0 0.0
      %1924 = vmatprep.subr.mxu0 0.0
      %1925 = vmatpush1.msra.mxu0 0.0
      %1926 = vmatprep.subr.mxu0 0.0
      %1927 = vmatpush1.msra.mxu0 0.0
      %1928 = vmatprep.subr.mxu0 0.0
      %1929 = vmatpush1.msra.mxu0 0.0
      %1930 = vmatprep.subr.mxu0 0.0
      %1931 = vmatpush1.msra.mxu0 0.0
      %1932 = vmatprep.subr.mxu0 0.0
      %1933 = vmatpush1.msra.mxu0 0.0
      %1934 = vmatprep.subr.mxu0 0.0
      %1935 = vmatpush1.msra.mxu0 0.0
      %1936 = vmatprep.subr.mxu0 0.0
      %1937 = vmatpush1.msra.mxu0 0.0
      %1938 = vmatprep.subr.mxu0 0.0
      %1939 = vmatpush1.msra.mxu0 0.0
      %1940 = vmatprep.subr.mxu0 0.0
      %1941 = vmatpush1.msra.mxu0 0.0
      %1942 = vmatprep.subr.mxu0 0.0
      %1943 = vmatpush1.msra.mxu0 0.0
      %1944 = vmatprep.subr.mxu0 0.0
      %1945 = vmatpush1.msra.mxu0 0.0
      %1946 = vmatprep.subr.mxu0 0.0
      %1947 = vmatpush1.msra.mxu0 0.0
      %1948 = vmatprep.subr.mxu0 0.0
      %1949 = vmatpush1.msra.mxu0 0.0
      %1950 = vmatprep.subr.mxu0 0.0
      %1951 = vmatpush1.msra.mxu0 0.0
      %1952 = vmatprep.subr.mxu0 0.0
      %1953 = vmatpush1.msra.mxu0 0.0
      %1954 = vmatprep.subr.mxu0 0.0
      %1955 = vmatpush1.msra.mxu0 0.0
      %1956 = vmatprep.subr.mxu0 0.0
      %1957 = vmatpush1.msra.mxu0 0.0
      %1958 = vmatprep.subr.mxu0 0.0
      %1959 = vmatpush1.msra.mxu0 0.0
      %1960 = vmatprep.subr.mxu0 0.0
      %1961 = vmatpush1.msra.mxu0 0.0
      %1962 = vmatprep.subr.mxu0 0.0
      %1963 = vmatpush1.msra.mxu0 0.0
      %1964 = vmatprep.mubr.f32.mxu0 0.0
      %1965 = vmatmul.mubr.f32.gmra.mrb[0].mxu0 %v1898
      %v1966 = vpop.f32.mrb[0].mxu0
      %v1967 = vadd.f32 %v1894, %v1966
      %v1968 = vpop.f32.mrb[0].mxu0
      %1969 = vdwg.mxu0
      %v1970 = vxor.u32 %v1967, 2147483648
      %v1971 = vmul.f32 %v1970, 1.442695
      %v1972 = vpow.pop %v1971
      %v1973 = vadd.f32 %v1972, 1.0
      %v1974 = vrcp.pop %v1973
      %v1975 = vmul.f32 1.0, %v1974
      %v1976 = vtanh.pop %v1967
      %v1977 = vmul.f32 %v1975, 0.0
      %1979 = vrot.lane.b32.xlu0 %v1976, 64
      %v1980 = vpop.permute.xlu0 %1979
      %v1982 = vmul.f32 %v1975, %v1980
      %1984 = vrot.lane.b32.xlu0 %v1982, 32
      %v1985 = vpop.permute.xlu0 %1984
      %v1987 = vadd.f32 %v1977, %v1985
      %v1988 = vtanh.pop %v1987
      %1990 = vrot.lane.b32.xlu0 %v1988, 64
      %v1991 = vpop.permute.xlu0 %1990
      %v1993 = vmul.f32 %v1975, %v1991
      %1995 = vrot.lane.b32.xlu0 %v1993, 64
      %v1996 = vpop.permute.xlu0 %1995
      %v1998 = vsel %vm1789, %v1879, %v1996
      %v2000 = vsel %vm1896, %v1998, 0
      %2002 = vmatprep.subr.mxu0 0.0
      %2003 = vmatpush1.msra.mxu0 %v1886
      %2004 = vmatprep.subr.mxu0 0.0
      %2005 = vmatpush1.msra.mxu0 %v1887
      %2006 = vmatprep.subr.mxu0 0.0
      %2007 = vmatpush1.msra.mxu0 %v1888
      %2008 = vmatprep.subr.mxu0 0.0
      %2009 = vmatpush1.msra.mxu0 %v1889
      %2010 = vmatprep.subr.mxu0 0.0
      %2011 = vmatpush1.msra.mxu0 %v1890
      %2012 = vmatprep.subr.mxu0 0.0
      %2013 = vmatpush1.msra.mxu0 %v1891
      %2014 = vmatprep.subr.mxu0 0.0
      %2015 = vmatpush1.msra.mxu0 %v1892
      %2016 = vmatprep.subr.mxu0 0.0
      %2017 = vmatpush1.msra.mxu0 %v1893
      %2018 = vmatprep.subr.mxu0 0.0
      %2019 = vmatpush1.msra.mxu0 0.0
      %2020 = vmatprep.subr.mxu0 0.0
      %2021 = vmatpush1.msra.mxu0 0.0
      %2022 = vmatprep.subr.mxu0 0.0
      %2023 = vmatpush1.msra.mxu0 0.0
      %2024 = vmatprep.subr.mxu0 0.0
      %2025 = vmatpush1.msra.mxu0 0.0
      %2026 = vmatprep.subr.mxu0 0.0
      %2027 = vmatpush1.msra.mxu0 0.0
      %2028 = vmatprep.subr.mxu0 0.0
      %2029 = vmatpush1.msra.mxu0 0.0
      %2030 = vmatprep.subr.mxu0 0.0
      %2031 = vmatpush1.msra.mxu0 0.0
      %2032 = vmatprep.subr.mxu0 0.0
      %2033 = vmatpush1.msra.mxu0 0.0
      %2034 = vmatprep.subr.mxu0 0.0
      %2035 = vmatpush1.msra.mxu0 0.0
      %2036 = vmatprep.subr.mxu0 0.0
      %2037 = vmatpush1.msra.mxu0 0.0
      %2038 = vmatprep.subr.mxu0 0.0
      %2039 = vmatpush1.msra.mxu0 0.0
      %2040 = vmatprep.subr.mxu0 0.0
      %2041 = vmatpush1.msra.mxu0 0.0
      %2042 = vmatprep.subr.mxu0 0.0
      %2043 = vmatpush1.msra.mxu0 0.0
      %2044 = vmatprep.subr.mxu0 0.0
      %2045 = vmatpush1.msra.mxu0 0.0
      %2046 = vmatprep.subr.mxu0 0.0
      %2047 = vmatpush1.msra.mxu0 0.0
      %2048 = vmatprep.subr.mxu0 0.0
      %2049 = vmatpush1.msra.mxu0 0.0
      %2050 = vmatprep.subr.mxu0 0.0
      %2051 = vmatpush1.msra.mxu0 0.0
      %2052 = vmatprep.subr.mxu0 0.0
      %2053 = vmatpush1.msra.mxu0 0.0
      %2054 = vmatprep.subr.mxu0 0.0
      %2055 = vmatpush1.msra.mxu0 0.0
      %2056 = vmatprep.subr.mxu0 0.0
      %2057 = vmatpush1.msra.mxu0 0.0
      %2058 = vmatprep.subr.mxu0 0.0
      %2059 = vmatpush1.msra.mxu0 0.0
      %2060 = vmatprep.subr.mxu0 0.0
      %2061 = vmatpush1.msra.mxu0 0.0
      %2062 = vmatprep.subr.mxu0 0.0
      %2063 = vmatpush1.msra.mxu0 0.0
      %2064 = vmatprep.subr.mxu0 0.0
      %2065 = vmatpush1.msra.mxu0 0.0
      %2066 = vmatprep.mubr.f32.mxu0 0.0
      %2067 = vmatmul.mubr.f32.gmra.mrb[0].mxu0 %v2000
      %v2068 = vpop.f32.mrb[0].mxu0
      %v2069 = vadd.f32 %v1894, %v2068
      %v2070 = vpop.f32.mrb[0].mxu0
      %2071 = vdwg.mxu0
      %v2072 = vxor.u32 %v2069, 2147483648
      %v2073 = vmul.f32 %v2072, 1.442695
      %v2074 = vpow.pop %v2073
      %v2075 = vadd.f32 %v2074, 1.0
      %v2076 = vrcp.pop %v2075
      %v2077 = vmul.f32 1.0, %v2076
      %v2078 = vtanh.pop %v2069
      %v2079 = vmul.f32 %v2077, %v1987
      %2081 = vrot.lane.b32.xlu0 %v2078, 64
      %v2082 = vpop.permute.xlu0 %2081
      %v2084 = vmul.f32 %v2077, %v2082
      %2086 = vrot.lane.b32.xlu0 %v2084, 32
      %v2087 = vpop.permute.xlu0 %2086
      %v2089 = vadd.f32 %v2079, %v2087
      %v2090 = vtanh.pop %v2089
      %2092 = vrot.lane.b32.xlu0 %v2090, 64
      %v2093 = vpop.permute.xlu0 %2092
      %v2095 = vmul.f32 %v2077, %v2093
      %2097 = vrot.lane.b32.xlu0 %v2095, 64
      %v2098 = vpop.permute.xlu0 %2097
      %v2100 = vsel %vm1789, %v1880, %v2098
      %v2102 = vsel %vm1896, %v2100, 0
      %2104 = vmatprep.subr.mxu0 0.0
      %2105 = vmatpush1.msra.mxu0 %v1886
      %2106 = vmatprep.subr.mxu0 0.0
      %2107 = vmatpush1.msra.mxu0 %v1887
      %2108 = vmatprep.subr.mxu0 0.0
      %2109 = vmatpush1.msra.mxu0 %v1888
      %2110 = vmatprep.subr.mxu0 0.0
      %2111 = vmatpush1.msra.mxu0 %v1889
      %2112 = vmatprep.subr.mxu0 0.0
      %2113 = vmatpush1.msra.mxu0 %v1890
      %2114 = vmatprep.subr.mxu0 0.0
      %2115 = vmatpush1.msra.mxu0 %v1891
      %2116 = vmatprep.subr.mxu0 0.0
      %2117 = vmatpush1.msra.mxu0 %v1892
      %2118 = vmatprep.subr.mxu0 0.0
      %2119 = vmatpush1.msra.mxu0 %v1893
      %2120 = vmatprep.subr.mxu0 0.0
      %2121 = vmatpush1.msra.mxu0 0.0
      %2122 = vmatprep.subr.mxu0 0.0
      %2123 = vmatpush1.msra.mxu0 0.0
      %2124 = vmatprep.subr.mxu0 0.0
      %2125 = vmatpush1.msra.mxu0 0.0
      %2126 = vmatprep.subr.mxu0 0.0
      %2127 = vmatpush1.msra.mxu0 0.0
      %2128 = vmatprep.subr.mxu0 0.0
      %2129 = vmatpush1.msra.mxu0 0.0
      %2130 = vmatprep.subr.mxu0 0.0
      %2131 = vmatpush1.msra.mxu0 0.0
      %2132 = vmatprep.subr.mxu0 0.0
      %2133 = vmatpush1.msra.mxu0 0.0
      %2134 = vmatprep.subr.mxu0 0.0
      %2135 = vmatpush1.msra.mxu0 0.0
      %2136 = vmatprep.subr.mxu0 0.0
      %2137 = vmatpush1.msra.mxu0 0.0
      %2138 = vmatprep.subr.mxu0 0.0
      %2139 = vmatpush1.msra.mxu0 0.0
      %2140 = vmatprep.subr.mxu0 0.0
      %2141 = vmatpush1.msra.mxu0 0.0
      %2142 = vmatprep.subr.mxu0 0.0
      %2143 = vmatpush1.msra.mxu0 0.0
      %2144 = vmatprep.subr.mxu0 0.0
      %2145 = vmatpush1.msra.mxu0 0.0
      %2146 = vmatprep.subr.mxu0 0.0
      %2147 = vmatpush1.msra.mxu0 0.0
      %2148 = vmatprep.subr.mxu0 0.0
      %2149 = vmatpush1.msra.mxu0 0.0
      %2150 = vmatprep.subr.mxu0 0.0
      %2151 = vmatpush1.msra.mxu0 0.0
      %2152 = vmatprep.subr.mxu0 0.0
      %2153 = vmatpush1.msra.mxu0 0.0
      %2154 = vmatprep.subr.mxu0 0.0
      %2155 = vmatpush1.msra.mxu0 0.0
      %2156 = vmatprep.subr.mxu0 0.0
      %2157 = vmatpush1.msra.mxu0 0.0
      %2158 = vmatprep.subr.mxu0 0.0
      %2159 = vmatpush1.msra.mxu0 0.0
      %2160 = vmatprep.subr.mxu0 0.0
      %2161 = vmatpush1.msra.mxu0 0.0
      %2162 = vmatprep.subr.mxu0 0.0
      %2163 = vmatpush1.msra.mxu0 0.0
      %2164 = vmatprep.subr.mxu0 0.0
      %2165 = vmatpush1.msra.mxu0 0.0
      %2166 = vmatprep.subr.mxu0 0.0
      %2167 = vmatpush1.msra.mxu0 0.0
      %2168 = vmatprep.mubr.f32.mxu0 0.0
      %2169 = vmatmul.mubr.f32.gmra.mrb[0].mxu0 %v2102
      %v2170 = vpop.f32.mrb[0].mxu0
      %v2171 = vadd.f32 %v1894, %v2170
      %v2172 = vpop.f32.mrb[0].mxu0
      %2173 = vdwg.mxu0
      %v2174 = vxor.u32 %v2171, 2147483648
      %v2175 = vmul.f32 %v2174, 1.442695
      %v2176 = vpow.pop %v2175
      %v2177 = vadd.f32 %v2176, 1.0
      %v2178 = vrcp.pop %v2177
      %v2179 = vmul.f32 1.0, %v2178
      %v2180 = vtanh.pop %v2171
      %v2181 = vmul.f32 %v2179, %v2089
      %2183 = vrot.lane.b32.xlu0 %v2180, 64
      %v2184 = vpop.permute.xlu0 %2183
      %v2186 = vmul.f32 %v2179, %v2184
      %2188 = vrot.lane.b32.xlu0 %v2186, 32
      %v2189 = vpop.permute.xlu0 %2188
      %v2191 = vadd.f32 %v2181, %v2189
      %v2192 = vtanh.pop %v2191
      %2194 = vrot.lane.b32.xlu0 %v2192, 64
      %v2195 = vpop.permute.xlu0 %2194
      %v2197 = vmul.f32 %v2179, %v2195
      %2199 = vrot.lane.b32.xlu0 %v2197, 64
      %v2200 = vpop.permute.xlu0 %2199
      %v2202 = vsel %vm1789, %v1881, %v2200
      %v2204 = vsel %vm1896, %v2202, 0
      %2206 = vmatprep.subr.mxu0 0.0
      %2207 = vmatpush1.msra.mxu0 %v1886
      %2208 = vmatprep.subr.mxu0 0.0
      %2209 = vmatpush1.msra.mxu0 %v1887
      %2210 = vmatprep.subr.mxu0 0.0
      %2211 = vmatpush1.msra.mxu0 %v1888
      %2212 = vmatprep.subr.mxu0 0.0
      %2213 = vmatpush1.msra.mxu0 %v1889
      %2214 = vmatprep.subr.mxu0 0.0
      %2215 = vmatpush1.msra.mxu0 %v1890
      %2216 = vmatprep.subr.mxu0 0.0
      %2217 = vmatpush1.msra.mxu0 %v1891
      %2218 = vmatprep.subr.mxu0 0.0
      %2219 = vmatpush1.msra.mxu0 %v1892
      %2220 = vmatprep.subr.mxu0 0.0
      %2221 = vmatpush1.msra.mxu0 %v1893
      %2222 = vmatprep.subr.mxu0 0.0
      %2223 = vmatpush1.msra.mxu0 0.0
      %2224 = vmatprep.subr.mxu0 0.0
      %2225 = vmatpush1.msra.mxu0 0.0
      %2226 = vmatprep.subr.mxu0 0.0
      %2227 = vmatpush1.msra.mxu0 0.0
      %2228 = vmatprep.subr.mxu0 0.0
      %2229 = vmatpush1.msra.mxu0 0.0
      %2230 = vmatprep.subr.mxu0 0.0
      %2231 = vmatpush1.msra.mxu0 0.0
      %2232 = vmatprep.subr.mxu0 0.0
      %2233 = vmatpush1.msra.mxu0 0.0
      %2234 = vmatprep.subr.mxu0 0.0
      %2235 = vmatpush1.msra.mxu0 0.0
      %2236 = vmatprep.subr.mxu0 0.0
      %2237 = vmatpush1.msra.mxu0 0.0
      %2238 = vmatprep.subr.mxu0 0.0
      %2239 = vmatpush1.msra.mxu0 0.0
      %2240 = vmatprep.subr.mxu0 0.0
      %2241 = vmatpush1.msra.mxu0 0.0
      %2242 = vmatprep.subr.mxu0 0.0
      %2243 = vmatpush1.msra.mxu0 0.0
      %2244 = vmatprep.subr.mxu0 0.0
      %2245 = vmatpush1.msra.mxu0 0.0
      %2246 = vmatprep.subr.mxu0 0.0
      %2247 = vmatpush1.msra.mxu0 0.0
      %2248 = vmatprep.subr.mxu0 0.0
      %2249 = vmatpush1.msra.mxu0 0.0
      %2250 = vmatprep.subr.mxu0 0.0
      %2251 = vmatpush1.msra.mxu0 0.0
      %2252 = vmatprep.subr.mxu0 0.0
      %2253 = vmatpush1.msra.mxu0 0.0
      %2254 = vmatprep.subr.mxu0 0.0
      %2255 = vmatpush1.msra.mxu0 0.0
      %2256 = vmatprep.subr.mxu0 0.0
      %2257 = vmatpush1.msra.mxu0 0.0
      %2258 = vmatprep.subr.mxu0 0.0
      %2259 = vmatpush1.msra.mxu0 0.0
      %2260 = vmatprep.subr.mxu0 0.0
      %2261 = vmatpush1.msra.mxu0 0.0
      %2262 = vmatprep.subr.mxu0 0.0
      %2263 = vmatpush1.msra.mxu0 0.0
      %2264 = vmatprep.subr.mxu0 0.0
      %2265 = vmatpush1.msra.mxu0 0.0
      %2266 = vmatprep.subr.mxu0 0.0
      %2267 = vmatpush1.msra.mxu0 0.0
      %2268 = vmatprep.subr.mxu0 0.0
      %2269 = vmatpush1.msra.mxu0 0.0
      %2270 = vmatprep.mubr.f32.mxu0 0.0
      %2271 = vmatmul.mubr.f32.gmra.mrb[0].mxu0 %v2204
      %v2272 = vpop.f32.mrb[0].mxu0
      %v2273 = vadd.f32 %v1894, %v2272
      %v2274 = vpop.f32.mrb[0].mxu0
      %2275 = vdwg.mxu0
      %v2276 = vxor.u32 %v2273, 2147483648
      %v2277 = vmul.f32 %v2276, 1.442695
      %v2278 = vpow.pop %v2277
      %v2279 = vadd.f32 %v2278, 1.0
      %v2280 = vrcp.pop %v2279
      %v2281 = vmul.f32 1.0, %v2280
      %v2282 = vtanh.pop %v2273
      %v2283 = vmul.f32 %v2281, %v2191
      %2285 = vrot.lane.b32.xlu0 %v2282, 64
      %v2286 = vpop.permute.xlu0 %2285
      %v2288 = vmul.f32 %v2281, %v2286
      %2290 = vrot.lane.b32.xlu0 %v2288, 32
      %v2291 = vpop.permute.xlu0 %2290
      %v2293 = vadd.f32 %v2283, %v2291
      %v2294 = vtanh.pop %v2293
      %2296 = vrot.lane.b32.xlu0 %v2294, 64
      %v2297 = vpop.permute.xlu0 %2296
      %v2299 = vmul.f32 %v2281, %v2297
      %2301 = vrot.lane.b32.xlu0 %v2299, 64
      %v2302 = vpop.permute.xlu0 %2301
      %v2304 = vsel %vm1789, %v1882, %v2302
      %v2306 = vsel %vm1896, %v2304, 0
      %2308 = vmatprep.subr.mxu0 0.0
      %2309 = vmatpush1.msra.mxu0 %v1886
      %2310 = vmatprep.subr.mxu0 0.0
      %2311 = vmatpush1.msra.mxu0 %v1887
      %2312 = vmatprep.subr.mxu0 0.0
      %2313 = vmatpush1.msra.mxu0 %v1888
      %2314 = vmatprep.subr.mxu0 0.0
      %2315 = vmatpush1.msra.mxu0 %v1889
      %2316 = vmatprep.subr.mxu0 0.0
      %2317 = vmatpush1.msra.mxu0 %v1890
      %2318 = vmatprep.subr.mxu0 0.0
      %2319 = vmatpush1.msra.mxu0 %v1891
      %2320 = vmatprep.subr.mxu0 0.0
      %2321 = vmatpush1.msra.mxu0 %v1892
      %2322 = vmatprep.subr.mxu0 0.0
      %2323 = vmatpush1.msra.mxu0 %v1893
      %2324 = vmatprep.subr.mxu0 0.0
      %2325 = vmatpush1.msra.mxu0 0.0
      %2326 = vmatprep.subr.mxu0 0.0
      %2327 = vmatpush1.msra.mxu0 0.0
      %2328 = vmatprep.subr.mxu0 0.0
      %2329 = vmatpush1.msra.mxu0 0.0
      %2330 = vmatprep.subr.mxu0 0.0
      %2331 = vmatpush1.msra.mxu0 0.0
      %2332 = vmatprep.subr.mxu0 0.0
      %2333 = vmatpush1.msra.mxu0 0.0
      %2334 = vmatprep.subr.mxu0 0.0
      %2335 = vmatpush1.msra.mxu0 0.0
      %2336 = vmatprep.subr.mxu0 0.0
      %2337 = vmatpush1.msra.mxu0 0.0
      %2338 = vmatprep.subr.mxu0 0.0
      %2339 = vmatpush1.msra.mxu0 0.0
      %2340 = vmatprep.subr.mxu0 0.0
      %2341 = vmatpush1.msra.mxu0 0.0
      %2342 = vmatprep.subr.mxu0 0.0
      %2343 = vmatpush1.msra.mxu0 0.0
      %2344 = vmatprep.subr.mxu0 0.0
      %2345 = vmatpush1.msra.mxu0 0.0
      %2346 = vmatprep.subr.mxu0 0.0
      %2347 = vmatpush1.msra.mxu0 0.0
      %2348 = vmatprep.subr.mxu0 0.0
      %2349 = vmatpush1.msra.mxu0 0.0
      %2350 = vmatprep.subr.mxu0 0.0
      %2351 = vmatpush1.msra.mxu0 0.0
      %2352 = vmatprep.subr.mxu0 0.0
      %2353 = vmatpush1.msra.mxu0 0.0
      %2354 = vmatprep.subr.mxu0 0.0
      %2355 = vmatpush1.msra.mxu0 0.0
      %2356 = vmatprep.subr.mxu0 0.0
      %2357 = vmatpush1.msra.mxu0 0.0
      %2358 = vmatprep.subr.mxu0 0.0
      %2359 = vmatpush1.msra.mxu0 0.0
      %2360 = vmatprep.subr.mxu0 0.0
      %2361 = vmatpush1.msra.mxu0 0.0
      %2362 = vmatprep.subr.mxu0 0.0
      %2363 = vmatpush1.msra.mxu0 0.0
      %2364 = vmatprep.subr.mxu0 0.0
      %2365 = vmatpush1.msra.mxu0 0.0
      %2366 = vmatprep.subr.mxu0 0.0
      %2367 = vmatpush1.msra.mxu0 0.0
      %2368 = vmatprep.subr.mxu0 0.0
      %2369 = vmatpush1.msra.mxu0 0.0
      %2370 = vmatprep.subr.mxu0 0.0
      %2371 = vmatpush1.msra.mxu0 0.0
      %2372 = vmatprep.mubr.f32.mxu0 0.0
      %2373 = vmatmul.mubr.f32.gmra.mrb[0].mxu0 %v2306
      %v2374 = vpop.f32.mrb[0].mxu0
      %v2375 = vadd.f32 %v1894, %v2374
      %v2376 = vpop.f32.mrb[0].mxu0
      %2377 = vdwg.mxu0
      %v2378 = vxor.u32 %v2375, 2147483648
      %v2379 = vmul.f32 %v2378, 1.442695
      %v2380 = vpow.pop %v2379
      %v2381 = vadd.f32 %v2380, 1.0
      %v2382 = vrcp.pop %v2381
      %v2383 = vmul.f32 1.0, %v2382
      %v2384 = vtanh.pop %v2375
      %v2385 = vmul.f32 %v2383, %v2293
      %2387 = vrot.lane.b32.xlu0 %v2384, 64
      %v2388 = vpop.permute.xlu0 %2387
      %v2390 = vmul.f32 %v2383, %v2388
      %2392 = vrot.lane.b32.xlu0 %v2390, 32
      %v2393 = vpop.permute.xlu0 %2392
      %v2395 = vadd.f32 %v2385, %v2393
      %v2396 = vtanh.pop %v2395
      %2398 = vrot.lane.b32.xlu0 %v2396, 64
      %v2399 = vpop.permute.xlu0 %2398
      %v2401 = vmul.f32 %v2383, %v2399
      %2403 = vrot.lane.b32.xlu0 %v2401, 64
      %v2404 = vpop.permute.xlu0 %2403
      %v2406 = vsel %vm1789, %v1883, %v2404
      %v2408 = vsel %vm1896, %v2406, 0
      %2410 = vmatprep.subr.mxu0 0.0
      %2411 = vmatpush1.msra.mxu0 %v1886
      %2412 = vmatprep.subr.mxu0 0.0
      %2413 = vmatpush1.msra.mxu0 %v1887
      %2414 = vmatprep.subr.mxu0 0.0
      %2415 = vmatpush1.msra.mxu0 %v1888
      %2416 = vmatprep.subr.mxu0 0.0
      %2417 = vmatpush1.msra.mxu0 %v1889
      %2418 = vmatprep.subr.mxu0 0.0
      %2419 = vmatpush1.msra.mxu0 %v1890
      %2420 = vmatprep.subr.mxu0 0.0
      %2421 = vmatpush1.msra.mxu0 %v1891
      %2422 = vmatprep.subr.mxu0 0.0
      %2423 = vmatpush1.msra.mxu0 %v1892
      %2424 = vmatprep.subr.mxu0 0.0
      %2425 = vmatpush1.msra.mxu0 %v1893
      %2426 = vmatprep.subr.mxu0 0.0
      %2427 = vmatpush1.msra.mxu0 0.0
      %2428 = vmatprep.subr.mxu0 0.0
      %2429 = vmatpush1.msra.mxu0 0.0
      %2430 = vmatprep.subr.mxu0 0.0
      %2431 = vmatpush1.msra.mxu0 0.0
      %2432 = vmatprep.subr.mxu0 0.0
      %2433 = vmatpush1.msra.mxu0 0.0
      %2434 = vmatprep.subr.mxu0 0.0
      %2435 = vmatpush1.msra.mxu0 0.0
      %2436 = vmatprep.subr.mxu0 0.0
      %2437 = vmatpush1.msra.mxu0 0.0
      %2438 = vmatprep.subr.mxu0 0.0
      %2439 = vmatpush1.msra.mxu0 0.0
      %2440 = vmatprep.subr.mxu0 0.0
      %2441 = vmatpush1.msra.mxu0 0.0
      %2442 = vmatprep.subr.mxu0 0.0
      %2443 = vmatpush1.msra.mxu0 0.0
      %2444 = vmatprep.subr.mxu0 0.0
      %2445 = vmatpush1.msra.mxu0 0.0
      %2446 = vmatprep.subr.mxu0 0.0
      %2447 = vmatpush1.msra.mxu0 0.0
      %2448 = vmatprep.subr.mxu0 0.0
      %2449 = vmatpush1.msra.mxu0 0.0
      %2450 = vmatprep.subr.mxu0 0.0
      %2451 = vmatpush1.msra.mxu0 0.0
      %2452 = vmatprep.subr.mxu0 0.0
      %2453 = vmatpush1.msra.mxu0 0.0
      %2454 = vmatprep.subr.mxu0 0.0
      %2455 = vmatpush1.msra.mxu0 0.0
      %2456 = vmatprep.subr.mxu0 0.0
      %2457 = vmatpush1.msra.mxu0 0.0
      %2458 = vmatprep.subr.mxu0 0.0
      %2459 = vmatpush1.msra.mxu0 0.0
      %2460 = vmatprep.subr.mxu0 0.0
      %2461 = vmatpush1.msra.mxu0 0.0
      %2462 = vmatprep.subr.mxu0 0.0
      %2463 = vmatpush1.msra.mxu0 0.0
      %2464 = vmatprep.subr.mxu0 0.0
      %2465 = vmatpush1.msra.mxu0 0.0
      %2466 = vmatprep.subr.mxu0 0.0
      %2467 = vmatpush1.msra.mxu0 0.0
      %2468 = vmatprep.subr.mxu0 0.0
      %2469 = vmatpush1.msra.mxu0 0.0
      %2470 = vmatprep.subr.mxu0 0.0
      %2471 = vmatpush1.msra.mxu0 0.0
      %2472 = vmatprep.subr.mxu0 0.0
      %2473 = vmatpush1.msra.mxu0 0.0
      %2474 = vmatprep.mubr.f32.mxu0 0.0
      %2475 = vmatmul.mubr.f32.gmra.mrb[0].mxu0 %v2408
      %v2476 = vpop.f32.mrb[0].mxu0
      %v2477 = vadd.f32 %v1894, %v2476
      %v2478 = vpop.f32.mrb[0].mxu0
      %2479 = vdwg.mxu0
      %v2480 = vxor.u32 %v2477, 2147483648
      %v2481 = vmul.f32 %v2480, 1.442695
      %v2482 = vpow.pop %v2481
      %v2483 = vadd.f32 %v2482, 1.0
      %v2484 = vrcp.pop %v2483
      %v2485 = vmul.f32 1.0, %v2484
      %v2486 = vtanh.pop %v2477
      %v2487 = vmul.f32 %v2485, %v2395
      %2489 = vrot.lane.b32.xlu0 %v2486, 64
      %v2490 = vpop.permute.xlu0 %2489
      %v2492 = vmul.f32 %v2485, %v2490
      %2494 = vrot.lane.b32.xlu0 %v2492, 32
      %v2495 = vpop.permute.xlu0 %2494
      %v2497 = vadd.f32 %v2487, %v2495
      %v2498 = vtanh.pop %v2497
      %2500 = vrot.lane.b32.xlu0 %v2498, 64
      %v2501 = vpop.permute.xlu0 %2500
      %v2503 = vmul.f32 %v2485, %v2501
      %2505 = vrot.lane.b32.xlu0 %v2503, 64
      %v2506 = vpop.permute.xlu0 %2505
      %v2508 = vsel %vm1789, %v1884, %v2506
      %v2510 = vsel %vm1896, %v2508, 0
      %2512 = vmatprep.subr.mxu0 0.0
      %2513 = vmatpush1.msra.mxu0 %v1886
      %2514 = vmatprep.subr.mxu0 0.0
      %2515 = vmatpush1.msra.mxu0 %v1887
      %2516 = vmatprep.subr.mxu0 0.0
      %2517 = vmatpush1.msra.mxu0 %v1888
      %2518 = vmatprep.subr.mxu0 0.0
      %2519 = vmatpush1.msra.mxu0 %v1889
      %2520 = vmatprep.subr.mxu0 0.0
      %2521 = vmatpush1.msra.mxu0 %v1890
      %2522 = vmatprep.subr.mxu0 0.0
      %2523 = vmatpush1.msra.mxu0 %v1891
      %2524 = vmatprep.subr.mxu0 0.0
      %2525 = vmatpush1.msra.mxu0 %v1892
      %2526 = vmatprep.subr.mxu0 0.0
      %2527 = vmatpush1.msra.mxu0 %v1893
      %2528 = vmatprep.subr.mxu0 0.0
      %2529 = vmatpush1.msra.mxu0 0.0
      %2530 = vmatprep.subr.mxu0 0.0
      %2531 = vmatpush1.msra.mxu0 0.0
      %2532 = vmatprep.subr.mxu0 0.0
      %2533 = vmatpush1.msra.mxu0 0.0
      %2534 = vmatprep.subr.mxu0 0.0
      %2535 = vmatpush1.msra.mxu0 0.0
      %2536 = vmatprep.subr.mxu0 0.0
      %2537 = vmatpush1.msra.mxu0 0.0
      %2538 = vmatprep.subr.mxu0 0.0
      %2539 = vmatpush1.msra.mxu0 0.0
      %2540 = vmatprep.subr.mxu0 0.0
      %2541 = vmatpush1.msra.mxu0 0.0
      %2542 = vmatprep.subr.mxu0 0.0
      %2543 = vmatpush1.msra.mxu0 0.0
      %2544 = vmatprep.subr.mxu0 0.0
      %2545 = vmatpush1.msra.mxu0 0.0
      %2546 = vmatprep.subr.mxu0 0.0
      %2547 = vmatpush1.msra.mxu0 0.0
      %2548 = vmatprep.subr.mxu0 0.0
      %2549 = vmatpush1.msra.mxu0 0.0
      %2550 = vmatprep.subr.mxu0 0.0
      %2551 = vmatpush1.msra.mxu0 0.0
      %2552 = vmatprep.subr.mxu0 0.0
      %2553 = vmatpush1.msra.mxu0 0.0
      %2554 = vmatprep.subr.mxu0 0.0
      %2555 = vmatpush1.msra.mxu0 0.0
      %2556 = vmatprep.subr.mxu0 0.0
      %2557 = vmatpush1.msra.mxu0 0.0
      %2558 = vmatprep.subr.mxu0 0.0
      %2559 = vmatpush1.msra.mxu0 0.0
      %2560 = vmatprep.subr.mxu0 0.0
      %2561 = vmatpush1.msra.mxu0 0.0
      %2562 = vmatprep.subr.mxu0 0.0
      %2563 = vmatpush1.msra.mxu0 0.0
      %2564 = vmatprep.subr.mxu0 0.0
      %2565 = vmatpush1.msra.mxu0 0.0
      %2566 = vmatprep.subr.mxu0 0.0
      %2567 = vmatpush1.msra.mxu0 0.0
      %2568 = vmatprep.subr.mxu0 0.0
      %2569 = vmatpush1.msra.mxu0 0.0
      %2570 = vmatprep.subr.mxu0 0.0
      %2571 = vmatpush1.msra.mxu0 0.0
      %2572 = vmatprep.subr.mxu0 0.0
      %2573 = vmatpush1.msra.mxu0 0.0
      %2574 = vmatprep.subr.mxu0 0.0
      %2575 = vmatpush1.msra.mxu0 0.0
      %2576 = vmatprep.mubr.f32.mxu0 0.0
      %2577 = vmatmul.mubr.f32.gmra.mrb[0].mxu0 %v2510
      %v2578 = vpop.f32.mrb[0].mxu0
      %v2579 = vadd.f32 %v1894, %v2578
      %v2580 = vpop.f32.mrb[0].mxu0
      %2581 = vdwg.mxu0
      %v2582 = vxor.u32 %v2579, 2147483648
      %v2583 = vmul.f32 %v2582, 1.442695
      %v2584 = vpow.pop %v2583
      %v2585 = vadd.f32 %v2584, 1.0
      %v2586 = vrcp.pop %v2585
      %v2587 = vmul.f32 1.0, %v2586
      %v2588 = vtanh.pop %v2579
      %v2589 = vmul.f32 %v2587, %v2497
      %2591 = vrot.lane.b32.xlu0 %v2588, 64
      %v2592 = vpop.permute.xlu0 %2591
      %v2594 = vmul.f32 %v2587, %v2592
      %2596 = vrot.lane.b32.xlu0 %v2594, 32
      %v2597 = vpop.permute.xlu0 %2596
      %v2599 = vadd.f32 %v2589, %v2597
      %v2600 = vtanh.pop %v2599
      %2602 = vrot.lane.b32.xlu0 %v2600, 64
      %v2603 = vpop.permute.xlu0 %2602
      %v2605 = vmul.f32 %v2587, %v2603
      %2607 = vrot.lane.b32.xlu0 %v2605, 64
      %v2608 = vpop.permute.xlu0 %2607
      %v2610 = vsel %vm1789, %v1885, %v2608
      %v2612 = vsel %vm1896, %v2610, 0
      %2614 = vmatprep.subr.mxu0 0.0
      %2615 = vmatpush1.msra.mxu0 %v1886
      %2616 = vmatprep.subr.mxu0 0.0
      %2617 = vmatpush1.msra.mxu0 %v1887
      %2618 = vmatprep.subr.mxu0 0.0
      %2619 = vmatpush1.msra.mxu0 %v1888
      %2620 = vmatprep.subr.mxu0 0.0
      %2621 = vmatpush1.msra.mxu0 %v1889
      %2622 = vmatprep.subr.mxu0 0.0
      %2623 = vmatpush1.msra.mxu0 %v1890
      %2624 = vmatprep.subr.mxu0 0.0
      %2625 = vmatpush1.msra.mxu0 %v1891
      %2626 = vmatprep.subr.mxu0 0.0
      %2627 = vmatpush1.msra.mxu0 %v1892
      %2628 = vmatprep.subr.mxu0 0.0
      %2629 = vmatpush1.msra.mxu0 %v1893
      %2630 = vmatprep.subr.mxu0 0.0
      %2631 = vmatpush1.msra.mxu0 0.0
      %2632 = vmatprep.subr.mxu0 0.0
      %2633 = vmatpush1.msra.mxu0 0.0
      %2634 = vmatprep.subr.mxu0 0.0
      %2635 = vmatpush1.msra.mxu0 0.0
      %2636 = vmatprep.subr.mxu0 0.0
      %2637 = vmatpush1.msra.mxu0 0.0
      %2638 = vmatprep.subr.mxu0 0.0
      %2639 = vmatpush1.msra.mxu0 0.0
      %2640 = vmatprep.subr.mxu0 0.0
      %2641 = vmatpush1.msra.mxu0 0.0
      %2642 = vmatprep.subr.mxu0 0.0
      %2643 = vmatpush1.msra.mxu0 0.0
      %2644 = vmatprep.subr.mxu0 0.0
      %2645 = vmatpush1.msra.mxu0 0.0
      %2646 = vmatprep.subr.mxu0 0.0
      %2647 = vmatpush1.msra.mxu0 0.0
      %2648 = vmatprep.subr.mxu0 0.0
      %2649 = vmatpush1.msra.mxu0 0.0
      %2650 = vmatprep.subr.mxu0 0.0
      %2651 = vmatpush1.msra.mxu0 0.0
      %2652 = vmatprep.subr.mxu0 0.0
      %2653 = vmatpush1.msra.mxu0 0.0
      %2654 = vmatprep.subr.mxu0 0.0
      %2655 = vmatpush1.msra.mxu0 0.0
      %2656 = vmatprep.subr.mxu0 0.0
      %2657 = vmatpush1.msra.mxu0 0.0
      %2658 = vmatprep.subr.mxu0 0.0
      %2659 = vmatpush1.msra.mxu0 0.0
      %2660 = vmatprep.subr.mxu0 0.0
      %2661 = vmatpush1.msra.mxu0 0.0
      %2662 = vmatprep.subr.mxu0 0.0
      %2663 = vmatpush1.msra.mxu0 0.0
      %2664 = vmatprep.subr.mxu0 0.0
      %2665 = vmatpush1.msra.mxu0 0.0
      %2666 = vmatprep.subr.mxu0 0.0
      %2667 = vmatpush1.msra.mxu0 0.0
      %2668 = vmatprep.subr.mxu0 0.0
      %2669 = vmatpush1.msra.mxu0 0.0
      %2670 = vmatprep.subr.mxu0 0.0
      %2671 = vmatpush1.msra.mxu0 0.0
      %2672 = vmatprep.subr.mxu0 0.0
      %2673 = vmatpush1.msra.mxu0 0.0
      %2674 = vmatprep.subr.mxu0 0.0
      %2675 = vmatpush1.msra.mxu0 0.0
      %2676 = vmatprep.subr.mxu0 0.0
      %2677 = vmatpush1.msra.mxu0 0.0
      %2678 = vmatprep.mubr.f32.mxu0 0.0
      %2679 = vmatmul.mubr.f32.gmra.mrb[0].mxu0 %v2612
      %v2680 = vpop.f32.mrb[0].mxu0
      %v2681 = vadd.f32 %v1894, %v2680
      %v2682 = vpop.f32.mrb[0].mxu0
      %2683 = vdwg.mxu0
      %v2684 = vxor.u32 %v2681, 2147483648
      %v2685 = vmul.f32 %v2684, 1.442695
      %v2686 = vpow.pop %v2685
      %v2687 = vadd.f32 %v2686, 1.0
      %v2688 = vrcp.pop %v2687
      %v2689 = vmul.f32 1.0, %v2688
      %v2690 = vtanh.pop %v2681
      %v2691 = vmul.f32 %v2689, %v2599
      %2693 = vrot.lane.b32.xlu0 %v2690, 64
      %v2694 = vpop.permute.xlu0 %2693
      %v2696 = vmul.f32 %v2689, %v2694
      %2698 = vrot.lane.b32.xlu0 %v2696, 32
      %v2699 = vpop.permute.xlu0 %2698
      %v2701 = vadd.f32 %v2691, %v2699
      %v2702 = vtanh.pop %v2701
      %2704 = vrot.lane.b32.xlu0 %v2702, 64
      %v2705 = vpop.permute.xlu0 %2704
      %v2707 = vmul.f32 %v2689, %v2705
      %v2708 = vld [vmem:[%s6] sm:$0xff]
      %v2709 = vld [vmem:[%s6 + $0x8] sm:$0xff]
      %v2710 = vld [vmem:[%s6 + $0x10] sm:$0xff]
      %v2711 = vld [vmem:[%s6 + $0x18] sm:$0xff]
      %v2712 = vld [vmem:[#allocation2] sm:$0x1]
      %2714 = vrot.lane.b32.xlu0 %v2707, 32
      %v2715 = vpop.permute.xlu0 %2714
      %v2716 = vsel %vm1789, %v2715, 0
      %2718 = vmatprep.subr.mxu0 0.0
      %2719 = vmatpush1.msra.mxu0 %v2708
      %2720 = vmatprep.subr.mxu0 0.0
      %2721 = vmatpush1.msra.mxu0 %v2709
      %2722 = vmatprep.subr.mxu0 0.0
      %2723 = vmatpush1.msra.mxu0 %v2710
      %2724 = vmatprep.subr.mxu0 0.0
      %2725 = vmatpush1.msra.mxu0 %v2711
      %2726 = vmatprep.subr.mxu0 0.0
      %2727 = vmatpush1.msra.mxu0 0.0
      %2728 = vmatprep.subr.mxu0 0.0
      %2729 = vmatpush1.msra.mxu0 0.0
      %2730 = vmatprep.subr.mxu0 0.0
      %2731 = vmatpush1.msra.mxu0 0.0
      %2732 = vmatprep.subr.mxu0 0.0
      %2733 = vmatpush1.msra.mxu0 0.0
      %2734 = vmatprep.subr.mxu0 0.0
      %2735 = vmatpush1.msra.mxu0 0.0
      %2736 = vmatprep.subr.mxu0 0.0
      %2737 = vmatpush1.msra.mxu0 0.0
      %2738 = vmatprep.subr.mxu0 0.0
      %2739 = vmatpush1.msra.mxu0 0.0
      %2740 = vmatprep.subr.mxu0 0.0
      %2741 = vmatpush1.msra.mxu0 0.0
      %2742 = vmatprep.subr.mxu0 0.0
      %2743 = vmatpush1.msra.mxu0 0.0
      %2744 = vmatprep.subr.mxu0 0.0
      %2745 = vmatpush1.msra.mxu0 0.0
      %2746 = vmatprep.subr.mxu0 0.0
      %2747 = vmatpush1.msra.mxu0 0.0
      %2748 = vmatprep.subr.mxu0 0.0
      %2749 = vmatpush1.msra.mxu0 0.0
      %2750 = vmatprep.subr.mxu0 0.0
      %2751 = vmatpush1.msra.mxu0 0.0
      %2752 = vmatprep.subr.mxu0 0.0
      %2753 = vmatpush1.msra.mxu0 0.0
      %2754 = vmatprep.subr.mxu0 0.0
      %2755 = vmatpush1.msra.mxu0 0.0
      %2756 = vmatprep.subr.mxu0 0.0
      %2757 = vmatpush1.msra.mxu0 0.0
      %2758 = vmatprep.subr.mxu0 0.0
      %2759 = vmatpush1.msra.mxu0 0.0
      %2760 = vmatprep.subr.mxu0 0.0
      %2761 = vmatpush1.msra.mxu0 0.0
      %2762 = vmatprep.subr.mxu0 0.0
      %2763 = vmatpush1.msra.mxu0 0.0
      %2764 = vmatprep.subr.mxu0 0.0
      %2765 = vmatpush1.msra.mxu0 0.0
      %2766 = vmatprep.subr.mxu0 0.0
      %2767 = vmatpush1.msra.mxu0 0.0
      %2768 = vmatprep.subr.mxu0 0.0
      %2769 = vmatpush1.msra.mxu0 0.0
      %2770 = vmatprep.subr.mxu0 0.0
      %2771 = vmatpush1.msra.mxu0 0.0
      %2772 = vmatprep.subr.mxu0 0.0
      %2773 = vmatpush1.msra.mxu0 0.0
      %2774 = vmatprep.subr.mxu0 0.0
      %2775 = vmatpush1.msra.mxu0 0.0
      %2776 = vmatprep.subr.mxu0 0.0
      %2777 = vmatpush1.msra.mxu0 0.0
      %2778 = vmatprep.subr.mxu0 0.0
      %2779 = vmatpush1.msra.mxu0 0.0
      %2780 = vmatprep.subr.mxu0 0.0
      %2781 = vmatpush1.msra.mxu0 0.0
      %2782 = vmatprep.mubr.f32.mxu0 0.0
      %2783 = vmatmul.mubr.f32.gmra.mrb[0].mxu0 %v2716
      %v2784 = vpop.f32.mrb[0].mxu0
      %v2785 = vadd.f32 %v2712, %v2784
      %v2786 = vpop.f32.mrb[0].mxu0
      %2787 = vdwg.mxu0
      %v2788 = vxor.u32 %v2785, 2147483648
      %v2789 = vmul.f32 %v2788, 1.442695
      %v2790 = vpow.pop %v2789
      %v2791 = vadd.f32 %v2790, 1.0
      %v2792 = vrcp.pop %v2791
      %v2793 = vmul.f32 1.0, %v2792
      %vm2794 = vcmask 0
      %2795 = vst.msk [vmem:[%s323] sm:$0x1] %vm2794, %v2793
      %p2796 = scmp.lt.s32.totalorder %s21, 1
      %s2797 = scalar_select %p2796, %s21, 1
      %s2798 = scalar_lea.vmem %s8, %s2797
      // Predicated region
      $region53: #{tpu_custom_call.1} parent=51 // pred_check
        %p2799 = pneg %p217
      $region54: #{tpu_custom_call.1} parent=51 // pred_check_branch
        %2801 = sbr.rel (%p2799) target = $region56
      $region55: #{tpu_custom_call.1} parent=51 // pred_region
        _
      $region56: #{tpu_custom_call.1} parent=51 // pred_fallthru
        _
    $region52: #{tpu_custom_call.1} parent=5 // pred_fallthru
      _
    %p2802 = scmp.le.s32.totalorder 2, %s16
    // Predicated region
    $region57: #{tpu_custom_call.1} parent=5 // pred_check
      %p2803 = pneg %p2802
    $region58: #{tpu_custom_call.1} parent=5 // pred_check_branch
      %2805 = sbr.rel (%p2803) target = $region60
    $region59: #{tpu_custom_call.1} parent=5 // pred_region
      %s2806 = ssub.s32 %s16, 2
      // Predicated region
      $region61: #{tpu_custom_call.1} parent=59 // pred_check
        %p2807 = pneg %p223
      $region62: #{tpu_custom_call.1} parent=59 // pred_check_branch
        %2809 = sbr.rel (%p2807) target = $region64
      $region63: #{tpu_custom_call.1} parent=59 // pred_region
        %p2810 = scmp.lt.s32.totalorder %s22, 1
        %s2811 = scalar_select %p2810, %s22, 1
        %s2812 = scalar_lea.vmem %s8, %s2811
      $region64: #{tpu_custom_call.1} parent=59 // pred_fallthru
        _
    $region60: #{tpu_custom_call.1} parent=5 // pred_fallthru
      _
  $region6: #{tpu_custom_call.1} parent=0 // loop_footer
    %s20 = sadd.s32 1, %s16
  $region7: #{tpu_custom_call.1} parent=0 // loop_footer_branch
    %15 = sbr.rel target = $region3
  $region8: #{tpu_custom_call.1} parent=0 // loop_exit
    _

</llo_original>
